<compile_context>
chip_gen: v7x
topology: tpu7x:2x2x1
jax: 0.10.0
libtpu: 0.0.40
codegen_flags: <defaults>
</compile_context>

<pallas_src>
import functools

import jax
import jax.numpy as jnp
from jax import lax
from jax.experimental import pallas as pl
from jax.experimental.pallas import tpu as pltpu


# --------------------------------------------------------------------------- #
# Shared LSTM cell math (PyTorch gate order: i, f, g, o)
# --------------------------------------------------------------------------- #
def _gate_math(gates, c, H):
    sig = jax.nn.sigmoid(gates)               # one full-width EUP pass (i, f, o)
    i = sig[:, 0 * H:1 * H]
    f = sig[:, 1 * H:2 * H]
    o = sig[:, 3 * H:4 * H]
    g = jnp.tanh(gates[:, 2 * H:3 * H])
    c_new = f * c + i * g
    h_new = o * jnp.tanh(c_new)
    return h_new, c_new


# --------------------------------------------------------------------------- #
# Kernel: fully unrolled (small T).  No scratch; everything register-resident.
# --------------------------------------------------------------------------- #
def dtln_p1_kernel_unrolled(mag_ref, states_ref,
                            wih1_ref, whh1_ref, b1_ref,
                            wih2_ref, whh2_ref, b2_ref,
                            wd_ref, bd_ref,
                            out_ref, ost_ref):
    H = whh1_ref.shape[0]
    T = mag_ref.shape[0]

    mag = mag_ref[...]
    # Batched layer-1 input projection for all T timesteps (bias folded in).
    xp = (jnp.dot(mag, wih1_ref[...], preferred_element_type=jnp.float32)
          + b1_ref[...])                                            # (T, 4H)

    h1, c1 = states_ref[0:1, :], states_ref[1:2, :]
    h2, c2 = states_ref[2:3, :], states_ref[3:4, :]

    h2_rows = []
    for t in range(T):   # static unroll: static slices, no per-step VMEM traffic
        # Depends only on previous-step h2 -> off the critical dependence chain.
        r2 = (jnp.dot(h2, whh2_ref[...], preferred_element_type=jnp.float32)
              + b2_ref[...])
        # LSTM layer 1 (input projection precomputed above).
        gates1 = (xp[t:t + 1, :]
                  + jnp.dot(h1, whh1_ref[...], preferred_element_type=jnp.float32))
        h1, c1 = _gate_math(gates1, c1, H)
        # dropout(p=0.25) is identity at inference time.
        # LSTM layer 2.
        gates2 = (jnp.dot(h1, wih2_ref[...], preferred_element_type=jnp.float32)
                  + r2)
        h2, c2 = _gate_math(gates2, c2, H)
        h2_rows.append(h2)

    # Batched dense + sigmoid mask over all timesteps; estimated_mag = mask*mag.
    h2_all = jnp.concatenate(h2_rows, axis=0)                        # (T, H)
    mask = jax.nn.sigmoid(jnp.dot(h2_all, wd_ref[...],
                                  preferred_element_type=jnp.float32)
                          + bd_ref[...])
    out_ref[...] = (mask * mag).astype(out_ref.dtype)

    # out_states = cat(h1, c1, h2, c2) -> [4, H], written with a single store.
    ost_ref[...] = jnp.concatenate([h1, c1, h2, c2], axis=0).astype(ost_ref.dtype)


# --------------------------------------------------------------------------- #
# Kernel: rolled loop (longer T).  VMEM scratch for xp / h2 history, unroll=4.
# --------------------------------------------------------------------------- #
def dtln_p1_kernel_rolled(mag_ref, states_ref,
                          wih1_ref, whh1_ref, b1_ref,
                          wih2_ref, whh2_ref, b2_ref,
                          wd_ref, bd_ref,
                          out_ref, ost_ref,
                          xp_ref, h2all_ref,
                          *, unroll):
    H = whh1_ref.shape[0]
    T = mag_ref.shape[0]

    # Batched layer-1 input projection for all T timesteps (bias folded in).
    xp_ref[...] = (jnp.dot(mag_ref[...], wih1_ref[...],
                           preferred_element_type=jnp.float32)
                   + b1_ref[...])

    def step(t, carry):
        h1, c1, h2, c2 = carry
        # Off-chain: depends only on previous-step h2.
        r2 = (jnp.dot(h2, whh2_ref[...], preferred_element_type=jnp.float32)
              + b2_ref[...])
        gates1 = (xp_ref[pl.ds(t, 1), :]
                  + jnp.dot(h1, whh1_ref[...], preferred_element_type=jnp.float32))
        h1, c1 = _gate_math(gates1, c1, H)
        # dropout(p=0.25) is identity at inference time.
        gates2 = (jnp.dot(h1, wih2_ref[...], preferred_element_type=jnp.float32)
                  + r2)
        h2, c2 = _gate_math(gates2, c2, H)
        h2all_ref[pl.ds(t, 1), :] = h2
        return (h1, c1, h2, c2)

    init = (states_ref[0:1, :], states_ref[1:2, :],
            states_ref[2:3, :], states_ref[3:4, :])
    h1, c1, h2, c2 = lax.fori_loop(0, T, step, init, unroll=unroll)

    mask = jax.nn.sigmoid(jnp.dot(h2all_ref[...], wd_ref[...],
                                  preferred_element_type=jnp.float32)
                          + bd_ref[...])
    out_ref[...] = (mask * mag_ref[...]).astype(out_ref.dtype)
    ost_ref[...] = jnp.concatenate([h1, c1, h2, c2], axis=0).astype(ost_ref.dtype)


# --------------------------------------------------------------------------- #
# Wrapper
# --------------------------------------------------------------------------- #
def dtln_p1_forward(mag, in_states, params, *, unroll_threshold=16):
    """mag: [N, T, F]; in_states: [1, 4, H].  Returns (estimated_mag, out_states)."""
    N, T, F = mag.shape
    H = in_states.shape[-1]
    assert N == 1, "state tensor [1, 4, H] implies batch=1"

    mag2d = mag.reshape(T, F)            # N == 1: pure reshape, no transpose copy
    states2d = in_states.reshape(4, H)

    wih1_t = params["w_ih1"].T                                   # (F, 4H)
    whh1_t = params["w_hh1"].T                                   # (H, 4H)
    b1 = (params["b_ih1"] + params["b_hh1"])[None, :]            # (1, 4H)
    wih2_t = params["w_ih2"].T                                   # (H, 4H)
    whh2_t = params["w_hh2"].T                                   # (H, 4H)
    b2 = (params["b_ih2"] + params["b_hh2"])[None, :]            # (1, 4H)
    wd_t = params["w_dense"].T                                   # (H, F)
    bd = params["b_dense"][None, :]                              # (1, F)

    if T <= unroll_threshold:
        kernel = dtln_p1_kernel_unrolled
        scratch = []                                  # fully register-resident
    else:
        kernel = functools.partial(dtln_p1_kernel_rolled, unroll=4)
        scratch = [pltpu.VMEM((T, 4 * H), jnp.float32),   # layer-1 input proj
                   pltpu.VMEM((T, H), jnp.float32)]       # h2 per timestep

    est2d, ost2d = pl.pallas_call(
        kernel,
        out_shape=(jax.ShapeDtypeStruct((T, F), mag.dtype),
                   jax.ShapeDtypeStruct((4, H), mag.dtype)),
        scratch_shapes=scratch,
    )(mag2d, states2d, wih1_t, whh1_t, b1, wih2_t, whh2_t, b2, wd_t, bd)

    return est2d.reshape(N, T, F), ost2d.reshape(1, 4, H)


# --------------------------------------------------------------------------- #
# Pure-JAX reference (mirrors the PyTorch forward at eval time)
# --------------------------------------------------------------------------- #
def dtln_p1_reference(mag, in_states, p):
    def cell(x, h, c, w_ih, w_hh, b_ih, b_hh):
        gates = x @ w_ih.T + h @ w_hh.T + b_ih + b_hh
        i, f, g, o = jnp.split(gates, 4, axis=-1)
        i, f, o = jax.nn.sigmoid(i), jax.nn.sigmoid(f), jax.nn.sigmoid(o)
        g = jnp.tanh(g)
        c = f * c + i * g
        h = o * jnp.tanh(c)
        return h, c

    h1, c1 = in_states[0, 0:1], in_states[0, 1:2]
    h2, c2 = in_states[0, 2:3], in_states[0, 3:4]
    N, T, F = mag.shape
    outs = []
    for t in range(T):
        x = mag[:, t, :]
        h1, c1 = cell(x, h1, c1, p["w_ih1"], p["w_hh1"], p["b_ih1"], p["b_hh1"])
        h2, c2 = cell(h1, h2, c2, p["w_ih2"], p["w_hh2"], p["b_ih2"], p["b_hh2"])
        mask = jax.nn.sigmoid(h2 @ p["w_dense"].T + p["b_dense"])
        outs.append(mask * x)
    est = jnp.stack(outs, axis=1)
    ost = jnp.concatenate([h1, c1, h2, c2], axis=0)[None]
    return est, ost


# --------------------------------------------------------------------------- #
# Main
# --------------------------------------------------------------------------- #
if __name__ == "__main__":
    # Small shapes consistent with the module: frame_len=64 -> F = 64//2+1 = 33,
    # hidden_size=128 (module default; gates are lane-aligned at H=128).
    frame_len = 64
    F = frame_len // 2 + 1
    H = 128
    N = 1

    key = jax.random.PRNGKey(0)
    ks = jax.random.split(key, 14)
    scale = 1.0 / float(jnp.sqrt(H))

    def u(k, shape):
        return jax.random.uniform(k, shape, jnp.float32, minval=-scale, maxval=scale)

    params = {
        "w_ih1": u(ks[0], (4 * H, F)),
        "w_hh1": u(ks[1], (4 * H, H)),
        "b_ih1": u(ks[2], (4 * H,)),
        "b_hh1": u(ks[3], (4 * H,)),
        "w_ih2": u(ks[4], (4 * H, H)),
        "w_hh2": u(ks[5], (4 * H, H)),
        "b_ih2": u(ks[6], (4 * H,)),
        "b_hh2": u(ks[7], (4 * H,)),
        "w_dense": u(ks[8], (F, H)),
        "b_dense": u(ks[9], (F,)),
    }

    in_states = jax.random.uniform(ks[10], (1, 4, H), jnp.float32) * 0.1

    ok = True
    # Test 1: short sequence -> fully-unrolled, scratch-free path.
    T1 = 8
    mag1 = jax.random.uniform(ks[11], (N, T1, F), jnp.float32)
    est1, ost1 = dtln_p1_forward(mag1, in_states, params)
    jax.block_until_ready((est1, ost1))
    ref_est1, ref_ost1 = dtln_p1_reference(mag1, in_states, params)
    ok &= est1.shape == (N, T1, F) and ost1.shape == (1, 4, H)
    ok &= bool(jnp.allclose(est1, ref_est1, atol=1e-3, rtol=1e-3))
    ok &= bool(jnp.allclose(ost1, ref_ost1, atol=1e-3, rtol=1e-3))

    # Test 2: longer sequence -> rolled fori_loop (unroll=4) path.
    T2 = 32
    mag2 = jax.random.uniform(ks[12], (N, T2, F), jnp.float32)
    est2, ost2 = dtln_p1_forward(mag2, in_states, params)
    jax.block_until_ready((est2, ost2))
    ref_est2, ref_ost2 = dtln_p1_reference(mag2, in_states, params)
    ok &= est2.shape == (N, T2, F) and ost2.shape == (1, 4, H)
    ok &= bool(jnp.allclose(est2, ref_est2, atol=1e-3, rtol=1e-3))
    ok &= bool(jnp.allclose(ost2, ref_ost2, atol=1e-3, rtol=1e-3))

    assert ok
    print("KERNEL_OK")
</pallas_src>

<mosaic_0001>
module attributes {stable_mosaic.version = 11 : i64} {
  func.func @dtln_p1_kernel_unrolled(%arg0: memref<8x33xf32, #tpu.memory_space<vmem>>, %arg1: memref<4x128xf32, #tpu.memory_space<vmem>>, %arg2: memref<33x512xf32, #tpu.memory_space<vmem>>, %arg3: memref<128x512xf32, #tpu.memory_space<vmem>>, %arg4: memref<1x512xf32, #tpu.memory_space<vmem>>, %arg5: memref<128x512xf32, #tpu.memory_space<vmem>>, %arg6: memref<128x512xf32, #tpu.memory_space<vmem>>, %arg7: memref<1x512xf32, #tpu.memory_space<vmem>>, %arg8: memref<128x33xf32, #tpu.memory_space<vmem>>, %arg9: memref<1x33xf32, #tpu.memory_space<vmem>>, %arg10: memref<8x33xf32, #tpu.memory_space<vmem>>, %arg11: memref<4x128xf32, #tpu.memory_space<vmem>>) attributes {dimension_semantics = [], scalar_prefetch = 0 : i64, scratch_operands = 0 : i64, tpu.core_type = #tpu.core_type<tc>} {
    %c0 = arith.constant 0 : index
    %c0_0 = arith.constant 0 : index
    %0 = vector.load %arg0[%c0, %c0_0] : memref<8x33xf32, #tpu.memory_space<vmem>>, vector<8x33xf32>
    %c0_1 = arith.constant 0 : index
    %c0_2 = arith.constant 0 : index
    %1 = vector.load %arg2[%c0_1, %c0_2] : memref<33x512xf32, #tpu.memory_space<vmem>>, vector<33x512xf32>
    %cst = arith.constant dense<0.000000e+00> : vector<8x512xf32>
    %2 = tpu.matmul %0, %1, %cst {dimension_numbers = #tpu.dot_dimension_numbers<[1], [0], [0], [1], [0, 0, 1, 1], [], []>} : vector<8x33xf32>, vector<33x512xf32>, vector<8x512xf32> -> vector<8x512xf32>
    %c0_3 = arith.constant 0 : index
    %c0_4 = arith.constant 0 : index
    %3 = vector.load %arg4[%c0_3, %c0_4] : memref<1x512xf32, #tpu.memory_space<vmem>>, vector<1x512xf32>
    %4 = vector.broadcast %3 : vector<1x512xf32> to vector<8x512xf32>
    %5 = arith.addf %2, %4 : vector<8x512xf32>
    %c0_5 = arith.constant 0 : index
    %c0_6 = arith.constant 0 : index
    %6 = vector.load %arg1[%c0_5, %c0_6] : memref<4x128xf32, #tpu.memory_space<vmem>>, vector<1x128xf32>
    %c1 = arith.constant 1 : index
    %c0_7 = arith.constant 0 : index
    %7 = vector.load %arg1[%c1, %c0_7] : memref<4x128xf32, #tpu.memory_space<vmem>>, vector<1x128xf32>
    %c2 = arith.constant 2 : index
    %c0_8 = arith.constant 0 : index
    %8 = vector.load %arg1[%c2, %c0_8] : memref<4x128xf32, #tpu.memory_space<vmem>>, vector<1x128xf32>
    %c3 = arith.constant 3 : index
    %c0_9 = arith.constant 0 : index
    %9 = vector.load %arg1[%c3, %c0_9] : memref<4x128xf32, #tpu.memory_space<vmem>>, vector<1x128xf32>
    %c0_10 = arith.constant 0 : index
    %c0_11 = arith.constant 0 : index
    %10 = vector.load %arg6[%c0_10, %c0_11] : memref<128x512xf32, #tpu.memory_space<vmem>>, vector<128x512xf32>
    %cst_12 = arith.constant dense<0.000000e+00> : vector<1x512xf32>
    %11 = tpu.matmul %8, %10, %cst_12 {dimension_numbers = #tpu.dot_dimension_numbers<[1], [0], [0], [1], [0, 0, 1, 1], [], []>} : vector<1x128xf32>, vector<128x512xf32>, vector<1x512xf32> -> vector<1x512xf32>
    %c0_13 = arith.constant 0 : index
    %c0_14 = arith.constant 0 : index
    %12 = vector.load %arg7[%c0_13, %c0_14] : memref<1x512xf32, #tpu.memory_space<vmem>>, vector<1x512xf32>
    %13 = arith.addf %11, %12 : vector<1x512xf32>
    %14 = vector.extract_strided_slice %5 {offsets = [0, 0], sizes = [1, 512], strides = [1, 1]} : vector<8x512xf32> to vector<1x512xf32>
    %c0_15 = arith.constant 0 : index
    %c0_16 = arith.constant 0 : index
    %15 = vector.load %arg3[%c0_15, %c0_16] : memref<128x512xf32, #tpu.memory_space<vmem>>, vector<128x512xf32>
    %cst_17 = arith.constant dense<0.000000e+00> : vector<1x512xf32>
    %16 = tpu.matmul %6, %15, %cst_17 {dimension_numbers = #tpu.dot_dimension_numbers<[1], [0], [0], [1], [0, 0, 1, 1], [], []>} : vector<1x128xf32>, vector<128x512xf32>, vector<1x512xf32> -> vector<1x512xf32>
    %17 = arith.addf %14, %16 : vector<1x512xf32>
    %18 = arith.negf %17 : vector<1x512xf32>
    %19 = math.exp %18 : vector<1x512xf32>
    %cst_18 = arith.constant 1.000000e+00 : f32
    %20 = vector.broadcast %cst_18 : f32 to vector<1x512xf32>
    %21 = arith.addf %20, %19 : vector<1x512xf32>
    %22 = arith.divf %20, %21 : vector<1x512xf32>
    %23 = vector.extract_strided_slice %22 {offsets = [0, 0], sizes = [1, 128], strides = [1, 1]} : vector<1x512xf32> to vector<1x128xf32>
    %24 = vector.extract_strided_slice %22 {offsets = [0, 128], sizes = [1, 128], strides = [1, 1]} : vector<1x512xf32> to vector<1x128xf32>
    %25 = vector.extract_strided_slice %22 {offsets = [0, 384], sizes = [1, 128], strides = [1, 1]} : vector<1x512xf32> to vector<1x128xf32>
    %26 = vector.extract_strided_slice %17 {offsets = [0, 256], sizes = [1, 128], strides = [1, 1]} : vector<1x512xf32> to vector<1x128xf32>
    %27 = math.tanh %26 : vector<1x128xf32>
    %28 = arith.mulf %24, %7 : vector<1x128xf32>
    %29 = arith.mulf %23, %27 : vector<1x128xf32>
    %30 = arith.addf %28, %29 : vector<1x128xf32>
    %31 = math.tanh %30 : vector<1x128xf32>
    %32 = arith.mulf %25, %31 : vector<1x128xf32>
    %c0_19 = arith.constant 0 : index
    %c0_20 = arith.constant 0 : index
    %33 = vector.load %arg5[%c0_19, %c0_20] : memref<128x512xf32, #tpu.memory_space<vmem>>, vector<128x512xf32>
    %cst_21 = arith.constant dense<0.000000e+00> : vector<1x512xf32>
    %34 = tpu.matmul %32, %33, %cst_21 {dimension_numbers = #tpu.dot_dimension_numbers<[1], [0], [0], [1], [0, 0, 1, 1], [], []>} : vector<1x128xf32>, vector<128x512xf32>, vector<1x512xf32> -> vector<1x512xf32>
    %35 = arith.addf %34, %13 : vector<1x512xf32>
    %36 = arith.negf %35 : vector<1x512xf32>
    %37 = math.exp %36 : vector<1x512xf32>
    %cst_22 = arith.constant 1.000000e+00 : f32
    %38 = vector.broadcast %cst_22 : f32 to vector<1x512xf32>
    %39 = arith.addf %38, %37 : vector<1x512xf32>
    %40 = arith.divf %38, %39 : vector<1x512xf32>
    %41 = vector.extract_strided_slice %40 {offsets = [0, 0], sizes = [1, 128], strides = [1, 1]} : vector<1x512xf32> to vector<1x128xf32>
    %42 = vector.extract_strided_slice %40 {offsets = [0, 128], sizes = [1, 128], strides = [1, 1]} : vector<1x512xf32> to vector<1x128xf32>
    %43 = vector.extract_strided_slice %40 {offsets = [0, 384], sizes = [1, 128], strides = [1, 1]} : vector<1x512xf32> to vector<1x128xf32>
    %44 = vector.extract_strided_slice %35 {offsets = [0, 256], sizes = [1, 128], strides = [1, 1]} : vector<1x512xf32> to vector<1x128xf32>
    %45 = math.tanh %44 : vector<1x128xf32>
    %46 = arith.mulf %42, %9 : vector<1x128xf32>
    %47 = arith.mulf %41, %45 : vector<1x128xf32>
    %48 = arith.addf %46, %47 : vector<1x128xf32>
    %49 = math.tanh %48 : vector<1x128xf32>
    %50 = arith.mulf %43, %49 : vector<1x128xf32>
    %c0_23 = arith.constant 0 : index
    %c0_24 = arith.constant 0 : index
    %51 = vector.load %arg6[%c0_23, %c0_24] : memref<128x512xf32, #tpu.memory_space<vmem>>, vector<128x512xf32>
    %cst_25 = arith.constant dense<0.000000e+00> : vector<1x512xf32>
    %52 = tpu.matmul %50, %51, %cst_25 {dimension_numbers = #tpu.dot_dimension_numbers<[1], [0], [0], [1], [0, 0, 1, 1], [], []>} : vector<1x128xf32>, vector<128x512xf32>, vector<1x512xf32> -> vector<1x512xf32>
    %c0_26 = arith.constant 0 : index
    %c0_27 = arith.constant 0 : index
    %53 = vector.load %arg7[%c0_26, %c0_27] : memref<1x512xf32, #tpu.memory_space<vmem>>, vector<1x512xf32>
    %54 = arith.addf %52, %53 : vector<1x512xf32>
    %55 = vector.extract_strided_slice %5 {offsets = [1, 0], sizes = [1, 512], strides = [1, 1]} : vector<8x512xf32> to vector<1x512xf32>
    %c0_28 = arith.constant 0 : index
    %c0_29 = arith.constant 0 : index
    %56 = vector.load %arg3[%c0_28, %c0_29] : memref<128x512xf32, #tpu.memory_space<vmem>>, vector<128x512xf32>
    %cst_30 = arith.constant dense<0.000000e+00> : vector<1x512xf32>
    %57 = tpu.matmul %32, %56, %cst_30 {dimension_numbers = #tpu.dot_dimension_numbers<[1], [0], [0], [1], [0, 0, 1, 1], [], []>} : vector<1x128xf32>, vector<128x512xf32>, vector<1x512xf32> -> vector<1x512xf32>
    %58 = arith.addf %55, %57 : vector<1x512xf32>
    %59 = arith.negf %58 : vector<1x512xf32>
    %60 = math.exp %59 : vector<1x512xf32>
    %cst_31 = arith.constant 1.000000e+00 : f32
    %61 = vector.broadcast %cst_31 : f32 to vector<1x512xf32>
    %62 = arith.addf %61, %60 : vector<1x512xf32>
    %63 = arith.divf %61, %62 : vector<1x512xf32>
    %64 = vector.extract_strided_slice %63 {offsets = [0, 0], sizes = [1, 128], strides = [1, 1]} : vector<1x512xf32> to vector<1x128xf32>
    %65 = vector.extract_strided_slice %63 {offsets = [0, 128], sizes = [1, 128], strides = [1, 1]} : vector<1x512xf32> to vector<1x128xf32>
    %66 = vector.extract_strided_slice %63 {offsets = [0, 384], sizes = [1, 128], strides = [1, 1]} : vector<1x512xf32> to vector<1x128xf32>
    %67 = vector.extract_strided_slice %58 {offsets = [0, 256], sizes = [1, 128], strides = [1, 1]} : vector<1x512xf32> to vector<1x128xf32>
    %68 = math.tanh %67 : vector<1x128xf32>
    %69 = arith.mulf %65, %30 : vector<1x128xf32>
    %70 = arith.mulf %64, %68 : vector<1x128xf32>
    %71 = arith.addf %69, %70 : vector<1x128xf32>
    %72 = math.tanh %71 : vector<1x128xf32>
    %73 = arith.mulf %66, %72 : vector<1x128xf32>
    %c0_32 = arith.constant 0 : index
    %c0_33 = arith.constant 0 : index
    %74 = vector.load %arg5[%c0_32, %c0_33] : memref<128x512xf32, #tpu.memory_space<vmem>>, vector<128x512xf32>
    %cst_34 = arith.constant dense<0.000000e+00> : vector<1x512xf32>
    %75 = tpu.matmul %73, %74, %cst_34 {dimension_numbers = #tpu.dot_dimension_numbers<[1], [0], [0], [1], [0, 0, 1, 1], [], []>} : vector<1x128xf32>, vector<128x512xf32>, vector<1x512xf32> -> vector<1x512xf32>
    %76 = arith.addf %75, %54 : vector<1x512xf32>
    %77 = arith.negf %76 : vector<1x512xf32>
    %78 = math.exp %77 : vector<1x512xf32>
    %cst_35 = arith.constant 1.000000e+00 : f32
    %79 = vector.broadcast %cst_35 : f32 to vector<1x512xf32>
    %80 = arith.addf %79, %78 : vector<1x512xf32>
    %81 = arith.divf %79, %80 : vector<1x512xf32>
    %82 = vector.extract_strided_slice %81 {offsets = [0, 0], sizes = [1, 128], strides = [1, 1]} : vector<1x512xf32> to vector<1x128xf32>
    %83 = vector.extract_strided_slice %81 {offsets = [0, 128], sizes = [1, 128], strides = [1, 1]} : vector<1x512xf32> to vector<1x128xf32>
    %84 = vector.extract_strided_slice %81 {offsets = [0, 384], sizes = [1, 128], strides = [1, 1]} : vector<1x512xf32> to vector<1x128xf32>
    %85 = vector.extract_strided_slice %76 {offsets = [0, 256], sizes = [1, 128], strides = [1, 1]} : vector<1x512xf32> to vector<1x128xf32>
    %86 = math.tanh %85 : vector<1x128xf32>
    %87 = arith.mulf %83, %48 : vector<1x128xf32>
    %88 = arith.mulf %82, %86 : vector<1x128xf32>
    %89 = arith.addf %87, %88 : vector<1x128xf32>
    %90 = math.tanh %89 : vector<1x128xf32>
    %91 = arith.mulf %84, %90 : vector<1x128xf32>
    %c0_36 = arith.constant 0 : index
    %c0_37 = arith.constant 0 : index
    %92 = vector.load %arg6[%c0_36, %c0_37] : memref<128x512xf32, #tpu.memory_space<vmem>>, vector<128x512xf32>
    %cst_38 = arith.constant dense<0.000000e+00> : vector<1x512xf32>
    %93 = tpu.matmul %91, %92, %cst_38 {dimension_numbers = #tpu.dot_dimension_numbers<[1], [0], [0], [1], [0, 0, 1, 1], [], []>} : vector<1x128xf32>, vector<128x512xf32>, vector<1x512xf32> -> vector<1x512xf32>
    %c0_39 = arith.constant 0 : index
    %c0_40 = arith.constant 0 : index
    %94 = vector.load %arg7[%c0_39, %c0_40] : memref<1x512xf32, #tpu.memory_space<vmem>>, vector<1x512xf32>
    %95 = arith.addf %93, %94 : vector<1x512xf32>
    %96 = vector.extract_strided_slice %5 {offsets = [2, 0], sizes = [1, 512], strides = [1, 1]} : vector<8x512xf32> to vector<1x512xf32>
    %c0_41 = arith.constant 0 : index
    %c0_42 = arith.constant 0 : index
    %97 = vector.load %arg3[%c0_41, %c0_42] : memref<128x512xf32, #tpu.memory_space<vmem>>, vector<128x512xf32>
    %cst_43 = arith.constant dense<0.000000e+00> : vector<1x512xf32>
    %98 = tpu.matmul %73, %97, %cst_43 {dimension_numbers = #tpu.dot_dimension_numbers<[1], [0], [0], [1], [0, 0, 1, 1], [], []>} : vector<1x128xf32>, vector<128x512xf32>, vector<1x512xf32> -> vector<1x512xf32>
    %99 = arith.addf %96, %98 : vector<1x512xf32>
    %100 = arith.negf %99 : vector<1x512xf32>
    %101 = math.exp %100 : vector<1x512xf32>
    %cst_44 = arith.constant 1.000000e+00 : f32
    %102 = vector.broadcast %cst_44 : f32 to vector<1x512xf32>
    %103 = arith.addf %102, %101 : vector<1x512xf32>
    %104 = arith.divf %102, %103 : vector<1x512xf32>
    %105 = vector.extract_strided_slice %104 {offsets = [0, 0], sizes = [1, 128], strides = [1, 1]} : vector<1x512xf32> to vector<1x128xf32>
    %106 = vector.extract_strided_slice %104 {offsets = [0, 128], sizes = [1, 128], strides = [1, 1]} : vector<1x512xf32> to vector<1x128xf32>
    %107 = vector.extract_strided_slice %104 {offsets = [0, 384], sizes = [1, 128], strides = [1, 1]} : vector<1x512xf32> to vector<1x128xf32>
    %108 = vector.extract_strided_slice %99 {offsets = [0, 256], sizes = [1, 128], strides = [1, 1]} : vector<1x512xf32> to vector<1x128xf32>
    %109 = math.tanh %108 : vector<1x128xf32>
    %110 = arith.mulf %106, %71 : vector<1x128xf32>
    %111 = arith.mulf %105, %109 : vector<1x128xf32>
    %112 = arith.addf %110, %111 : vector<1x128xf32>
    %113 = math.tanh %112 : vector<1x128xf32>
    %114 = arith.mulf %107, %113 : vector<1x128xf32>
    %c0_45 = arith.constant 0 : index
    %c0_46 = arith.constant 0 : index
    %115 = vector.load %arg5[%c0_45, %c0_46] : memref<128x512xf32, #tpu.memory_space<vmem>>, vector<128x512xf32>
    %cst_47 = arith.constant dense<0.000000e+00> : vector<1x512xf32>
    %116 = tpu.matmul %114, %115, %cst_47 {dimension_numbers = #tpu.dot_dimension_numbers<[1], [0], [0], [1], [0, 0, 1, 1], [], []>} : vector<1x128xf32>, vector<128x512xf32>, vector<1x512xf32> -> vector<1x512xf32>
    %117 = arith.addf %116, %95 : vector<1x512xf32>
    %118 = arith.negf %117 : vector<1x512xf32>
    %119 = math.exp %118 : vector<1x512xf32>
    %cst_48 = arith.constant 1.000000e+00 : f32
    %120 = vector.broadcast %cst_48 : f32 to vector<1x512xf32>
    %121 = arith.addf %120, %119 : vector<1x512xf32>
    %122 = arith.divf %120, %121 : vector<1x512xf32>
    %123 = vector.extract_strided_slice %122 {offsets = [0, 0], sizes = [1, 128], strides = [1, 1]} : vector<1x512xf32> to vector<1x128xf32>
    %124 = vector.extract_strided_slice %122 {offsets = [0, 128], sizes = [1, 128], strides = [1, 1]} : vector<1x512xf32> to vector<1x128xf32>
    %125 = vector.extract_strided_slice %122 {offsets = [0, 384], sizes = [1, 128], strides = [1, 1]} : vector<1x512xf32> to vector<1x128xf32>
    %126 = vector.extract_strided_slice %117 {offsets = [0, 256], sizes = [1, 128], strides = [1, 1]} : vector<1x512xf32> to vector<1x128xf32>
    %127 = math.tanh %126 : vector<1x128xf32>
    %128 = arith.mulf %124, %89 : vector<1x128xf32>
    %129 = arith.mulf %123, %127 : vector<1x128xf32>
    %130 = arith.addf %128, %129 : vector<1x128xf32>
    %131 = math.tanh %130 : vector<1x128xf32>
    %132 = arith.mulf %125, %131 : vector<1x128xf32>
    %c0_49 = arith.constant 0 : index
    %c0_50 = arith.constant 0 : index
    %133 = vector.load %arg6[%c0_49, %c0_50] : memref<128x512xf32, #tpu.memory_space<vmem>>, vector<128x512xf32>
    %cst_51 = arith.constant dense<0.000000e+00> : vector<1x512xf32>
    %134 = tpu.matmul %132, %133, %cst_51 {dimension_numbers = #tpu.dot_dimension_numbers<[1], [0], [0], [1], [0, 0, 1, 1], [], []>} : vector<1x128xf32>, vector<128x512xf32>, vector<1x512xf32> -> vector<1x512xf32>
    %c0_52 = arith.constant 0 : index
    %c0_53 = arith.constant 0 : index
    %135 = vector.load %arg7[%c0_52, %c0_53] : memref<1x512xf32, #tpu.memory_space<vmem>>, vector<1x512xf32>
    %136 = arith.addf %134, %135 : vector<1x512xf32>
    %137 = vector.extract_strided_slice %5 {offsets = [3, 0], sizes = [1, 512], strides = [1, 1]} : vector<8x512xf32> to vector<1x512xf32>
    %c0_54 = arith.constant 0 : index
    %c0_55 = arith.constant 0 : index
    %138 = vector.load %arg3[%c0_54, %c0_55] : memref<128x512xf32, #tpu.memory_space<vmem>>, vector<128x512xf32>
    %cst_56 = arith.constant dense<0.000000e+00> : vector<1x512xf32>
    %139 = tpu.matmul %114, %138, %cst_56 {dimension_numbers = #tpu.dot_dimension_numbers<[1], [0], [0], [1], [0, 0, 1, 1], [], []>} : vector<1x128xf32>, vector<128x512xf32>, vector<1x512xf32> -> vector<1x512xf32>
    %140 = arith.addf %137, %139 : vector<1x512xf32>
    %141 = arith.negf %140 : vector<1x512xf32>
    %142 = math.exp %141 : vector<1x512xf32>
    %cst_57 = arith.constant 1.000000e+00 : f32
    %143 = vector.broadcast %cst_57 : f32 to vector<1x512xf32>
    %144 = arith.addf %143, %142 : vector<1x512xf32>
    %145 = arith.divf %143, %144 : vector<1x512xf32>
    %146 = vector.extract_strided_slice %145 {offsets = [0, 0], sizes = [1, 128], strides = [1, 1]} : vector<1x512xf32> to vector<1x128xf32>
    %147 = vector.extract_strided_slice %145 {offsets = [0, 128], sizes = [1, 128], strides = [1, 1]} : vector<1x512xf32> to vector<1x128xf32>
    %148 = vector.extract_strided_slice %145 {offsets = [0, 384], sizes = [1, 128], strides = [1, 1]} : vector<1x512xf32> to vector<1x128xf32>
    %149 = vector.extract_strided_slice %140 {offsets = [0, 256], sizes = [1, 128], strides = [1, 1]} : vector<1x512xf32> to vector<1x128xf32>
    %150 = math.tanh %149 : vector<1x128xf32>
    %151 = arith.mulf %147, %112 : vector<1x128xf32>
    %152 = arith.mulf %146, %150 : vector<1x128xf32>
    %153 = arith.addf %151, %152 : vector<1x128xf32>
    %154 = math.tanh %153 : vector<1x128xf32>
    %155 = arith.mulf %148, %154 : vector<1x128xf32>
    %c0_58 = arith.constant 0 : index
    %c0_59 = arith.constant 0 : index
    %156 = vector.load %arg5[%c0_58, %c0_59] : memref<128x512xf32, #tpu.memory_space<vmem>>, vector<128x512xf32>
    %cst_60 = arith.constant dense<0.000000e+00> : vector<1x512xf32>
    %157 = tpu.matmul %155, %156, %cst_60 {dimension_numbers = #tpu.dot_dimension_numbers<[1], [0], [0], [1], [0, 0, 1, 1], [], []>} : vector<1x128xf32>, vector<128x512xf32>, vector<1x512xf32> -> vector<1x512xf32>
    %158 = arith.addf %157, %136 : vector<1x512xf32>
    %159 = arith.negf %158 : vector<1x512xf32>
    %160 = math.exp %159 : vector<1x512xf32>
    %cst_61 = arith.constant 1.000000e+00 : f32
    %161 = vector.broadcast %cst_61 : f32 to vector<1x512xf32>
    %162 = arith.addf %161, %160 : vector<1x512xf32>
    %163 = arith.divf %161, %162 : vector<1x512xf32>
    %164 = vector.extract_strided_slice %163 {offsets = [0, 0], sizes = [1, 128], strides = [1, 1]} : vector<1x512xf32> to vector<1x128xf32>
    %165 = vector.extract_strided_slice %163 {offsets = [0, 128], sizes = [1, 128], strides = [1, 1]} : vector<1x512xf32> to vector<1x128xf32>
    %166 = vector.extract_strided_slice %163 {offsets = [0, 384], sizes = [1, 128], strides = [1, 1]} : vector<1x512xf32> to vector<1x128xf32>
    %167 = vector.extract_strided_slice %158 {offsets = [0, 256], sizes = [1, 128], strides = [1, 1]} : vector<1x512xf32> to vector<1x128xf32>
    %168 = math.tanh %167 : vector<1x128xf32>
    %169 = arith.mulf %165, %130 : vector<1x128xf32>
    %170 = arith.mulf %164, %168 : vector<1x128xf32>
    %171 = arith.addf %169, %170 : vector<1x128xf32>
    %172 = math.tanh %171 : vector<1x128xf32>
    %173 = arith.mulf %166, %172 : vector<1x128xf32>
    %c0_62 = arith.constant 0 : index
    %c0_63 = arith.constant 0 : index
    %174 = vector.load %arg6[%c0_62, %c0_63] : memref<128x512xf32, #tpu.memory_space<vmem>>, vector<128x512xf32>
    %cst_64 = arith.constant dense<0.000000e+00> : vector<1x512xf32>
    %175 = tpu.matmul %173, %174, %cst_64 {dimension_numbers = #tpu.dot_dimension_numbers<[1], [0], [0], [1], [0, 0, 1, 1], [], []>} : vector<1x128xf32>, vector<128x512xf32>, vector<1x512xf32> -> vector<1x512xf32>
    %c0_65 = arith.constant 0 : index
    %c0_66 = arith.constant 0 : index
    %176 = vector.load %arg7[%c0_65, %c0_66] : memref<1x512xf32, #tpu.memory_space<vmem>>, vector<1x512xf32>
    %177 = arith.addf %175, %176 : vector<1x512xf32>
    %178 = vector.extract_strided_slice %5 {offsets = [4, 0], sizes = [1, 512], strides = [1, 1]} : vector<8x512xf32> to vector<1x512xf32>
    %c0_67 = arith.constant 0 : index
    %c0_68 = arith.constant 0 : index
    %179 = vector.load %arg3[%c0_67, %c0_68] : memref<128x512xf32, #tpu.memory_space<vmem>>, vector<128x512xf32>
    %cst_69 = arith.constant dense<0.000000e+00> : vector<1x512xf32>
    %180 = tpu.matmul %155, %179, %cst_69 {dimension_numbers = #tpu.dot_dimension_numbers<[1], [0], [0], [1], [0, 0, 1, 1], [], []>} : vector<1x128xf32>, vector<128x512xf32>, vector<1x512xf32> -> vector<1x512xf32>
    %181 = arith.addf %178, %180 : vector<1x512xf32>
    %182 = arith.negf %181 : vector<1x512xf32>
    %183 = math.exp %182 : vector<1x512xf32>
    %cst_70 = arith.constant 1.000000e+00 : f32
    %184 = vector.broadcast %cst_70 : f32 to vector<1x512xf32>
    %185 = arith.addf %184, %183 : vector<1x512xf32>
    %186 = arith.divf %184, %185 : vector<1x512xf32>
    %187 = vector.extract_strided_slice %186 {offsets = [0, 0], sizes = [1, 128], strides = [1, 1]} : vector<1x512xf32> to vector<1x128xf32>
    %188 = vector.extract_strided_slice %186 {offsets = [0, 128], sizes = [1, 128], strides = [1, 1]} : vector<1x512xf32> to vector<1x128xf32>
    %189 = vector.extract_strided_slice %186 {offsets = [0, 384], sizes = [1, 128], strides = [1, 1]} : vector<1x512xf32> to vector<1x128xf32>
    %190 = vector.extract_strided_slice %181 {offsets = [0, 256], sizes = [1, 128], strides = [1, 1]} : vector<1x512xf32> to vector<1x128xf32>
    %191 = math.tanh %190 : vector<1x128xf32>
    %192 = arith.mulf %188, %153 : vector<1x128xf32>
    %193 = arith.mulf %187, %191 : vector<1x128xf32>
    %194 = arith.addf %192, %193 : vector<1x128xf32>
    %195 = math.tanh %194 : vector<1x128xf32>
    %196 = arith.mulf %189, %195 : vector<1x128xf32>
    %c0_71 = arith.constant 0 : index
    %c0_72 = arith.constant 0 : index
    %197 = vector.load %arg5[%c0_71, %c0_72] : memref<128x512xf32, #tpu.memory_space<vmem>>, vector<128x512xf32>
    %cst_73 = arith.constant dense<0.000000e+00> : vector<1x512xf32>
    %198 = tpu.matmul %196, %197, %cst_73 {dimension_numbers = #tpu.dot_dimension_numbers<[1], [0], [0], [1], [0, 0, 1, 1], [], []>} : vector<1x128xf32>, vector<128x512xf32>, vector<1x512xf32> -> vector<1x512xf32>
    %199 = arith.addf %198, %177 : vector<1x512xf32>
    %200 = arith.negf %199 : vector<1x512xf32>
    %201 = math.exp %200 : vector<1x512xf32>
    %cst_74 = arith.constant 1.000000e+00 : f32
    %202 = vector.broadcast %cst_74 : f32 to vector<1x512xf32>
    %203 = arith.addf %202, %201 : vector<1x512xf32>
    %204 = arith.divf %202, %203 : vector<1x512xf32>
    %205 = vector.extract_strided_slice %204 {offsets = [0, 0], sizes = [1, 128], strides = [1, 1]} : vector<1x512xf32> to vector<1x128xf32>
    %206 = vector.extract_strided_slice %204 {offsets = [0, 128], sizes = [1, 128], strides = [1, 1]} : vector<1x512xf32> to vector<1x128xf32>
    %207 = vector.extract_strided_slice %204 {offsets = [0, 384], sizes = [1, 128], strides = [1, 1]} : vector<1x512xf32> to vector<1x128xf32>
    %208 = vector.extract_strided_slice %199 {offsets = [0, 256], sizes = [1, 128], strides = [1, 1]} : vector<1x512xf32> to vector<1x128xf32>
    %209 = math.tanh %208 : vector<1x128xf32>
    %210 = arith.mulf %206, %171 : vector<1x128xf32>
    %211 = arith.mulf %205, %209 : vector<1x128xf32>
    %212 = arith.addf %210, %211 : vector<1x128xf32>
    %213 = math.tanh %212 : vector<1x128xf32>
    %214 = arith.mulf %207, %213 : vector<1x128xf32>
    %c0_75 = arith.constant 0 : index
    %c0_76 = arith.constant 0 : index
    %215 = vector.load %arg6[%c0_75, %c0_76] : memref<128x512xf32, #tpu.memory_space<vmem>>, vector<128x512xf32>
    %cst_77 = arith.constant dense<0.000000e+00> : vector<1x512xf32>
    %216 = tpu.matmul %214, %215, %cst_77 {dimension_numbers = #tpu.dot_dimension_numbers<[1], [0], [0], [1], [0, 0, 1, 1], [], []>} : vector<1x128xf32>, vector<128x512xf32>, vector<1x512xf32> -> vector<1x512xf32>
    %c0_78 = arith.constant 0 : index
    %c0_79 = arith.constant 0 : index
    %217 = vector.load %arg7[%c0_78, %c0_79] : memref<1x512xf32, #tpu.memory_space<vmem>>, vector<1x512xf32>
    %218 = arith.addf %216, %217 : vector<1x512xf32>
    %219 = vector.extract_strided_slice %5 {offsets = [5, 0], sizes = [1, 512], strides = [1, 1]} : vector<8x512xf32> to vector<1x512xf32>
    %c0_80 = arith.constant 0 : index
    %c0_81 = arith.constant 0 : index
    %220 = vector.load %arg3[%c0_80, %c0_81] : memref<128x512xf32, #tpu.memory_space<vmem>>, vector<128x512xf32>
    %cst_82 = arith.constant dense<0.000000e+00> : vector<1x512xf32>
    %221 = tpu.matmul %196, %220, %cst_82 {dimension_numbers = #tpu.dot_dimension_numbers<[1], [0], [0], [1], [0, 0, 1, 1], [], []>} : vector<1x128xf32>, vector<128x512xf32>, vector<1x512xf32> -> vector<1x512xf32>
    %222 = arith.addf %219, %221 : vector<1x512xf32>
    %223 = arith.negf %222 : vector<1x512xf32>
    %224 = math.exp %223 : vector<1x512xf32>
    %cst_83 = arith.constant 1.000000e+00 : f32
    %225 = vector.broadcast %cst_83 : f32 to vector<1x512xf32>
    %226 = arith.addf %225, %224 : vector<1x512xf32>
    %227 = arith.divf %225, %226 : vector<1x512xf32>
    %228 = vector.extract_strided_slice %227 {offsets = [0, 0], sizes = [1, 128], strides = [1, 1]} : vector<1x512xf32> to vector<1x128xf32>
    %229 = vector.extract_strided_slice %227 {offsets = [0, 128], sizes = [1, 128], strides = [1, 1]} : vector<1x512xf32> to vector<1x128xf32>
    %230 = vector.extract_strided_slice %227 {offsets = [0, 384], sizes = [1, 128], strides = [1, 1]} : vector<1x512xf32> to vector<1x128xf32>
    %231 = vector.extract_strided_slice %222 {offsets = [0, 256], sizes = [1, 128], strides = [1, 1]} : vector<1x512xf32> to vector<1x128xf32>
    %232 = math.tanh %231 : vector<1x128xf32>
    %233 = arith.mulf %229, %194 : vector<1x128xf32>
    %234 = arith.mulf %228, %232 : vector<1x128xf32>
    %235 = arith.addf %233, %234 : vector<1x128xf32>
    %236 = math.tanh %235 : vector<1x128xf32>
    %237 = arith.mulf %230, %236 : vector<1x128xf32>
    %c0_84 = arith.constant 0 : index
    %c0_85 = arith.constant 0 : index
    %238 = vector.load %arg5[%c0_84, %c0_85] : memref<128x512xf32, #tpu.memory_space<vmem>>, vector<128x512xf32>
    %cst_86 = arith.constant dense<0.000000e+00> : vector<1x512xf32>
    %239 = tpu.matmul %237, %238, %cst_86 {dimension_numbers = #tpu.dot_dimension_numbers<[1], [0], [0], [1], [0, 0, 1, 1], [], []>} : vector<1x128xf32>, vector<128x512xf32>, vector<1x512xf32> -> vector<1x512xf32>
    %240 = arith.addf %239, %218 : vector<1x512xf32>
    %241 = arith.negf %240 : vector<1x512xf32>
    %242 = math.exp %241 : vector<1x512xf32>
    %cst_87 = arith.constant 1.000000e+00 : f32
    %243 = vector.broadcast %cst_87 : f32 to vector<1x512xf32>
    %244 = arith.addf %243, %242 : vector<1x512xf32>
    %245 = arith.divf %243, %244 : vector<1x512xf32>
    %246 = vector.extract_strided_slice %245 {offsets = [0, 0], sizes = [1, 128], strides = [1, 1]} : vector<1x512xf32> to vector<1x128xf32>
    %247 = vector.extract_strided_slice %245 {offsets = [0, 128], sizes = [1, 128], strides = [1, 1]} : vector<1x512xf32> to vector<1x128xf32>
    %248 = vector.extract_strided_slice %245 {offsets = [0, 384], sizes = [1, 128], strides = [1, 1]} : vector<1x512xf32> to vector<1x128xf32>
    %249 = vector.extract_strided_slice %240 {offsets = [0, 256], sizes = [1, 128], strides = [1, 1]} : vector<1x512xf32> to vector<1x128xf32>
    %250 = math.tanh %249 : vector<1x128xf32>
    %251 = arith.mulf %247, %212 : vector<1x128xf32>
    %252 = arith.mulf %246, %250 : vector<1x128xf32>
    %253 = arith.addf %251, %252 : vector<1x128xf32>
    %254 = math.tanh %253 : vector<1x128xf32>
    %255 = arith.mulf %248, %254 : vector<1x128xf32>
    %c0_88 = arith.constant 0 : index
    %c0_89 = arith.constant 0 : index
    %256 = vector.load %arg6[%c0_88, %c0_89] : memref<128x512xf32, #tpu.memory_space<vmem>>, vector<128x512xf32>
    %cst_90 = arith.constant dense<0.000000e+00> : vector<1x512xf32>
    %257 = tpu.matmul %255, %256, %cst_90 {dimension_numbers = #tpu.dot_dimension_numbers<[1], [0], [0], [1], [0, 0, 1, 1], [], []>} : vector<1x128xf32>, vector<128x512xf32>, vector<1x512xf32> -> vector<1x512xf32>
    %c0_91 = arith.constant 0 : index
    %c0_92 = arith.constant 0 : index
    %258 = vector.load %arg7[%c0_91, %c0_92] : memref<1x512xf32, #tpu.memory_space<vmem>>, vector<1x512xf32>
    %259 = arith.addf %257, %258 : vector<1x512xf32>
    %260 = vector.extract_strided_slice %5 {offsets = [6, 0], sizes = [1, 512], strides = [1, 1]} : vector<8x512xf32> to vector<1x512xf32>
    %c0_93 = arith.constant 0 : index
    %c0_94 = arith.constant 0 : index
    %261 = vector.load %arg3[%c0_93, %c0_94] : memref<128x512xf32, #tpu.memory_space<vmem>>, vector<128x512xf32>
    %cst_95 = arith.constant dense<0.000000e+00> : vector<1x512xf32>
    %262 = tpu.matmul %237, %261, %cst_95 {dimension_numbers = #tpu.dot_dimension_numbers<[1], [0], [0], [1], [0, 0, 1, 1], [], []>} : vector<1x128xf32>, vector<128x512xf32>, vector<1x512xf32> -> vector<1x512xf32>
    %263 = arith.addf %260, %262 : vector<1x512xf32>
    %264 = arith.negf %263 : vector<1x512xf32>
    %265 = math.exp %264 : vector<1x512xf32>
    %cst_96 = arith.constant 1.000000e+00 : f32
    %266 = vector.broadcast %cst_96 : f32 to vector<1x512xf32>
    %267 = arith.addf %266, %265 : vector<1x512xf32>
    %268 = arith.divf %266, %267 : vector<1x512xf32>
    %269 = vector.extract_strided_slice %268 {offsets = [0, 0], sizes = [1, 128], strides = [1, 1]} : vector<1x512xf32> to vector<1x128xf32>
    %270 = vector.extract_strided_slice %268 {offsets = [0, 128], sizes = [1, 128], strides = [1, 1]} : vector<1x512xf32> to vector<1x128xf32>
    %271 = vector.extract_strided_slice %268 {offsets = [0, 384], sizes = [1, 128], strides = [1, 1]} : vector<1x512xf32> to vector<1x128xf32>
    %272 = vector.extract_strided_slice %263 {offsets = [0, 256], sizes = [1, 128], strides = [1, 1]} : vector<1x512xf32> to vector<1x128xf32>
    %273 = math.tanh %272 : vector<1x128xf32>
    %274 = arith.mulf %270, %235 : vector<1x128xf32>
    %275 = arith.mulf %269, %273 : vector<1x128xf32>
    %276 = arith.addf %274, %275 : vector<1x128xf32>
    %277 = math.tanh %276 : vector<1x128xf32>
    %278 = arith.mulf %271, %277 : vector<1x128xf32>
    %c0_97 = arith.constant 0 : index
    %c0_98 = arith.constant 0 : index
    %279 = vector.load %arg5[%c0_97, %c0_98] : memref<128x512xf32, #tpu.memory_space<vmem>>, vector<128x512xf32>
    %cst_99 = arith.constant dense<0.000000e+00> : vector<1x512xf32>
    %280 = tpu.matmul %278, %279, %cst_99 {dimension_numbers = #tpu.dot_dimension_numbers<[1], [0], [0], [1], [0, 0, 1, 1], [], []>} : vector<1x128xf32>, vector<128x512xf32>, vector<1x512xf32> -> vector<1x512xf32>
    %281 = arith.addf %280, %259 : vector<1x512xf32>
    %282 = arith.negf %281 : vector<1x512xf32>
    %283 = math.exp %282 : vector<1x512xf32>
    %cst_100 = arith.constant 1.000000e+00 : f32
    %284 = vector.broadcast %cst_100 : f32 to vector<1x512xf32>
    %285 = arith.addf %284, %283 : vector<1x512xf32>
    %286 = arith.divf %284, %285 : vector<1x512xf32>
    %287 = vector.extract_strided_slice %286 {offsets = [0, 0], sizes = [1, 128], strides = [1, 1]} : vector<1x512xf32> to vector<1x128xf32>
    %288 = vector.extract_strided_slice %286 {offsets = [0, 128], sizes = [1, 128], strides = [1, 1]} : vector<1x512xf32> to vector<1x128xf32>
    %289 = vector.extract_strided_slice %286 {offsets = [0, 384], sizes = [1, 128], strides = [1, 1]} : vector<1x512xf32> to vector<1x128xf32>
    %290 = vector.extract_strided_slice %281 {offsets = [0, 256], sizes = [1, 128], strides = [1, 1]} : vector<1x512xf32> to vector<1x128xf32>
    %291 = math.tanh %290 : vector<1x128xf32>
    %292 = arith.mulf %288, %253 : vector<1x128xf32>
    %293 = arith.mulf %287, %291 : vector<1x128xf32>
    %294 = arith.addf %292, %293 : vector<1x128xf32>
    %295 = math.tanh %294 : vector<1x128xf32>
    %296 = arith.mulf %289, %295 : vector<1x128xf32>
    %c0_101 = arith.constant 0 : index
    %c0_102 = arith.constant 0 : index
    %297 = vector.load %arg6[%c0_101, %c0_102] : memref<128x512xf32, #tpu.memory_space<vmem>>, vector<128x512xf32>
    %cst_103 = arith.constant dense<0.000000e+00> : vector<1x512xf32>
    %298 = tpu.matmul %296, %297, %cst_103 {dimension_numbers = #tpu.dot_dimension_numbers<[1], [0], [0], [1], [0, 0, 1, 1], [], []>} : vector<1x128xf32>, vector<128x512xf32>, vector<1x512xf32> -> vector<1x512xf32>
    %c0_104 = arith.constant 0 : index
    %c0_105 = arith.constant 0 : index
    %299 = vector.load %arg7[%c0_104, %c0_105] : memref<1x512xf32, #tpu.memory_space<vmem>>, vector<1x512xf32>
    %300 = arith.addf %298, %299 : vector<1x512xf32>
    %301 = vector.extract_strided_slice %5 {offsets = [7, 0], sizes = [1, 512], strides = [1, 1]} : vector<8x512xf32> to vector<1x512xf32>
    %c0_106 = arith.constant 0 : index
    %c0_107 = arith.constant 0 : index
    %302 = vector.load %arg3[%c0_106, %c0_107] : memref<128x512xf32, #tpu.memory_space<vmem>>, vector<128x512xf32>
    %cst_108 = arith.constant dense<0.000000e+00> : vector<1x512xf32>
    %303 = tpu.matmul %278, %302, %cst_108 {dimension_numbers = #tpu.dot_dimension_numbers<[1], [0], [0], [1], [0, 0, 1, 1], [], []>} : vector<1x128xf32>, vector<128x512xf32>, vector<1x512xf32> -> vector<1x512xf32>
    %304 = arith.addf %301, %303 : vector<1x512xf32>
    %305 = arith.negf %304 : vector<1x512xf32>
    %306 = math.exp %305 : vector<1x512xf32>
    %cst_109 = arith.constant 1.000000e+00 : f32
    %307 = vector.broadcast %cst_109 : f32 to vector<1x512xf32>
    %308 = arith.addf %307, %306 : vector<1x512xf32>
    %309 = arith.divf %307, %308 : vector<1x512xf32>
    %310 = vector.extract_strided_slice %309 {offsets = [0, 0], sizes = [1, 128], strides = [1, 1]} : vector<1x512xf32> to vector<1x128xf32>
    %311 = vector.extract_strided_slice %309 {offsets = [0, 128], sizes = [1, 128], strides = [1, 1]} : vector<1x512xf32> to vector<1x128xf32>
    %312 = vector.extract_strided_slice %309 {offsets = [0, 384], sizes = [1, 128], strides = [1, 1]} : vector<1x512xf32> to vector<1x128xf32>
    %313 = vector.extract_strided_slice %304 {offsets = [0, 256], sizes = [1, 128], strides = [1, 1]} : vector<1x512xf32> to vector<1x128xf32>
    %314 = math.tanh %313 : vector<1x128xf32>
    %315 = arith.mulf %311, %276 : vector<1x128xf32>
    %316 = arith.mulf %310, %314 : vector<1x128xf32>
    %317 = arith.addf %315, %316 : vector<1x128xf32>
    %318 = math.tanh %317 : vector<1x128xf32>
    %319 = arith.mulf %312, %318 : vector<1x128xf32>
    %c0_110 = arith.constant 0 : index
    %c0_111 = arith.constant 0 : index
    %320 = vector.load %arg5[%c0_110, %c0_111] : memref<128x512xf32, #tpu.memory_space<vmem>>, vector<128x512xf32>
    %cst_112 = arith.constant dense<0.000000e+00> : vector<1x512xf32>
    %321 = tpu.matmul %319, %320, %cst_112 {dimension_numbers = #tpu.dot_dimension_numbers<[1], [0], [0], [1], [0, 0, 1, 1], [], []>} : vector<1x128xf32>, vector<128x512xf32>, vector<1x512xf32> -> vector<1x512xf32>
    %322 = arith.addf %321, %300 : vector<1x512xf32>
    %323 = arith.negf %322 : vector<1x512xf32>
    %324 = math.exp %323 : vector<1x512xf32>
    %cst_113 = arith.constant 1.000000e+00 : f32
    %325 = vector.broadcast %cst_113 : f32 to vector<1x512xf32>
    %326 = arith.addf %325, %324 : vector<1x512xf32>
    %327 = arith.divf %325, %326 : vector<1x512xf32>
    %328 = vector.extract_strided_slice %327 {offsets = [0, 0], sizes = [1, 128], strides = [1, 1]} : vector<1x512xf32> to vector<1x128xf32>
    %329 = vector.extract_strided_slice %327 {offsets = [0, 128], sizes = [1, 128], strides = [1, 1]} : vector<1x512xf32> to vector<1x128xf32>
    %330 = vector.extract_strided_slice %327 {offsets = [0, 384], sizes = [1, 128], strides = [1, 1]} : vector<1x512xf32> to vector<1x128xf32>
    %331 = vector.extract_strided_slice %322 {offsets = [0, 256], sizes = [1, 128], strides = [1, 1]} : vector<1x512xf32> to vector<1x128xf32>
    %332 = math.tanh %331 : vector<1x128xf32>
    %333 = arith.mulf %329, %294 : vector<1x128xf32>
    %334 = arith.mulf %328, %332 : vector<1x128xf32>
    %335 = arith.addf %333, %334 : vector<1x128xf32>
    %336 = math.tanh %335 : vector<1x128xf32>
    %337 = arith.mulf %330, %336 : vector<1x128xf32>
    %338 = tpu.concatenate %50, %91, %132, %173, %214, %255, %296, %337 in 0 : vector<1x128xf32>, vector<1x128xf32>, vector<1x128xf32>, vector<1x128xf32>, vector<1x128xf32>, vector<1x128xf32>, vector<1x128xf32>, vector<1x128xf32> -> vector<8x128xf32>
    %c0_114 = arith.constant 0 : index
    %c0_115 = arith.constant 0 : index
    %339 = vector.load %arg8[%c0_114, %c0_115] : memref<128x33xf32, #tpu.memory_space<vmem>>, vector<128x33xf32>
    %cst_116 = arith.constant dense<0.000000e+00> : vector<8x33xf32>
    %340 = tpu.matmul %338, %339, %cst_116 {dimension_numbers = #tpu.dot_dimension_numbers<[1], [0], [0], [1], [0, 0, 1, 1], [], []>} : vector<8x128xf32>, vector<128x33xf32>, vector<8x33xf32> -> vector<8x33xf32>
    %c0_117 = arith.constant 0 : index
    %c0_118 = arith.constant 0 : index
    %341 = vector.load %arg9[%c0_117, %c0_118] : memref<1x33xf32, #tpu.memory_space<vmem>>, vector<1x33xf32>
    %342 = vector.broadcast %341 : vector<1x33xf32> to vector<8x33xf32>
    %343 = arith.addf %340, %342 : vector<8x33xf32>
    %344 = arith.negf %343 : vector<8x33xf32>
    %345 = math.exp %344 : vector<8x33xf32>
    %cst_119 = arith.constant 1.000000e+00 : f32
    %346 = vector.broadcast %cst_119 : f32 to vector<8x33xf32>
    %347 = arith.addf %346, %345 : vector<8x33xf32>
    %348 = arith.divf %346, %347 : vector<8x33xf32>
    %349 = arith.mulf %348, %0 : vector<8x33xf32>
    %c0_120 = arith.constant 0 : index
    %c0_121 = arith.constant 0 : index
    %350 = vector.load %arg10[%c0_120, %c0_121] : memref<8x33xf32, #tpu.memory_space<vmem>>, vector<8x33xf32>
    tpu.vector_store %arg10[%c0_120, %c0_121], %349 {strides = array<i32>} : memref<8x33xf32, #tpu.memory_space<vmem>>, vector<8x33xf32>,
    %351 = tpu.concatenate %319, %317, %337, %335 in 0 : vector<1x128xf32>, vector<1x128xf32>, vector<1x128xf32>, vector<1x128xf32> -> vector<4x128xf32>
    %c0_122 = arith.constant 0 : index
    %c0_123 = arith.constant 0 : index
    %352 = vector.load %arg11[%c0_122, %c0_123] : memref<4x128xf32, #tpu.memory_space<vmem>>, vector<4x128xf32>
    tpu.vector_store %arg11[%c0_122, %c0_123], %351 {strides = array<i32>} : memref<4x128xf32, #tpu.memory_space<vmem>>, vector<4x128xf32>,
    return
  }
}

</mosaic_0001>

<llo_original>
// kernel: tpu_custom_call.1
$region0: #{tpu_custom_call.1}
  #allocation0 [shape = 'u32[]', space=smem, size = 0x4, offset = 0x4, fixed_abs, tag = 'smem constant byte address 0x4 - core index']
  #allocation1 [shape = 'u32[144,128]{1,0:T(1,128)}', space=vmem, size = 0x12000, scoped, tag = 'internal scratch']
  %s0 = inlined_call_operand.vmem [shape: f32[8,33], index: 0, kind: input, shape index: {}]
  %s1 = inlined_call_operand.vmem [shape: f32[4,128], index: 1, kind: input, shape index: {}]
  %s2 = inlined_call_operand.vmem [shape: f32[33,512], index: 2, kind: input, shape index: {}]
  %s3 = inlined_call_operand.hbm [shape: f32[128,512], index: 3, kind: input, shape index: {}]
  %s4 = inlined_call_operand.vmem [shape: f32[1,512], index: 4, kind: input, shape index: {}]
  %s5 = inlined_call_operand.hbm [shape: f32[128,512], index: 5, kind: input, shape index: {}]
  %s6 = inlined_call_operand.hbm [shape: f32[128,512], index: 6, kind: input, shape index: {}]
  %s7 = inlined_call_operand.vmem [shape: f32[1,512], index: 7, kind: input, shape index: {}]
  %s8 = inlined_call_operand.vmem [shape: f32[128,33], index: 8, kind: input, shape index: {}]
  %s9 = inlined_call_operand.vmem [shape: f32[1,33], index: 9, kind: input, shape index: {}]
  %s10 = inlined_call_operand.hbm [shape: f32[8,33], index: 10, kind: output, shape index: {0}]
  %s11 = inlined_call_operand.hbm [shape: f32[4,128], index: 11, kind: output, shape index: {1}]
  %12 = xla_tuple %s10, %s11
  %s13 = sld [smem:[#allocation0]]
  $region70: #{tpu_custom_call.1} parent=0
    _
  %s15 = ssub.s32 1, %s13
  %s16 = scalar_select 0, %s15, %s13
  $region1: #{tpu_custom_call.1} parent=0
    #allocation2 [shape = 'u8[262144]{0}', space=vmem, size = 0x40000, scoped, tag = 'input window, operand 3, single buffered']
    #allocation3 [shape = 's32[1]{0}', space=sflag, size = 0x4, scoped, tag = 'scoped memory for tpu_custom_call.1']
    #allocation4 [shape = 's32[1]{0}', space=sflag, size = 0x4, scoped, tag = 'scoped memory for tpu_custom_call.1']
    #allocation5 [shape = 'u8[262144]{0}', space=vmem, size = 0x40000, scoped, tag = 'input window, operand 5, single buffered']
    #allocation6 [shape = 's32[1]{0}', space=sflag, size = 0x4, scoped, tag = 'scoped memory for tpu_custom_call.1']
    #allocation7 [shape = 'u8[262144]{0}', space=vmem, size = 0x40000, scoped, tag = 'input window, operand 6, single buffered']
    #allocation8 [shape = 'u8[4096]{0}', space=vmem, size = 0x1000, scoped, tag = 'output window, operand 0, single buffered']
    #allocation9 [shape = 'u8[2048]{0}', space=vmem, size = 0x800, scoped, tag = 'output window, operand 1, single buffered']
    #allocation10 [shape = 's32[1]{0}', space=sflag, size = 0x4, scoped, tag = 'scoped memory for tpu_custom_call.1']
    %17 = vsyncpa [#allocation3], 0
    %18 = vsyncpa [#allocation6], 0
    %19 = vsyncpa [#allocation4], 0
    %20 = vsyncpa [#allocation10], 0
    // Predicated region
    $region2: #{tpu_custom_call.1} parent=1 // pred_check
      _
    $region3: #{tpu_custom_call.1} parent=1 // pred_check_branch
      %22 = sbr.rel (0) target = $region5
    $region4: #{tpu_custom_call.1} parent=1 // pred_region
      _
    $region5: #{tpu_custom_call.1} parent=1 // pred_fallthru
      _
    // Predicated region
    $region6: #{tpu_custom_call.1} parent=1 // pred_check
      _
    $region7: #{tpu_custom_call.1} parent=1 // pred_check_branch
      %24 = sbr.rel (0) target = $region9
    $region8: #{tpu_custom_call.1} parent=1 // pred_region
      _
    $region9: #{tpu_custom_call.1} parent=1 // pred_fallthru
      _
    // Predicated region
    $region10: #{tpu_custom_call.1} parent=1 // pred_check
      _
    $region11: #{tpu_custom_call.1} parent=1 // pred_check_branch
      %26 = sbr.rel (0) target = $region13
    $region12: #{tpu_custom_call.1} parent=1 // pred_region
      _
    $region13: #{tpu_custom_call.1} parent=1 // pred_fallthru
      _
    // Predicated region
    $region14: #{tpu_custom_call.1} parent=1 // pred_check
      _
    $region15: #{tpu_custom_call.1} parent=1 // pred_check_branch
      %28 = sbr.rel (0) target = $region17
    $region16: #{tpu_custom_call.1} parent=1 // pred_region
      %s30 = ssub.s32 8192, 8192
      %31 = vsyncadd [#allocation3], %s30
      %s32 = sshll.u32 [#allocation2], 4
      %s33 = int_to_ptr.vmem [resolvable:$true] %s32
      %38 = dma.hbm_to_vmem [thread:$0]  %s3, 8192, %s33, [#allocation3], 512, 512, 32
    $region17: #{tpu_custom_call.1} parent=1 // pred_fallthru
      _
    // Predicated region
    $region18: #{tpu_custom_call.1} parent=1 // pred_check
      _
    $region19: #{tpu_custom_call.1} parent=1 // pred_check_branch
      %40 = sbr.rel (0) target = $region21
    $region20: #{tpu_custom_call.1} parent=1 // pred_region
      _
    $region21: #{tpu_custom_call.1} parent=1 // pred_fallthru
      _
    // Predicated region
    $region22: #{tpu_custom_call.1} parent=1 // pred_check
      _
    $region23: #{tpu_custom_call.1} parent=1 // pred_check_branch
      %42 = sbr.rel (0) target = $region25
    $region24: #{tpu_custom_call.1} parent=1 // pred_region
      %s44 = ssub.s32 8192, 8192
      %45 = vsyncadd [#allocation6], %s44
      %s46 = sshll.u32 [#allocation5], 4
      %s47 = int_to_ptr.vmem [resolvable:$true] %s46
      %52 = dma.hbm_to_vmem [thread:$0]  %s5, 8192, %s47, [#allocation6], 512, 512, 32
    $region25: #{tpu_custom_call.1} parent=1 // pred_fallthru
      _
    // Predicated region
    $region26: #{tpu_custom_call.1} parent=1 // pred_check
      _
    $region27: #{tpu_custom_call.1} parent=1 // pred_check_branch
      %54 = sbr.rel (0) target = $region29
    $region28: #{tpu_custom_call.1} parent=1 // pred_region
      %s56 = ssub.s32 8192, 8192
      %57 = vsyncadd [#allocation6], %s56
      %s58 = sshll.u32 [#allocation7], 4
      %s59 = int_to_ptr.vmem [resolvable:$true] %s58
      %64 = dma.hbm_to_vmem [thread:$0]  %s6, 8192, %s59, [#allocation6], 512, 512, 32
    $region29: #{tpu_custom_call.1} parent=1 // pred_fallthru
      _
    // Predicated region
    $region30: #{tpu_custom_call.1} parent=1 // pred_check
      _
    $region31: #{tpu_custom_call.1} parent=1 // pred_check_branch
      %66 = sbr.rel (0) target = $region33
    $region32: #{tpu_custom_call.1} parent=1 // pred_region
      _
    $region33: #{tpu_custom_call.1} parent=1 // pred_fallthru
      _
    // Predicated region
    $region34: #{tpu_custom_call.1} parent=1 // pred_check
      _
    $region35: #{tpu_custom_call.1} parent=1 // pred_check_branch
      %68 = sbr.rel (0) target = $region37
    $region36: #{tpu_custom_call.1} parent=1 // pred_region
      _
    $region37: #{tpu_custom_call.1} parent=1 // pred_fallthru
      _
    // Predicated region
    $region38: #{tpu_custom_call.1} parent=1 // pred_check
      _
    $region39: #{tpu_custom_call.1} parent=1 // pred_check_branch
      %70 = sbr.rel (0) target = $region41
    $region40: #{tpu_custom_call.1} parent=1 // pred_region
      _
    $region41: #{tpu_custom_call.1} parent=1 // pred_fallthru
      _
    // Predicated region
    $region42: #{tpu_custom_call.1} parent=1 // pred_check
      _
    $region43: #{tpu_custom_call.1} parent=1 // pred_check_branch
      %72 = sbr.rel (0) target = $region45
    $region44: #{tpu_custom_call.1} parent=1 // pred_region
      %73 = dma.done [#allocation3], 8192
    $region45: #{tpu_custom_call.1} parent=1 // pred_fallthru
      _
    // Predicated region
    $region46: #{tpu_custom_call.1} parent=1 // pred_check
      _
    $region47: #{tpu_custom_call.1} parent=1 // pred_check_branch
      %75 = sbr.rel (0) target = $region49
    $region48: #{tpu_custom_call.1} parent=1 // pred_region
      %76 = dma.done [#allocation6], 8192
    $region49: #{tpu_custom_call.1} parent=1 // pred_fallthru
      _
    // Predicated region
    $region50: #{tpu_custom_call.1} parent=1 // pred_check
      _
    $region51: #{tpu_custom_call.1} parent=1 // pred_check_branch
      %78 = sbr.rel (0) target = $region53
    $region52: #{tpu_custom_call.1} parent=1 // pred_region
      %79 = dma.done [#allocation6], 8192
    $region53: #{tpu_custom_call.1} parent=1 // pred_fallthru
      _
    %v80 = vld [vmem:[%s0] sm:$0xff]
    %v81 = vld [vmem:[%s2] sm:$0xff]
    %v82 = vld [vmem:[%s2 + $0x8] sm:$0xff]
    %v83 = vld [vmem:[%s2 + $0x10] sm:$0xff]
    %v84 = vld [vmem:[%s2 + $0x18] sm:$0xff]
    %v85 = vld [vmem:[%s2 + $0x20] sm:$0xff]
    %v86 = vld [vmem:[%s2 + $0x28] sm:$0xff]
    %v87 = vld [vmem:[%s2 + $0x30] sm:$0xff]
    %v88 = vld [vmem:[%s2 + $0x38] sm:$0xff]
    %v89 = vld [vmem:[%s2 + $0x40] sm:$0xff]
    %v90 = vld [vmem:[%s2 + $0x48] sm:$0xff]
    %v91 = vld [vmem:[%s2 + $0x50] sm:$0xff]
    %v92 = vld [vmem:[%s2 + $0x58] sm:$0xff]
    %v93 = vld [vmem:[%s2 + $0x60] sm:$0xff]
    %v94 = vld [vmem:[%s2 + $0x68] sm:$0xff]
    %v95 = vld [vmem:[%s2 + $0x70] sm:$0xff]
    %v96 = vld [vmem:[%s2 + $0x78] sm:$0xff]
    %v97 = vld [vmem:[%s2 + $0x80] sm:$0x1]
    %v98 = vld [vmem:[%s2 + $0x88] sm:$0x1]
    %v99 = vld [vmem:[%s2 + $0x90] sm:$0x1]
    %v100 = vld [vmem:[%s2 + $0x98] sm:$0x1]
    %v101 = vld [vmem:[%s4] sm:$0xf]
    %v103 = vlaneseq
    %v104 = vshrl.u32 %v103, 7
    %v105 = vsub.s32 0, %v104
    %v106 = vrot.slane %v101, %v105
    %v107 = vlaneseq
    %v108 = vshrl.u32 %v107, 7
    %v109 = vsub.s32 1, %v108
    %v110 = vrot.slane %v101, %v109
    %v111 = vlaneseq
    %v112 = vshrl.u32 %v111, 7
    %v113 = vsub.s32 2, %v112
    %v114 = vrot.slane %v101, %v113
    %v115 = vlaneseq
    %v116 = vshrl.u32 %v115, 7
    %v117 = vsub.s32 3, %v116
    %v118 = vrot.slane %v101, %v117
    %vm123 = vcmask 269312
    %v125 = vsel %vm123, %v80, 0
    %vm127 = vcmask 1040384
    %v129 = vsel %vm127, %v97, 0
    %v132 = vsel %vm127, %v98, 0
    %v135 = vsel %vm127, %v99, 0
    %v138 = vsel %vm127, %v100, 0
    %140 = vmatprep.subr.mxu0 %v82
    %141 = vmatpush1.msra.mxu0 %v81
    %142 = vmatprep.subr.mxu0 %v86
    %143 = vmatpush1.msra.mxu0 %v85
    %144 = vmatprep.subr.mxu0 %v90
    %145 = vmatpush1.msra.mxu0 %v89
    %146 = vmatprep.subr.mxu0 %v94
    %147 = vmatpush1.msra.mxu0 %v93
    %148 = vmatprep.subr.mxu0 %v132
    %149 = vmatpush1.msra.mxu0 %v129
    %150 = vmatprep.subr.mxu0 0.0
    %151 = vmatpush1.msra.mxu0 0.0
    %152 = vmatprep.subr.mxu0 0.0
    %153 = vmatpush1.msra.mxu0 0.0
    %154 = vmatprep.subr.mxu0 0.0
    %155 = vmatpush1.msra.mxu0 0.0
    %156 = vmatprep.subr.mxu0 0.0
    %157 = vmatpush1.msra.mxu0 0.0
    %158 = vmatprep.subr.mxu0 0.0
    %159 = vmatpush1.msra.mxu0 0.0
    %160 = vmatprep.subr.mxu0 0.0
    %161 = vmatpush1.msra.mxu0 0.0
    %162 = vmatprep.subr.mxu0 0.0
    %163 = vmatpush1.msra.mxu0 0.0
    %164 = vmatprep.subr.mxu0 0.0
    %165 = vmatpush1.msra.mxu0 0.0
    %166 = vmatprep.subr.mxu0 0.0
    %167 = vmatpush1.msra.mxu0 0.0
    %168 = vmatprep.subr.mxu0 0.0
    %169 = vmatpush1.msra.mxu0 0.0
    %170 = vmatprep.subr.mxu0 0.0
    %171 = vmatpush1.msra.mxu0 0.0
    %172 = vmatprep.subr.mxu0 0.0
    %173 = vmatpush1.msra.mxu0 0.0
    %174 = vmatprep.subr.mxu0 0.0
    %175 = vmatpush1.msra.mxu0 0.0
    %176 = vmatprep.subr.mxu0 0.0
    %177 = vmatpush1.msra.mxu0 0.0
    %178 = vmatprep.subr.mxu0 0.0
    %179 = vmatpush1.msra.mxu0 0.0
    %180 = vmatprep.subr.mxu0 0.0
    %181 = vmatpush1.msra.mxu0 0.0
    %182 = vmatprep.subr.mxu0 0.0
    %183 = vmatpush1.msra.mxu0 0.0
    %184 = vmatprep.subr.mxu0 0.0
    %185 = vmatpush1.msra.mxu0 0.0
    %186 = vmatprep.subr.mxu0 0.0
    %187 = vmatpush1.msra.mxu0 0.0
    %188 = vmatprep.subr.mxu0 0.0
    %189 = vmatpush1.msra.mxu0 0.0
    %190 = vmatprep.subr.mxu0 0.0
    %191 = vmatpush1.msra.mxu0 0.0
    %192 = vmatprep.subr.mxu0 0.0
    %193 = vmatpush1.msra.mxu0 0.0
    %194 = vmatprep.subr.mxu0 0.0
    %195 = vmatpush1.msra.mxu0 0.0
    %196 = vmatprep.subr.mxu0 0.0
    %197 = vmatpush1.msra.mxu0 0.0
    %198 = vmatprep.subr.mxu0 0.0
    %199 = vmatpush1.msra.mxu0 0.0
    %200 = vmatprep.subr.mxu0 0.0
    %201 = vmatpush1.msra.mxu0 0.0
    %202 = vmatprep.subr.mxu0 0.0
    %203 = vmatpush1.msra.mxu0 0.0
    %204 = vmatprep.mubr.f32.mxu0 0.0
    %205 = vmatmul.mubr.f32.gmra.mrb[0].mxu0 %v125
    %v206 = vpop.f32.mrb[0].mxu0
    %v207 = vadd.f32 %v106, %v206
    %v208 = vpop.f32.mrb[0].mxu0
    %v209 = vadd.f32 %v110, %v208
    %210 = vdwg.mxu0
    %211 = vmatprep.subr.mxu0 %v84
    %212 = vmatpush1.msra.mxu0 %v83
    %213 = vmatprep.subr.mxu0 %v88
    %214 = vmatpush1.msra.mxu0 %v87
    %215 = vmatprep.subr.mxu0 %v92
    %216 = vmatpush1.msra.mxu0 %v91
    %217 = vmatprep.subr.mxu0 %v96
    %218 = vmatpush1.msra.mxu0 %v95
    %219 = vmatprep.subr.mxu0 %v138
    %220 = vmatpush1.msra.mxu0 %v135
    %221 = vmatprep.subr.mxu0 0.0
    %222 = vmatpush1.msra.mxu0 0.0
    %223 = vmatprep.subr.mxu0 0.0
    %224 = vmatpush1.msra.mxu0 0.0
    %225 = vmatprep.subr.mxu0 0.0
    %226 = vmatpush1.msra.mxu0 0.0
    %227 = vmatprep.subr.mxu0 0.0
    %228 = vmatpush1.msra.mxu0 0.0
    %229 = vmatprep.subr.mxu0 0.0
    %230 = vmatpush1.msra.mxu0 0.0
    %231 = vmatprep.subr.mxu0 0.0
    %232 = vmatpush1.msra.mxu0 0.0
    %233 = vmatprep.subr.mxu0 0.0
    %234 = vmatpush1.msra.mxu0 0.0
    %235 = vmatprep.subr.mxu0 0.0
    %236 = vmatpush1.msra.mxu0 0.0
    %237 = vmatprep.subr.mxu0 0.0
    %238 = vmatpush1.msra.mxu0 0.0
    %239 = vmatprep.subr.mxu0 0.0
    %240 = vmatpush1.msra.mxu0 0.0
    %241 = vmatprep.subr.mxu0 0.0
    %242 = vmatpush1.msra.mxu0 0.0
    %243 = vmatprep.subr.mxu0 0.0
    %244 = vmatpush1.msra.mxu0 0.0
    %245 = vmatprep.subr.mxu0 0.0
    %246 = vmatpush1.msra.mxu0 0.0
    %247 = vmatprep.subr.mxu0 0.0
    %248 = vmatpush1.msra.mxu0 0.0
    %249 = vmatprep.subr.mxu0 0.0
    %250 = vmatpush1.msra.mxu0 0.0
    %251 = vmatprep.subr.mxu0 0.0
    %252 = vmatpush1.msra.mxu0 0.0
    %253 = vmatprep.subr.mxu0 0.0
    %254 = vmatpush1.msra.mxu0 0.0
    %255 = vmatprep.subr.mxu0 0.0
    %256 = vmatpush1.msra.mxu0 0.0
    %257 = vmatprep.subr.mxu0 0.0
    %258 = vmatpush1.msra.mxu0 0.0
    %259 = vmatprep.subr.mxu0 0.0
    %260 = vmatpush1.msra.mxu0 0.0
    %261 = vmatprep.subr.mxu0 0.0
    %262 = vmatpush1.msra.mxu0 0.0
    %263 = vmatprep.subr.mxu0 0.0
    %264 = vmatpush1.msra.mxu0 0.0
    %265 = vmatprep.subr.mxu0 0.0
    %266 = vmatpush1.msra.mxu0 0.0
    %267 = vmatprep.subr.mxu0 0.0
    %268 = vmatpush1.msra.mxu0 0.0
    %269 = vmatprep.subr.mxu0 0.0
    %270 = vmatpush1.msra.mxu0 0.0
    %271 = vmatprep.subr.mxu0 0.0
    %272 = vmatpush1.msra.mxu0 0.0
    %273 = vmatprep.subr.mxu0 0.0
    %274 = vmatpush1.msra.mxu0 0.0
    %275 = vmatprep.mubr.f32.mxu0 0.0
    %276 = vmatmul.mubr.f32.gmra.mrb[0].mxu0 %v125
    %v277 = vpop.f32.mrb[0].mxu0
    %v278 = vadd.f32 %v114, %v277
    %v279 = vpop.f32.mrb[0].mxu0
    %v280 = vadd.f32 %v118, %v279
    %281 = vdwg.mxu0
    %v282 = vld [vmem:[%s1] sm:$0x1]
    %v283 = vld [vmem:[%s1 + $0x1] sm:$0x1]
    %v284 = vld [vmem:[%s1 + $0x2] sm:$0x1]
    %v285 = vld [vmem:[%s1 + $0x3] sm:$0x1]
    %v286 = vld [vmem:[#allocation7] sm:$0xff]
    %v287 = vld [vmem:[#allocation7 + $0x8] sm:$0xff]
    %v288 = vld [vmem:[#allocation7 + $0x10] sm:$0xff]
    %v289 = vld [vmem:[#allocation7 + $0x18] sm:$0xff]
    %v290 = vld [vmem:[#allocation7 + $0x20] sm:$0xff]
    %v291 = vld [vmem:[#allocation7 + $0x28] sm:$0xff]
    %v292 = vld [vmem:[#allocation7 + $0x30] sm:$0xff]
    %v293 = vld [vmem:[#allocation7 + $0x38] sm:$0xff]
    %v294 = vld [vmem:[#allocation7 + $0x40] sm:$0xff]
    %v295 = vld [vmem:[#allocation7 + $0x48] sm:$0xff]
    %v296 = vld [vmem:[#allocation7 + $0x50] sm:$0xff]
    %v297 = vld [vmem:[#allocation7 + $0x58] sm:$0xff]
    %v298 = vld [vmem:[#allocation7 + $0x60] sm:$0xff]
    %v299 = vld [vmem:[#allocation7 + $0x68] sm:$0xff]
    %v300 = vld [vmem:[#allocation7 + $0x70] sm:$0xff]
    %v301 = vld [vmem:[#allocation7 + $0x78] sm:$0xff]
    %v302 = vld [vmem:[#allocation7 + $0x80] sm:$0xff]
    %v303 = vld [vmem:[#allocation7 + $0x88] sm:$0xff]
    %v304 = vld [vmem:[#allocation7 + $0x90] sm:$0xff]
    %v305 = vld [vmem:[#allocation7 + $0x98] sm:$0xff]
    %v306 = vld [vmem:[#allocation7 + $0xa0] sm:$0xff]
    %v307 = vld [vmem:[#allocation7 + $0xa8] sm:$0xff]
    %v308 = vld [vmem:[#allocation7 + $0xb0] sm:$0xff]
    %v309 = vld [vmem:[#allocation7 + $0xb8] sm:$0xff]
    %v310 = vld [vmem:[#allocation7 + $0xc0] sm:$0xff]
    %v311 = vld [vmem:[#allocation7 + $0xc8] sm:$0xff]
    %v312 = vld [vmem:[#allocation7 + $0xd0] sm:$0xff]
    %v313 = vld [vmem:[#allocation7 + $0xd8] sm:$0xff]
    %v314 = vld [vmem:[#allocation7 + $0xe0] sm:$0xff]
    %v315 = vld [vmem:[#allocation7 + $0xe8] sm:$0xff]
    %v316 = vld [vmem:[#allocation7 + $0xf0] sm:$0xff]
    %v317 = vld [vmem:[#allocation7 + $0xf8] sm:$0xff]
    %v318 = vld [vmem:[#allocation7 + $0x100] sm:$0xff]
    %v319 = vld [vmem:[#allocation7 + $0x108] sm:$0xff]
    %v320 = vld [vmem:[#allocation7 + $0x110] sm:$0xff]
    %v321 = vld [vmem:[#allocation7 + $0x118] sm:$0xff]
    %v322 = vld [vmem:[#allocation7 + $0x120] sm:$0xff]
    %v323 = vld [vmem:[#allocation7 + $0x128] sm:$0xff]
    %v324 = vld [vmem:[#allocation7 + $0x130] sm:$0xff]
    %v325 = vld [vmem:[#allocation7 + $0x138] sm:$0xff]
    %v326 = vld [vmem:[#allocation7 + $0x140] sm:$0xff]
    %v327 = vld [vmem:[#allocation7 + $0x148] sm:$0xff]
    %v328 = vld [vmem:[#allocation7 + $0x150] sm:$0xff]
    %v329 = vld [vmem:[#allocation7 + $0x158] sm:$0xff]
    %v330 = vld [vmem:[#allocation7 + $0x160] sm:$0xff]
    %v331 = vld [vmem:[#allocation7 + $0x168] sm:$0xff]
    %v332 = vld [vmem:[#allocation7 + $0x170] sm:$0xff]
    %v333 = vld [vmem:[#allocation7 + $0x178] sm:$0xff]
    %v334 = vld [vmem:[#allocation7 + $0x180] sm:$0xff]
    %v335 = vld [vmem:[#allocation7 + $0x188] sm:$0xff]
    %v336 = vld [vmem:[#allocation7 + $0x190] sm:$0xff]
    %v337 = vld [vmem:[#allocation7 + $0x198] sm:$0xff]
    %v338 = vld [vmem:[#allocation7 + $0x1a0] sm:$0xff]
    %v339 = vld [vmem:[#allocation7 + $0x1a8] sm:$0xff]
    %v340 = vld [vmem:[#allocation7 + $0x1b0] sm:$0xff]
    %v341 = vld [vmem:[#allocation7 + $0x1b8] sm:$0xff]
    %v342 = vld [vmem:[#allocation7 + $0x1c0] sm:$0xff]
    %v343 = vld [vmem:[#allocation7 + $0x1c8] sm:$0xff]
    %v344 = vld [vmem:[#allocation7 + $0x1d0] sm:$0xff]
    %v345 = vld [vmem:[#allocation7 + $0x1d8] sm:$0xff]
    %v346 = vld [vmem:[#allocation7 + $0x1e0] sm:$0xff]
    %v347 = vld [vmem:[#allocation7 + $0x1e8] sm:$0xff]
    %v348 = vld [vmem:[#allocation7 + $0x1f0] sm:$0xff]
    %v349 = vld [vmem:[#allocation7 + $0x1f8] sm:$0xff]
    %v350 = vld [vmem:[%s7] sm:$0xf]
    %v352 = vlaneseq
    %v353 = vshrl.u32 %v352, 7
    %v354 = vsub.s32 0, %v353
    %v355 = vrot.slane %v350, %v354
    %v356 = vlaneseq
    %v357 = vshrl.u32 %v356, 7
    %v358 = vsub.s32 1, %v357
    %v359 = vrot.slane %v350, %v358
    %v360 = vlaneseq
    %v361 = vshrl.u32 %v360, 7
    %v362 = vsub.s32 2, %v361
    %v363 = vrot.slane %v350, %v362
    %v364 = vlaneseq
    %v365 = vshrl.u32 %v364, 7
    %v366 = vsub.s32 3, %v365
    %v367 = vrot.slane %v350, %v366
    %372 = vmatprep.subr.mxu0 %v287
    %373 = vmatpush1.msra.mxu0 %v286
    %374 = vmatprep.subr.mxu0 %v291
    %375 = vmatpush1.msra.mxu0 %v290
    %376 = vmatprep.subr.mxu0 %v295
    %377 = vmatpush1.msra.mxu0 %v294
    %378 = vmatprep.subr.mxu0 %v299
    %379 = vmatpush1.msra.mxu0 %v298
    %380 = vmatprep.subr.mxu0 %v303
    %381 = vmatpush1.msra.mxu0 %v302
    %382 = vmatprep.subr.mxu0 %v307
    %383 = vmatpush1.msra.mxu0 %v306
    %384 = vmatprep.subr.mxu0 %v311
    %385 = vmatpush1.msra.mxu0 %v310
    %386 = vmatprep.subr.mxu0 %v315
    %387 = vmatpush1.msra.mxu0 %v314
    %388 = vmatprep.subr.mxu0 %v319
    %389 = vmatpush1.msra.mxu0 %v318
    %390 = vmatprep.subr.mxu0 %v323
    %391 = vmatpush1.msra.mxu0 %v322
    %392 = vmatprep.subr.mxu0 %v327
    %393 = vmatpush1.msra.mxu0 %v326
    %394 = vmatprep.subr.mxu0 %v331
    %395 = vmatpush1.msra.mxu0 %v330
    %396 = vmatprep.subr.mxu0 %v335
    %397 = vmatpush1.msra.mxu0 %v334
    %398 = vmatprep.subr.mxu0 %v339
    %399 = vmatpush1.msra.mxu0 %v338
    %400 = vmatprep.subr.mxu0 %v343
    %401 = vmatpush1.msra.mxu0 %v342
    %402 = vmatprep.subr.mxu0 %v347
    %403 = vmatpush1.msra.mxu0 %v346
    %404 = vmatprep.subr.mxu0 0.0
    %405 = vmatpush1.msra.mxu0 0.0
    %406 = vmatprep.subr.mxu0 0.0
    %407 = vmatpush1.msra.mxu0 0.0
    %408 = vmatprep.subr.mxu0 0.0
    %409 = vmatpush1.msra.mxu0 0.0
    %410 = vmatprep.subr.mxu0 0.0
    %411 = vmatpush1.msra.mxu0 0.0
    %412 = vmatprep.subr.mxu0 0.0
    %413 = vmatpush1.msra.mxu0 0.0
    %414 = vmatprep.subr.mxu0 0.0
    %415 = vmatpush1.msra.mxu0 0.0
    %416 = vmatprep.subr.mxu0 0.0
    %417 = vmatpush1.msra.mxu0 0.0
    %418 = vmatprep.subr.mxu0 0.0
    %419 = vmatpush1.msra.mxu0 0.0
    %420 = vmatprep.subr.mxu0 0.0
    %421 = vmatpush1.msra.mxu0 0.0
    %422 = vmatprep.subr.mxu0 0.0
    %423 = vmatpush1.msra.mxu0 0.0
    %424 = vmatprep.subr.mxu0 0.0
    %425 = vmatpush1.msra.mxu0 0.0
    %426 = vmatprep.subr.mxu0 0.0
    %427 = vmatpush1.msra.mxu0 0.0
    %428 = vmatprep.subr.mxu0 0.0
    %429 = vmatpush1.msra.mxu0 0.0
    %430 = vmatprep.subr.mxu0 0.0
    %431 = vmatpush1.msra.mxu0 0.0
    %432 = vmatprep.subr.mxu0 0.0
    %433 = vmatpush1.msra.mxu0 0.0
    %434 = vmatprep.subr.mxu0 0.0
    %435 = vmatpush1.msra.mxu0 0.0
    %436 = vmatprep.mubr.f32.mxu0 0.0
    %437 = vmatmul.mubr.f32.gmra.mrb[0].mxu0 %v284
    %v438 = vpop.f32.mrb[0].mxu0
    %v439 = vadd.f32 %v355, %v438
    %v440 = vpop.f32.mrb[0].mxu0
    %v441 = vadd.f32 %v359, %v440
    %442 = vdwg.mxu0
    %443 = vmatprep.subr.mxu0 %v289
    %444 = vmatpush1.msra.mxu0 %v288
    %445 = vmatprep.subr.mxu0 %v293
    %446 = vmatpush1.msra.mxu0 %v292
    %447 = vmatprep.subr.mxu0 %v297
    %448 = vmatpush1.msra.mxu0 %v296
    %449 = vmatprep.subr.mxu0 %v301
    %450 = vmatpush1.msra.mxu0 %v300
    %451 = vmatprep.subr.mxu0 %v305
    %452 = vmatpush1.msra.mxu0 %v304
    %453 = vmatprep.subr.mxu0 %v309
    %454 = vmatpush1.msra.mxu0 %v308
    %455 = vmatprep.subr.mxu0 %v313
    %456 = vmatpush1.msra.mxu0 %v312
    %457 = vmatprep.subr.mxu0 %v317
    %458 = vmatpush1.msra.mxu0 %v316
    %459 = vmatprep.subr.mxu0 %v321
    %460 = vmatpush1.msra.mxu0 %v320
    %461 = vmatprep.subr.mxu0 %v325
    %462 = vmatpush1.msra.mxu0 %v324
    %463 = vmatprep.subr.mxu0 %v329
    %464 = vmatpush1.msra.mxu0 %v328
    %465 = vmatprep.subr.mxu0 %v333
    %466 = vmatpush1.msra.mxu0 %v332
    %467 = vmatprep.subr.mxu0 %v337
    %468 = vmatpush1.msra.mxu0 %v336
    %469 = vmatprep.subr.mxu0 %v341
    %470 = vmatpush1.msra.mxu0 %v340
    %471 = vmatprep.subr.mxu0 %v345
    %472 = vmatpush1.msra.mxu0 %v344
    %473 = vmatprep.subr.mxu0 %v349
    %474 = vmatpush1.msra.mxu0 %v348
    %475 = vmatprep.subr.mxu0 0.0
    %476 = vmatpush1.msra.mxu0 0.0
    %477 = vmatprep.subr.mxu0 0.0
    %478 = vmatpush1.msra.mxu0 0.0
    %479 = vmatprep.subr.mxu0 0.0
    %480 = vmatpush1.msra.mxu0 0.0
    %481 = vmatprep.subr.mxu0 0.0
    %482 = vmatpush1.msra.mxu0 0.0
    %483 = vmatprep.subr.mxu0 0.0
    %484 = vmatpush1.msra.mxu0 0.0
    %485 = vmatprep.subr.mxu0 0.0
    %486 = vmatpush1.msra.mxu0 0.0
    %487 = vmatprep.subr.mxu0 0.0
    %488 = vmatpush1.msra.mxu0 0.0
    %489 = vmatprep.subr.mxu0 0.0
    %490 = vmatpush1.msra.mxu0 0.0
    %491 = vmatprep.subr.mxu0 0.0
    %492 = vmatpush1.msra.mxu0 0.0
    %493 = vmatprep.subr.mxu0 0.0
    %494 = vmatpush1.msra.mxu0 0.0
    %495 = vmatprep.subr.mxu0 0.0
    %496 = vmatpush1.msra.mxu0 0.0
    %497 = vmatprep.subr.mxu0 0.0
    %498 = vmatpush1.msra.mxu0 0.0
    %499 = vmatprep.subr.mxu0 0.0
    %500 = vmatpush1.msra.mxu0 0.0
    %501 = vmatprep.subr.mxu0 0.0
    %502 = vmatpush1.msra.mxu0 0.0
    %503 = vmatprep.subr.mxu0 0.0
    %504 = vmatpush1.msra.mxu0 0.0
    %505 = vmatprep.subr.mxu0 0.0
    %506 = vmatpush1.msra.mxu0 0.0
    %507 = vmatprep.mubr.f32.mxu0 0.0
    %508 = vmatmul.mubr.f32.gmra.mrb[0].mxu0 %v284
    %v509 = vpop.f32.mrb[0].mxu0
    %v510 = vadd.f32 %v363, %v509
    %v511 = vpop.f32.mrb[0].mxu0
    %v512 = vadd.f32 %v367, %v511
    %513 = vdwg.mxu0
    %v514 = vld [vmem:[#allocation2] sm:$0xff]
    %v515 = vld [vmem:[#allocation2 + $0x8] sm:$0xff]
    %v516 = vld [vmem:[#allocation2 + $0x10] sm:$0xff]
    %v517 = vld [vmem:[#allocation2 + $0x18] sm:$0xff]
    %v518 = vld [vmem:[#allocation2 + $0x20] sm:$0xff]
    %v519 = vld [vmem:[#allocation2 + $0x28] sm:$0xff]
    %v520 = vld [vmem:[#allocation2 + $0x30] sm:$0xff]
    %v521 = vld [vmem:[#allocation2 + $0x38] sm:$0xff]
    %v522 = vld [vmem:[#allocation2 + $0x40] sm:$0xff]
    %v523 = vld [vmem:[#allocation2 + $0x48] sm:$0xff]
    %v524 = vld [vmem:[#allocation2 + $0x50] sm:$0xff]
    %v525 = vld [vmem:[#allocation2 + $0x58] sm:$0xff]
    %v526 = vld [vmem:[#allocation2 + $0x60] sm:$0xff]
    %v527 = vld [vmem:[#allocation2 + $0x68] sm:$0xff]
    %v528 = vld [vmem:[#allocation2 + $0x70] sm:$0xff]
    %v529 = vld [vmem:[#allocation2 + $0x78] sm:$0xff]
    %v530 = vld [vmem:[#allocation2 + $0x80] sm:$0xff]
    %v531 = vld [vmem:[#allocation2 + $0x88] sm:$0xff]
    %v532 = vld [vmem:[#allocation2 + $0x90] sm:$0xff]
    %v533 = vld [vmem:[#allocation2 + $0x98] sm:$0xff]
    %v534 = vld [vmem:[#allocation2 + $0xa0] sm:$0xff]
    %v535 = vld [vmem:[#allocation2 + $0xa8] sm:$0xff]
    %v536 = vld [vmem:[#allocation2 + $0xb0] sm:$0xff]
    %v537 = vld [vmem:[#allocation2 + $0xb8] sm:$0xff]
    %v538 = vld [vmem:[#allocation2 + $0xc0] sm:$0xff]
    %v539 = vld [vmem:[#allocation2 + $0xc8] sm:$0xff]
    %v540 = vld [vmem:[#allocation2 + $0xd0] sm:$0xff]
    %v541 = vld [vmem:[#allocation2 + $0xd8] sm:$0xff]
    %v542 = vld [vmem:[#allocation2 + $0xe0] sm:$0xff]
    %v543 = vld [vmem:[#allocation2 + $0xe8] sm:$0xff]
    %v544 = vld [vmem:[#allocation2 + $0xf0] sm:$0xff]
    %v545 = vld [vmem:[#allocation2 + $0xf8] sm:$0xff]
    %v546 = vld [vmem:[#allocation2 + $0x100] sm:$0xff]
    %v547 = vld [vmem:[#allocation2 + $0x108] sm:$0xff]
    %v548 = vld [vmem:[#allocation2 + $0x110] sm:$0xff]
    %v549 = vld [vmem:[#allocation2 + $0x118] sm:$0xff]
    %v550 = vld [vmem:[#allocation2 + $0x120] sm:$0xff]
    %v551 = vld [vmem:[#allocation2 + $0x128] sm:$0xff]
    %v552 = vld [vmem:[#allocation2 + $0x130] sm:$0xff]
    %v553 = vld [vmem:[#allocation2 + $0x138] sm:$0xff]
    %v554 = vld [vmem:[#allocation2 + $0x140] sm:$0xff]
    %v555 = vld [vmem:[#allocation2 + $0x148] sm:$0xff]
    %v556 = vld [vmem:[#allocation2 + $0x150] sm:$0xff]
    %v557 = vld [vmem:[#allocation2 + $0x158] sm:$0xff]
    %v558 = vld [vmem:[#allocation2 + $0x160] sm:$0xff]
    %v559 = vld [vmem:[#allocation2 + $0x168] sm:$0xff]
    %v560 = vld [vmem:[#allocation2 + $0x170] sm:$0xff]
    %v561 = vld [vmem:[#allocation2 + $0x178] sm:$0xff]
    %v562 = vld [vmem:[#allocation2 + $0x180] sm:$0xff]
    %v563 = vld [vmem:[#allocation2 + $0x188] sm:$0xff]
    %v564 = vld [vmem:[#allocation2 + $0x190] sm:$0xff]
    %v565 = vld [vmem:[#allocation2 + $0x198] sm:$0xff]
    %v566 = vld [vmem:[#allocation2 + $0x1a0] sm:$0xff]
    %v567 = vld [vmem:[#allocation2 + $0x1a8] sm:$0xff]
    %v568 = vld [vmem:[#allocation2 + $0x1b0] sm:$0xff]
    %v569 = vld [vmem:[#allocation2 + $0x1b8] sm:$0xff]
    %v570 = vld [vmem:[#allocation2 + $0x1c0] sm:$0xff]
    %v571 = vld [vmem:[#allocation2 + $0x1c8] sm:$0xff]
    %v572 = vld [vmem:[#allocation2 + $0x1d0] sm:$0xff]
    %v573 = vld [vmem:[#allocation2 + $0x1d8] sm:$0xff]
    %v574 = vld [vmem:[#allocation2 + $0x1e0] sm:$0xff]
    %v575 = vld [vmem:[#allocation2 + $0x1e8] sm:$0xff]
    %v576 = vld [vmem:[#allocation2 + $0x1f0] sm:$0xff]
    %v577 = vld [vmem:[#allocation2 + $0x1f8] sm:$0xff]
    %578 = vmatprep.subr.mxu0 %v515
    %579 = vmatpush1.msra.mxu0 %v514
    %580 = vmatprep.subr.mxu0 %v519
    %581 = vmatpush1.msra.mxu0 %v518
    %582 = vmatprep.subr.mxu0 %v523
    %583 = vmatpush1.msra.mxu0 %v522
    %584 = vmatprep.subr.mxu0 %v527
    %585 = vmatpush1.msra.mxu0 %v526
    %586 = vmatprep.subr.mxu0 %v531
    %587 = vmatpush1.msra.mxu0 %v530
    %588 = vmatprep.subr.mxu0 %v535
    %589 = vmatpush1.msra.mxu0 %v534
    %590 = vmatprep.subr.mxu0 %v539
    %591 = vmatpush1.msra.mxu0 %v538
    %592 = vmatprep.subr.mxu0 %v543
    %593 = vmatpush1.msra.mxu0 %v542
    %594 = vmatprep.subr.mxu0 %v547
    %595 = vmatpush1.msra.mxu0 %v546
    %596 = vmatprep.subr.mxu0 %v551
    %597 = vmatpush1.msra.mxu0 %v550
    %598 = vmatprep.subr.mxu0 %v555
    %599 = vmatpush1.msra.mxu0 %v554
    %600 = vmatprep.subr.mxu0 %v559
    %601 = vmatpush1.msra.mxu0 %v558
    %602 = vmatprep.subr.mxu0 %v563
    %603 = vmatpush1.msra.mxu0 %v562
    %604 = vmatprep.subr.mxu0 %v567
    %605 = vmatpush1.msra.mxu0 %v566
    %606 = vmatprep.subr.mxu0 %v571
    %607 = vmatpush1.msra.mxu0 %v570
    %608 = vmatprep.subr.mxu0 %v575
    %609 = vmatpush1.msra.mxu0 %v574
    %610 = vmatprep.subr.mxu0 0.0
    %611 = vmatpush1.msra.mxu0 0.0
    %612 = vmatprep.subr.mxu0 0.0
    %613 = vmatpush1.msra.mxu0 0.0
    %614 = vmatprep.subr.mxu0 0.0
    %615 = vmatpush1.msra.mxu0 0.0
    %616 = vmatprep.subr.mxu0 0.0
    %617 = vmatpush1.msra.mxu0 0.0
    %618 = vmatprep.subr.mxu0 0.0
    %619 = vmatpush1.msra.mxu0 0.0
    %620 = vmatprep.subr.mxu0 0.0
    %621 = vmatpush1.msra.mxu0 0.0
    %622 = vmatprep.subr.mxu0 0.0
    %623 = vmatpush1.msra.mxu0 0.0
    %624 = vmatprep.subr.mxu0 0.0
    %625 = vmatpush1.msra.mxu0 0.0
    %626 = vmatprep.subr.mxu0 0.0
    %627 = vmatpush1.msra.mxu0 0.0
    %628 = vmatprep.subr.mxu0 0.0
    %629 = vmatpush1.msra.mxu0 0.0
    %630 = vmatprep.subr.mxu0 0.0
    %631 = vmatpush1.msra.mxu0 0.0
    %632 = vmatprep.subr.mxu0 0.0
    %633 = vmatpush1.msra.mxu0 0.0
    %634 = vmatprep.subr.mxu0 0.0
    %635 = vmatpush1.msra.mxu0 0.0
    %636 = vmatprep.subr.mxu0 0.0
    %637 = vmatpush1.msra.mxu0 0.0
    %638 = vmatprep.subr.mxu0 0.0
    %639 = vmatpush1.msra.mxu0 0.0
    %640 = vmatprep.subr.mxu0 0.0
    %641 = vmatpush1.msra.mxu0 0.0
    %642 = vmatprep.mubr.f32.mxu0 0.0
    %643 = vmatmul.mubr.f32.gmra.mrb[0].mxu0 %v282
    %v644 = vpop.f32.mrb[0].mxu0
    %v645 = vadd.f32 0.0, %v644
    %v646 = vpop.f32.mrb[0].mxu0
    %v647 = vadd.f32 0.0, %v646
    %648 = vdwg.mxu0
    %649 = vmatprep.subr.mxu0 %v517
    %650 = vmatpush1.msra.mxu0 %v516
    %651 = vmatprep.subr.mxu0 %v521
    %652 = vmatpush1.msra.mxu0 %v520
    %653 = vmatprep.subr.mxu0 %v525
    %654 = vmatpush1.msra.mxu0 %v524
    %655 = vmatprep.subr.mxu0 %v529
    %656 = vmatpush1.msra.mxu0 %v528
    %657 = vmatprep.subr.mxu0 %v533
    %658 = vmatpush1.msra.mxu0 %v532
    %659 = vmatprep.subr.mxu0 %v537
    %660 = vmatpush1.msra.mxu0 %v536
    %661 = vmatprep.subr.mxu0 %v541
    %662 = vmatpush1.msra.mxu0 %v540
    %663 = vmatprep.subr.mxu0 %v545
    %664 = vmatpush1.msra.mxu0 %v544
    %665 = vmatprep.subr.mxu0 %v549
    %666 = vmatpush1.msra.mxu0 %v548
    %667 = vmatprep.subr.mxu0 %v553
    %668 = vmatpush1.msra.mxu0 %v552
    %669 = vmatprep.subr.mxu0 %v557
    %670 = vmatpush1.msra.mxu0 %v556
    %671 = vmatprep.subr.mxu0 %v561
    %672 = vmatpush1.msra.mxu0 %v560
    %673 = vmatprep.subr.mxu0 %v565
    %674 = vmatpush1.msra.mxu0 %v564
    %675 = vmatprep.subr.mxu0 %v569
    %676 = vmatpush1.msra.mxu0 %v568
    %677 = vmatprep.subr.mxu0 %v573
    %678 = vmatpush1.msra.mxu0 %v572
    %679 = vmatprep.subr.mxu0 %v577
    %680 = vmatpush1.msra.mxu0 %v576
    %681 = vmatprep.subr.mxu0 0.0
    %682 = vmatpush1.msra.mxu0 0.0
    %683 = vmatprep.subr.mxu0 0.0
    %684 = vmatpush1.msra.mxu0 0.0
    %685 = vmatprep.subr.mxu0 0.0
    %686 = vmatpush1.msra.mxu0 0.0
    %687 = vmatprep.subr.mxu0 0.0
    %688 = vmatpush1.msra.mxu0 0.0
    %689 = vmatprep.subr.mxu0 0.0
    %690 = vmatpush1.msra.mxu0 0.0
    %691 = vmatprep.subr.mxu0 0.0
    %692 = vmatpush1.msra.mxu0 0.0
    %693 = vmatprep.subr.mxu0 0.0
    %694 = vmatpush1.msra.mxu0 0.0
    %695 = vmatprep.subr.mxu0 0.0
    %696 = vmatpush1.msra.mxu0 0.0
    %697 = vmatprep.subr.mxu0 0.0
    %698 = vmatpush1.msra.mxu0 0.0
    %699 = vmatprep.subr.mxu0 0.0
    %700 = vmatpush1.msra.mxu0 0.0
    %701 = vmatprep.subr.mxu0 0.0
    %702 = vmatpush1.msra.mxu0 0.0
    %703 = vmatprep.subr.mxu0 0.0
    %704 = vmatpush1.msra.mxu0 0.0
    %705 = vmatprep.subr.mxu0 0.0
    %706 = vmatpush1.msra.mxu0 0.0
    %707 = vmatprep.subr.mxu0 0.0
    %708 = vmatpush1.msra.mxu0 0.0
    %709 = vmatprep.subr.mxu0 0.0
    %710 = vmatpush1.msra.mxu0 0.0
    %711 = vmatprep.subr.mxu0 0.0
    %712 = vmatpush1.msra.mxu0 0.0
    %713 = vmatprep.mubr.f32.mxu0 0.0
    %714 = vmatmul.mubr.f32.gmra.mrb[0].mxu0 %v282
    %v715 = vpop.f32.mrb[0].mxu0
    %v716 = vadd.f32 0.0, %v715
    %v717 = vpop.f32.mrb[0].mxu0
    %v718 = vadd.f32 0.0, %v717
    %719 = vdwg.mxu0
    %v720 = vadd.f32 %v207, %v645
    %v721 = vadd.f32 %v209, %v647
    %v722 = vadd.f32 %v278, %v716
    %v723 = vadd.f32 %v280, %v718
    %v724 = vxor.u32 %v720, 2147483648
    %v725 = vxor.u32 %v721, 2147483648
    %v726 = vxor.u32 %v723, 2147483648
    %v727 = vmul.f32 %v724, 1.442695
    %v728 = vpow.pop %v727
    %v729 = vmul.f32 %v725, 1.442695
    %v730 = vpow.pop %v729
    %v731 = vmul.f32 %v726, 1.442695
    %v732 = vpow.pop %v731
    %v733 = vadd.f32 %v728, 1.0
    %v734 = vadd.f32 %v730, 1.0
    %v735 = vadd.f32 %v732, 1.0
    %v736 = vrcp.pop %v733
    %v737 = vmul.f32 1.0, %v736
    %v738 = vrcp.pop %v734
    %v739 = vmul.f32 1.0, %v738
    %v740 = vrcp.pop %v735
    %v741 = vmul.f32 1.0, %v740
    %v742 = vtanh.pop %v722
    %v743 = vmul.f32 %v739, %v283
    %v744 = vmul.f32 %v737, %v742
    %v745 = vadd.f32 %v743, %v744
    %v746 = vtanh.pop %v745
    %v747 = vmul.f32 %v741, %v746
    %v748 = vld [vmem:[#allocation5] sm:$0xff]
    %v749 = vld [vmem:[#allocation5 + $0x8] sm:$0xff]
    %v750 = vld [vmem:[#allocation5 + $0x10] sm:$0xff]
    %v751 = vld [vmem:[#allocation5 + $0x18] sm:$0xff]
    %v752 = vld [vmem:[#allocation5 + $0x20] sm:$0xff]
    %v753 = vld [vmem:[#allocation5 + $0x28] sm:$0xff]
    %v754 = vld [vmem:[#allocation5 + $0x30] sm:$0xff]
    %v755 = vld [vmem:[#allocation5 + $0x38] sm:$0xff]
    %v756 = vld [vmem:[#allocation5 + $0x40] sm:$0xff]
    %v757 = vld [vmem:[#allocation5 + $0x48] sm:$0xff]
    %v758 = vld [vmem:[#allocation5 + $0x50] sm:$0xff]
    %v759 = vld [vmem:[#allocation5 + $0x58] sm:$0xff]
    %v760 = vld [vmem:[#allocation5 + $0x60] sm:$0xff]
    %v761 = vld [vmem:[#allocation5 + $0x68] sm:$0xff]
    %v762 = vld [vmem:[#allocation5 + $0x70] sm:$0xff]
    %v763 = vld [vmem:[#allocation5 + $0x78] sm:$0xff]
    %v764 = vld [vmem:[#allocation5 + $0x80] sm:$0xff]
    %v765 = vld [vmem:[#allocation5 + $0x88] sm:$0xff]
    %v766 = vld [vmem:[#allocation5 + $0x90] sm:$0xff]
    %v767 = vld [vmem:[#allocation5 + $0x98] sm:$0xff]
    %v768 = vld [vmem:[#allocation5 + $0xa0] sm:$0xff]
    %v769 = vld [vmem:[#allocation5 + $0xa8] sm:$0xff]
    %v770 = vld [vmem:[#allocation5 + $0xb0] sm:$0xff]
    %v771 = vld [vmem:[#allocation5 + $0xb8] sm:$0xff]
    %v772 = vld [vmem:[#allocation5 + $0xc0] sm:$0xff]
    %v773 = vld [vmem:[#allocation5 + $0xc8] sm:$0xff]
    %v774 = vld [vmem:[#allocation5 + $0xd0] sm:$0xff]
    %v775 = vld [vmem:[#allocation5 + $0xd8] sm:$0xff]
    %v776 = vld [vmem:[#allocation5 + $0xe0] sm:$0xff]
    %v777 = vld [vmem:[#allocation5 + $0xe8] sm:$0xff]
    %v778 = vld [vmem:[#allocation5 + $0xf0] sm:$0xff]
    %v779 = vld [vmem:[#allocation5 + $0xf8] sm:$0xff]
    %v780 = vld [vmem:[#allocation5 + $0x100] sm:$0xff]
    %v781 = vld [vmem:[#allocation5 + $0x108] sm:$0xff]
    %v782 = vld [vmem:[#allocation5 + $0x110] sm:$0xff]
    %v783 = vld [vmem:[#allocation5 + $0x118] sm:$0xff]
    %v784 = vld [vmem:[#allocation5 + $0x120] sm:$0xff]
    %v785 = vld [vmem:[#allocation5 + $0x128] sm:$0xff]
    %v786 = vld [vmem:[#allocation5 + $0x130] sm:$0xff]
    %v787 = vld [vmem:[#allocation5 + $0x138] sm:$0xff]
    %v788 = vld [vmem:[#allocation5 + $0x140] sm:$0xff]
    %v789 = vld [vmem:[#allocation5 + $0x148] sm:$0xff]
    %v790 = vld [vmem:[#allocation5 + $0x150] sm:$0xff]
    %v791 = vld [vmem:[#allocation5 + $0x158] sm:$0xff]
    %v792 = vld [vmem:[#allocation5 + $0x160] sm:$0xff]
    %v793 = vld [vmem:[#allocation5 + $0x168] sm:$0xff]
    %v794 = vld [vmem:[#allocation5 + $0x170] sm:$0xff]
    %v795 = vld [vmem:[#allocation5 + $0x178] sm:$0xff]
    %v796 = vld [vmem:[#allocation5 + $0x180] sm:$0xff]
    %v797 = vld [vmem:[#allocation5 + $0x188] sm:$0xff]
    %v798 = vld [vmem:[#allocation5 + $0x190] sm:$0xff]
    %v799 = vld [vmem:[#allocation5 + $0x198] sm:$0xff]
    %v800 = vld [vmem:[#allocation5 + $0x1a0] sm:$0xff]
    %v801 = vld [vmem:[#allocation5 + $0x1a8] sm:$0xff]
    %v802 = vld [vmem:[#allocation5 + $0x1b0] sm:$0xff]
    %v803 = vld [vmem:[#allocation5 + $0x1b8] sm:$0xff]
    %v804 = vld [vmem:[#allocation5 + $0x1c0] sm:$0xff]
    %v805 = vld [vmem:[#allocation5 + $0x1c8] sm:$0xff]
    %v806 = vld [vmem:[#allocation5 + $0x1d0] sm:$0xff]
    %v807 = vld [vmem:[#allocation5 + $0x1d8] sm:$0xff]
    %v808 = vld [vmem:[#allocation5 + $0x1e0] sm:$0xff]
    %v809 = vld [vmem:[#allocation5 + $0x1e8] sm:$0xff]
    %v810 = vld [vmem:[#allocation5 + $0x1f0] sm:$0xff]
    %v811 = vld [vmem:[#allocation5 + $0x1f8] sm:$0xff]
    %812 = vmatprep.subr.mxu0 %v749
    %813 = vmatpush1.msra.mxu0 %v748
    %814 = vmatprep.subr.mxu0 %v753
    %815 = vmatpush1.msra.mxu0 %v752
    %816 = vmatprep.subr.mxu0 %v757
    %817 = vmatpush1.msra.mxu0 %v756
    %818 = vmatprep.subr.mxu0 %v761
    %819 = vmatpush1.msra.mxu0 %v760
    %820 = vmatprep.subr.mxu0 %v765
    %821 = vmatpush1.msra.mxu0 %v764
    %822 = vmatprep.subr.mxu0 %v769
    %823 = vmatpush1.msra.mxu0 %v768
    %824 = vmatprep.subr.mxu0 %v773
    %825 = vmatpush1.msra.mxu0 %v772
    %826 = vmatprep.subr.mxu0 %v777
    %827 = vmatpush1.msra.mxu0 %v776
    %828 = vmatprep.subr.mxu0 %v781
    %829 = vmatpush1.msra.mxu0 %v780
    %830 = vmatprep.subr.mxu0 %v785
    %831 = vmatpush1.msra.mxu0 %v784
    %832 = vmatprep.subr.mxu0 %v789
    %833 = vmatpush1.msra.mxu0 %v788
    %834 = vmatprep.subr.mxu0 %v793
    %835 = vmatpush1.msra.mxu0 %v792
    %836 = vmatprep.subr.mxu0 %v797
    %837 = vmatpush1.msra.mxu0 %v796
    %838 = vmatprep.subr.mxu0 %v801
    %839 = vmatpush1.msra.mxu0 %v800
    %840 = vmatprep.subr.mxu0 %v805
    %841 = vmatpush1.msra.mxu0 %v804
    %842 = vmatprep.subr.mxu0 %v809
    %843 = vmatpush1.msra.mxu0 %v808
    %844 = vmatprep.subr.mxu0 0.0
    %845 = vmatpush1.msra.mxu0 0.0
    %846 = vmatprep.subr.mxu0 0.0
    %847 = vmatpush1.msra.mxu0 0.0
    %848 = vmatprep.subr.mxu0 0.0
    %849 = vmatpush1.msra.mxu0 0.0
    %850 = vmatprep.subr.mxu0 0.0
    %851 = vmatpush1.msra.mxu0 0.0
    %852 = vmatprep.subr.mxu0 0.0
    %853 = vmatpush1.msra.mxu0 0.0
    %854 = vmatprep.subr.mxu0 0.0
    %855 = vmatpush1.msra.mxu0 0.0
    %856 = vmatprep.subr.mxu0 0.0
    %857 = vmatpush1.msra.mxu0 0.0
    %858 = vmatprep.subr.mxu0 0.0
    %859 = vmatpush1.msra.mxu0 0.0
    %860 = vmatprep.subr.mxu0 0.0
    %861 = vmatpush1.msra.mxu0 0.0
    %862 = vmatprep.subr.mxu0 0.0
    %863 = vmatpush1.msra.mxu0 0.0
    %864 = vmatprep.subr.mxu0 0.0
    %865 = vmatpush1.msra.mxu0 0.0
    %866 = vmatprep.subr.mxu0 0.0
    %867 = vmatpush1.msra.mxu0 0.0
    %868 = vmatprep.subr.mxu0 0.0
    %869 = vmatpush1.msra.mxu0 0.0
    %870 = vmatprep.subr.mxu0 0.0
    %871 = vmatpush1.msra.mxu0 0.0
    %872 = vmatprep.subr.mxu0 0.0
    %873 = vmatpush1.msra.mxu0 0.0
    %874 = vmatprep.subr.mxu0 0.0
    %875 = vmatpush1.msra.mxu0 0.0
    %876 = vmatprep.mubr.f32.mxu0 0.0
    %877 = vmatmul.mubr.f32.gmra.mrb[0].mxu0 %v747
    %v878 = vpop.f32.mrb[0].mxu0
    %v879 = vadd.f32 %v439, %v878
    %v880 = vpop.f32.mrb[0].mxu0
    %v881 = vadd.f32 %v441, %v880
    %882 = vdwg.mxu0
    %883 = vmatprep.subr.mxu0 %v751
    %884 = vmatpush1.msra.mxu0 %v750
    %885 = vmatprep.subr.mxu0 %v755
    %886 = vmatpush1.msra.mxu0 %v754
    %887 = vmatprep.subr.mxu0 %v759
    %888 = vmatpush1.msra.mxu0 %v758
    %889 = vmatprep.subr.mxu0 %v763
    %890 = vmatpush1.msra.mxu0 %v762
    %891 = vmatprep.subr.mxu0 %v767
    %892 = vmatpush1.msra.mxu0 %v766
    %893 = vmatprep.subr.mxu0 %v771
    %894 = vmatpush1.msra.mxu0 %v770
    %895 = vmatprep.subr.mxu0 %v775
    %896 = vmatpush1.msra.mxu0 %v774
    %897 = vmatprep.subr.mxu0 %v779
    %898 = vmatpush1.msra.mxu0 %v778
    %899 = vmatprep.subr.mxu0 %v783
    %900 = vmatpush1.msra.mxu0 %v782
    %901 = vmatprep.subr.mxu0 %v787
    %902 = vmatpush1.msra.mxu0 %v786
    %903 = vmatprep.subr.mxu0 %v791
    %904 = vmatpush1.msra.mxu0 %v790
    %905 = vmatprep.subr.mxu0 %v795
    %906 = vmatpush1.msra.mxu0 %v794
    %907 = vmatprep.subr.mxu0 %v799
    %908 = vmatpush1.msra.mxu0 %v798
    %909 = vmatprep.subr.mxu0 %v803
    %910 = vmatpush1.msra.mxu0 %v802
    %911 = vmatprep.subr.mxu0 %v807
    %912 = vmatpush1.msra.mxu0 %v806
    %913 = vmatprep.subr.mxu0 %v811
    %914 = vmatpush1.msra.mxu0 %v810
    %915 = vmatprep.subr.mxu0 0.0
    %916 = vmatpush1.msra.mxu0 0.0
    %917 = vmatprep.subr.mxu0 0.0
    %918 = vmatpush1.msra.mxu0 0.0
    %919 = vmatprep.subr.mxu0 0.0
    %920 = vmatpush1.msra.mxu0 0.0
    %921 = vmatprep.subr.mxu0 0.0
    %922 = vmatpush1.msra.mxu0 0.0
    %923 = vmatprep.subr.mxu0 0.0
    %924 = vmatpush1.msra.mxu0 0.0
    %925 = vmatprep.subr.mxu0 0.0
    %926 = vmatpush1.msra.mxu0 0.0
    %927 = vmatprep.subr.mxu0 0.0
    %928 = vmatpush1.msra.mxu0 0.0
    %929 = vmatprep.subr.mxu0 0.0
    %930 = vmatpush1.msra.mxu0 0.0
    %931 = vmatprep.subr.mxu0 0.0
    %932 = vmatpush1.msra.mxu0 0.0
    %933 = vmatprep.subr.mxu0 0.0
    %934 = vmatpush1.msra.mxu0 0.0
    %935 = vmatprep.subr.mxu0 0.0
    %936 = vmatpush1.msra.mxu0 0.0
    %937 = vmatprep.subr.mxu0 0.0
    %938 = vmatpush1.msra.mxu0 0.0
    %939 = vmatprep.subr.mxu0 0.0
    %940 = vmatpush1.msra.mxu0 0.0
    %941 = vmatprep.subr.mxu0 0.0
    %942 = vmatpush1.msra.mxu0 0.0
    %943 = vmatprep.subr.mxu0 0.0
    %944 = vmatpush1.msra.mxu0 0.0
    %945 = vmatprep.subr.mxu0 0.0
    %946 = vmatpush1.msra.mxu0 0.0
    %947 = vmatprep.mubr.f32.mxu0 0.0
    %948 = vmatmul.mubr.f32.gmra.mrb[0].mxu0 %v747
    %v949 = vpop.f32.mrb[0].mxu0
    %v950 = vadd.f32 %v510, %v949
    %v951 = vpop.f32.mrb[0].mxu0
    %v952 = vadd.f32 %v512, %v951
    %953 = vdwg.mxu0
    %v954 = vxor.u32 %v879, 2147483648
    %v955 = vxor.u32 %v881, 2147483648
    %v956 = vxor.u32 %v952, 2147483648
    %v957 = vmul.f32 %v954, 1.442695
    %v958 = vpow.pop %v957
    %v959 = vmul.f32 %v955, 1.442695
    %v960 = vpow.pop %v959
    %v961 = vmul.f32 %v956, 1.442695
    %v962 = vpow.pop %v961
    %v963 = vadd.f32 %v958, 1.0
    %v964 = vadd.f32 %v960, 1.0
    %v965 = vadd.f32 %v962, 1.0
    %v966 = vrcp.pop %v963
    %v967 = vmul.f32 1.0, %v966
    %v968 = vrcp.pop %v964
    %v969 = vmul.f32 1.0, %v968
    %v970 = vrcp.pop %v965
    %v971 = vmul.f32 1.0, %v970
    %v972 = vtanh.pop %v950
    %v973 = vmul.f32 %v969, %v285
    %v974 = vmul.f32 %v967, %v972
    %v975 = vadd.f32 %v973, %v974
    %v976 = vtanh.pop %v975
    %v977 = vmul.f32 %v971, %v976
    %978 = vmatprep.subr.mxu0 %v287
    %979 = vmatpush1.msra.mxu0 %v286
    %980 = vmatprep.subr.mxu0 %v291
    %981 = vmatpush1.msra.mxu0 %v290
    %982 = vmatprep.subr.mxu0 %v295
    %983 = vmatpush1.msra.mxu0 %v294
    %984 = vmatprep.subr.mxu0 %v299
    %985 = vmatpush1.msra.mxu0 %v298
    %986 = vmatprep.subr.mxu0 %v303
    %987 = vmatpush1.msra.mxu0 %v302
    %988 = vmatprep.subr.mxu0 %v307
    %989 = vmatpush1.msra.mxu0 %v306
    %990 = vmatprep.subr.mxu0 %v311
    %991 = vmatpush1.msra.mxu0 %v310
    %992 = vmatprep.subr.mxu0 %v315
    %993 = vmatpush1.msra.mxu0 %v314
    %994 = vmatprep.subr.mxu0 %v319
    %995 = vmatpush1.msra.mxu0 %v318
    %996 = vmatprep.subr.mxu0 %v323
    %997 = vmatpush1.msra.mxu0 %v322
    %998 = vmatprep.subr.mxu0 %v327
    %999 = vmatpush1.msra.mxu0 %v326
    %1000 = vmatprep.subr.mxu0 %v331
    %1001 = vmatpush1.msra.mxu0 %v330
    %1002 = vmatprep.subr.mxu0 %v335
    %1003 = vmatpush1.msra.mxu0 %v334
    %1004 = vmatprep.subr.mxu0 %v339
    %1005 = vmatpush1.msra.mxu0 %v338
    %1006 = vmatprep.subr.mxu0 %v343
    %1007 = vmatpush1.msra.mxu0 %v342
    %1008 = vmatprep.subr.mxu0 %v347
    %1009 = vmatpush1.msra.mxu0 %v346
    %1010 = vmatprep.subr.mxu0 0.0
    %1011 = vmatpush1.msra.mxu0 0.0
    %1012 = vmatprep.subr.mxu0 0.0
    %1013 = vmatpush1.msra.mxu0 0.0
    %1014 = vmatprep.subr.mxu0 0.0
    %1015 = vmatpush1.msra.mxu0 0.0
    %1016 = vmatprep.subr.mxu0 0.0
    %1017 = vmatpush1.msra.mxu0 0.0
    %1018 = vmatprep.subr.mxu0 0.0
    %1019 = vmatpush1.msra.mxu0 0.0
    %1020 = vmatprep.subr.mxu0 0.0
    %1021 = vmatpush1.msra.mxu0 0.0
    %1022 = vmatprep.subr.mxu0 0.0
    %1023 = vmatpush1.msra.mxu0 0.0
    %1024 = vmatprep.subr.mxu0 0.0
    %1025 = vmatpush1.msra.mxu0 0.0
    %1026 = vmatprep.subr.mxu0 0.0
    %1027 = vmatpush1.msra.mxu0 0.0
    %1028 = vmatprep.subr.mxu0 0.0
    %1029 = vmatpush1.msra.mxu0 0.0
    %1030 = vmatprep.subr.mxu0 0.0
    %1031 = vmatpush1.msra.mxu0 0.0
    %1032 = vmatprep.subr.mxu0 0.0
    %1033 = vmatpush1.msra.mxu0 0.0
    %1034 = vmatprep.subr.mxu0 0.0
    %1035 = vmatpush1.msra.mxu0 0.0
    %1036 = vmatprep.subr.mxu0 0.0
    %1037 = vmatpush1.msra.mxu0 0.0
    %1038 = vmatprep.subr.mxu0 0.0
    %1039 = vmatpush1.msra.mxu0 0.0
    %1040 = vmatprep.subr.mxu0 0.0
    %1041 = vmatpush1.msra.mxu0 0.0
    %1042 = vmatprep.mubr.f32.mxu0 0.0
    %1043 = vmatmul.mubr.f32.gmra.mrb[0].mxu0 %v977
    %v1044 = vpop.f32.mrb[0].mxu0
    %v1045 = vadd.f32 %v355, %v1044
    %v1046 = vpop.f32.mrb[0].mxu0
    %v1047 = vadd.f32 %v359, %v1046
    %1048 = vdwg.mxu0
    %1049 = vmatprep.subr.mxu0 %v289
    %1050 = vmatpush1.msra.mxu0 %v288
    %1051 = vmatprep.subr.mxu0 %v293
    %1052 = vmatpush1.msra.mxu0 %v292
    %1053 = vmatprep.subr.mxu0 %v297
    %1054 = vmatpush1.msra.mxu0 %v296
    %1055 = vmatprep.subr.mxu0 %v301
    %1056 = vmatpush1.msra.mxu0 %v300
    %1057 = vmatprep.subr.mxu0 %v305
    %1058 = vmatpush1.msra.mxu0 %v304
    %1059 = vmatprep.subr.mxu0 %v309
    %1060 = vmatpush1.msra.mxu0 %v308
    %1061 = vmatprep.subr.mxu0 %v313
    %1062 = vmatpush1.msra.mxu0 %v312
    %1063 = vmatprep.subr.mxu0 %v317
    %1064 = vmatpush1.msra.mxu0 %v316
    %1065 = vmatprep.subr.mxu0 %v321
    %1066 = vmatpush1.msra.mxu0 %v320
    %1067 = vmatprep.subr.mxu0 %v325
    %1068 = vmatpush1.msra.mxu0 %v324
    %1069 = vmatprep.subr.mxu0 %v329
    %1070 = vmatpush1.msra.mxu0 %v328
    %1071 = vmatprep.subr.mxu0 %v333
    %1072 = vmatpush1.msra.mxu0 %v332
    %1073 = vmatprep.subr.mxu0 %v337
    %1074 = vmatpush1.msra.mxu0 %v336
    %1075 = vmatprep.subr.mxu0 %v341
    %1076 = vmatpush1.msra.mxu0 %v340
    %1077 = vmatprep.subr.mxu0 %v345
    %1078 = vmatpush1.msra.mxu0 %v344
    %1079 = vmatprep.subr.mxu0 %v349
    %1080 = vmatpush1.msra.mxu0 %v348
    %1081 = vmatprep.subr.mxu0 0.0
    %1082 = vmatpush1.msra.mxu0 0.0
    %1083 = vmatprep.subr.mxu0 0.0
    %1084 = vmatpush1.msra.mxu0 0.0
    %1085 = vmatprep.subr.mxu0 0.0
    %1086 = vmatpush1.msra.mxu0 0.0
    %1087 = vmatprep.subr.mxu0 0.0
    %1088 = vmatpush1.msra.mxu0 0.0
    %1089 = vmatprep.subr.mxu0 0.0
    %1090 = vmatpush1.msra.mxu0 0.0
    %1091 = vmatprep.subr.mxu0 0.0
    %1092 = vmatpush1.msra.mxu0 0.0
    %1093 = vmatprep.subr.mxu0 0.0
    %1094 = vmatpush1.msra.mxu0 0.0
    %1095 = vmatprep.subr.mxu0 0.0
    %1096 = vmatpush1.msra.mxu0 0.0
    %1097 = vmatprep.subr.mxu0 0.0
    %1098 = vmatpush1.msra.mxu0 0.0
    %1099 = vmatprep.subr.mxu0 0.0
    %1100 = vmatpush1.msra.mxu0 0.0
    %1101 = vmatprep.subr.mxu0 0.0
    %1102 = vmatpush1.msra.mxu0 0.0
    %1103 = vmatprep.subr.mxu0 0.0
    %1104 = vmatpush1.msra.mxu0 0.0
    %1105 = vmatprep.subr.mxu0 0.0
    %1106 = vmatpush1.msra.mxu0 0.0
    %1107 = vmatprep.subr.mxu0 0.0
    %1108 = vmatpush1.msra.mxu0 0.0
    %1109 = vmatprep.subr.mxu0 0.0
    %1110 = vmatpush1.msra.mxu0 0.0
    %1111 = vmatprep.subr.mxu0 0.0
    %1112 = vmatpush1.msra.mxu0 0.0
    %1113 = vmatprep.mubr.f32.mxu0 0.0
    %1114 = vmatmul.mubr.f32.gmra.mrb[0].mxu0 %v977
    %v1115 = vpop.f32.mrb[0].mxu0
    %v1116 = vadd.f32 %v363, %v1115
    %v1117 = vpop.f32.mrb[0].mxu0
    %v1118 = vadd.f32 %v367, %v1117
    %1119 = vdwg.mxu0
    %1120 = vmatprep.subr.mxu0 %v515
    %1121 = vmatpush1.msra.mxu0 %v514
    %1122 = vmatprep.subr.mxu0 %v519
    %1123 = vmatpush1.msra.mxu0 %v518
    %1124 = vmatprep.subr.mxu0 %v523
    %1125 = vmatpush1.msra.mxu0 %v522
    %1126 = vmatprep.subr.mxu0 %v527
    %1127 = vmatpush1.msra.mxu0 %v526
    %1128 = vmatprep.subr.mxu0 %v531
    %1129 = vmatpush1.msra.mxu0 %v530
    %1130 = vmatprep.subr.mxu0 %v535
    %1131 = vmatpush1.msra.mxu0 %v534
    %1132 = vmatprep.subr.mxu0 %v539
    %1133 = vmatpush1.msra.mxu0 %v538
    %1134 = vmatprep.subr.mxu0 %v543
    %1135 = vmatpush1.msra.mxu0 %v542
    %1136 = vmatprep.subr.mxu0 %v547
    %1137 = vmatpush1.msra.mxu0 %v546
    %1138 = vmatprep.subr.mxu0 %v551
    %1139 = vmatpush1.msra.mxu0 %v550
    %1140 = vmatprep.subr.mxu0 %v555
    %1141 = vmatpush1.msra.mxu0 %v554
    %1142 = vmatprep.subr.mxu0 %v559
    %1143 = vmatpush1.msra.mxu0 %v558
    %1144 = vmatprep.subr.mxu0 %v563
    %1145 = vmatpush1.msra.mxu0 %v562
    %1146 = vmatprep.subr.mxu0 %v567
    %1147 = vmatpush1.msra.mxu0 %v566
    %1148 = vmatprep.subr.mxu0 %v571
    %1149 = vmatpush1.msra.mxu0 %v570
    %1150 = vmatprep.subr.mxu0 %v575
    %1151 = vmatpush1.msra.mxu0 %v574
    %1152 = vmatprep.subr.mxu0 0.0
    %1153 = vmatpush1.msra.mxu0 0.0
    %1154 = vmatprep.subr.mxu0 0.0
    %1155 = vmatpush1.msra.mxu0 0.0
    %1156 = vmatprep.subr.mxu0 0.0
    %1157 = vmatpush1.msra.mxu0 0.0
    %1158 = vmatprep.subr.mxu0 0.0
    %1159 = vmatpush1.msra.mxu0 0.0
    %1160 = vmatprep.subr.mxu0 0.0
    %1161 = vmatpush1.msra.mxu0 0.0
    %1162 = vmatprep.subr.mxu0 0.0
    %1163 = vmatpush1.msra.mxu0 0.0
    %1164 = vmatprep.subr.mxu0 0.0
    %1165 = vmatpush1.msra.mxu0 0.0
    %1166 = vmatprep.subr.mxu0 0.0
    %1167 = vmatpush1.msra.mxu0 0.0
    %1168 = vmatprep.subr.mxu0 0.0
    %1169 = vmatpush1.msra.mxu0 0.0
    %1170 = vmatprep.subr.mxu0 0.0
    %1171 = vmatpush1.msra.mxu0 0.0
    %1172 = vmatprep.subr.mxu0 0.0
    %1173 = vmatpush1.msra.mxu0 0.0
    %1174 = vmatprep.subr.mxu0 0.0
    %1175 = vmatpush1.msra.mxu0 0.0
    %1176 = vmatprep.subr.mxu0 0.0
    %1177 = vmatpush1.msra.mxu0 0.0
    %1178 = vmatprep.subr.mxu0 0.0
    %1179 = vmatpush1.msra.mxu0 0.0
    %1180 = vmatprep.subr.mxu0 0.0
    %1181 = vmatpush1.msra.mxu0 0.0
    %1182 = vmatprep.subr.mxu0 0.0
    %1183 = vmatpush1.msra.mxu0 0.0
    %1184 = vmatprep.mubr.f32.mxu0 0.0
    %1185 = vmatmul.mubr.f32.gmra.mrb[0].mxu0 %v747
    %v1186 = vpop.f32.mrb[0].mxu0
    %v1187 = vadd.f32 0.0, %v1186
    %v1188 = vpop.f32.mrb[0].mxu0
    %v1189 = vadd.f32 0.0, %v1188
    %1190 = vdwg.mxu0
    %1191 = vmatprep.subr.mxu0 %v517
    %1192 = vmatpush1.msra.mxu0 %v516
    %1193 = vmatprep.subr.mxu0 %v521
    %1194 = vmatpush1.msra.mxu0 %v520
    %1195 = vmatprep.subr.mxu0 %v525
    %1196 = vmatpush1.msra.mxu0 %v524
    %1197 = vmatprep.subr.mxu0 %v529
    %1198 = vmatpush1.msra.mxu0 %v528
    %1199 = vmatprep.subr.mxu0 %v533
    %1200 = vmatpush1.msra.mxu0 %v532
    %1201 = vmatprep.subr.mxu0 %v537
    %1202 = vmatpush1.msra.mxu0 %v536
    %1203 = vmatprep.subr.mxu0 %v541
    %1204 = vmatpush1.msra.mxu0 %v540
    %1205 = vmatprep.subr.mxu0 %v545
    %1206 = vmatpush1.msra.mxu0 %v544
    %1207 = vmatprep.subr.mxu0 %v549
    %1208 = vmatpush1.msra.mxu0 %v548
    %1209 = vmatprep.subr.mxu0 %v553
    %1210 = vmatpush1.msra.mxu0 %v552
    %1211 = vmatprep.subr.mxu0 %v557
    %1212 = vmatpush1.msra.mxu0 %v556
    %1213 = vmatprep.subr.mxu0 %v561
    %1214 = vmatpush1.msra.mxu0 %v560
    %1215 = vmatprep.subr.mxu0 %v565
    %1216 = vmatpush1.msra.mxu0 %v564
    %1217 = vmatprep.subr.mxu0 %v569
    %1218 = vmatpush1.msra.mxu0 %v568
    %1219 = vmatprep.subr.mxu0 %v573
    %1220 = vmatpush1.msra.mxu0 %v572
    %1221 = vmatprep.subr.mxu0 %v577
    %1222 = vmatpush1.msra.mxu0 %v576
    %1223 = vmatprep.subr.mxu0 0.0
    %1224 = vmatpush1.msra.mxu0 0.0
    %1225 = vmatprep.subr.mxu0 0.0
    %1226 = vmatpush1.msra.mxu0 0.0
    %1227 = vmatprep.subr.mxu0 0.0
    %1228 = vmatpush1.msra.mxu0 0.0
    %1229 = vmatprep.subr.mxu0 0.0
    %1230 = vmatpush1.msra.mxu0 0.0
    %1231 = vmatprep.subr.mxu0 0.0
    %1232 = vmatpush1.msra.mxu0 0.0
    %1233 = vmatprep.subr.mxu0 0.0
    %1234 = vmatpush1.msra.mxu0 0.0
    %1235 = vmatprep.subr.mxu0 0.0
    %1236 = vmatpush1.msra.mxu0 0.0
    %1237 = vmatprep.subr.mxu0 0.0
    %1238 = vmatpush1.msra.mxu0 0.0
    %1239 = vmatprep.subr.mxu0 0.0
    %1240 = vmatpush1.msra.mxu0 0.0
    %1241 = vmatprep.subr.mxu0 0.0
    %1242 = vmatpush1.msra.mxu0 0.0
    %1243 = vmatprep.subr.mxu0 0.0
    %1244 = vmatpush1.msra.mxu0 0.0
    %1245 = vmatprep.subr.mxu0 0.0
    %1246 = vmatpush1.msra.mxu0 0.0
    %1247 = vmatprep.subr.mxu0 0.0
    %1248 = vmatpush1.msra.mxu0 0.0
    %1249 = vmatprep.subr.mxu0 0.0
    %1250 = vmatpush1.msra.mxu0 0.0
    %1251 = vmatprep.subr.mxu0 0.0
    %1252 = vmatpush1.msra.mxu0 0.0
    %1253 = vmatprep.subr.mxu0 0.0
    %1254 = vmatpush1.msra.mxu0 0.0
    %1255 = vmatprep.mubr.f32.mxu0 0.0
    %1256 = vmatmul.mubr.f32.gmra.mrb[0].mxu0 %v747
    %v1257 = vpop.f32.mrb[0].mxu0
    %v1258 = vadd.f32 0.0, %v1257
    %v1259 = vpop.f32.mrb[0].mxu0
    %v1260 = vadd.f32 0.0, %v1259
    %1261 = vdwg.mxu0
    %v1266 = vrot.slane %v1187, 7
    %v1267 = vrot.slane %v1189, 7
    %v1268 = vrot.slane %v1258, 7
    %v1269 = vrot.slane %v1260, 7
    %v1274 = vadd.f32 %v207, %v1266
    %v1275 = vadd.f32 %v209, %v1267
    %v1276 = vadd.f32 %v278, %v1268
    %v1277 = vadd.f32 %v280, %v1269
    %v1278 = vxor.u32 %v1274, 2147483648
    %v1279 = vxor.u32 %v1275, 2147483648
    %v1280 = vxor.u32 %v1277, 2147483648
    %v1281 = vmul.f32 %v1278, 1.442695
    %v1282 = vpow.pop %v1281
    %v1283 = vmul.f32 %v1279, 1.442695
    %v1284 = vpow.pop %v1283
    %v1285 = vmul.f32 %v1280, 1.442695
    %v1286 = vpow.pop %v1285
    %v1287 = vadd.f32 %v1282, 1.0
    %v1288 = vadd.f32 %v1284, 1.0
    %v1289 = vadd.f32 %v1286, 1.0
    %v1290 = vrcp.pop %v1287
    %v1291 = vmul.f32 1.0, %v1290
    %v1292 = vrcp.pop %v1288
    %v1293 = vmul.f32 1.0, %v1292
    %v1294 = vrcp.pop %v1289
    %v1295 = vmul.f32 1.0, %v1294
    %v1296 = vtanh.pop %v1276
    %v1298 = vrot.slane %v745, 7
    %v1300 = vmul.f32 %v1293, %v1298
    %v1301 = vmul.f32 %v1291, %v1296
    %v1302 = vadd.f32 %v1300, %v1301
    %v1303 = vtanh.pop %v1302
    %v1304 = vmul.f32 %v1295, %v1303
    %v1306 = vrot.slane %v1304, 1
    %1308 = vmatprep.subr.mxu0 %v749
    %1309 = vmatpush1.msra.mxu0 %v748
    %1310 = vmatprep.subr.mxu0 %v753
    %1311 = vmatpush1.msra.mxu0 %v752
    %1312 = vmatprep.subr.mxu0 %v757
    %1313 = vmatpush1.msra.mxu0 %v756
    %1314 = vmatprep.subr.mxu0 %v761
    %1315 = vmatpush1.msra.mxu0 %v760
    %1316 = vmatprep.subr.mxu0 %v765
    %1317 = vmatpush1.msra.mxu0 %v764
    %1318 = vmatprep.subr.mxu0 %v769
    %1319 = vmatpush1.msra.mxu0 %v768
    %1320 = vmatprep.subr.mxu0 %v773
    %1321 = vmatpush1.msra.mxu0 %v772
    %1322 = vmatprep.subr.mxu0 %v777
    %1323 = vmatpush1.msra.mxu0 %v776
    %1324 = vmatprep.subr.mxu0 %v781
    %1325 = vmatpush1.msra.mxu0 %v780
    %1326 = vmatprep.subr.mxu0 %v785
    %1327 = vmatpush1.msra.mxu0 %v784
    %1328 = vmatprep.subr.mxu0 %v789
    %1329 = vmatpush1.msra.mxu0 %v788
    %1330 = vmatprep.subr.mxu0 %v793
    %1331 = vmatpush1.msra.mxu0 %v792
    %1332 = vmatprep.subr.mxu0 %v797
    %1333 = vmatpush1.msra.mxu0 %v796
    %1334 = vmatprep.subr.mxu0 %v801
    %1335 = vmatpush1.msra.mxu0 %v800
    %1336 = vmatprep.subr.mxu0 %v805
    %1337 = vmatpush1.msra.mxu0 %v804
    %1338 = vmatprep.subr.mxu0 %v809
    %1339 = vmatpush1.msra.mxu0 %v808
    %1340 = vmatprep.subr.mxu0 0.0
    %1341 = vmatpush1.msra.mxu0 0.0
    %1342 = vmatprep.subr.mxu0 0.0
    %1343 = vmatpush1.msra.mxu0 0.0
    %1344 = vmatprep.subr.mxu0 0.0
    %1345 = vmatpush1.msra.mxu0 0.0
    %1346 = vmatprep.subr.mxu0 0.0
    %1347 = vmatpush1.msra.mxu0 0.0
    %1348 = vmatprep.subr.mxu0 0.0
    %1349 = vmatpush1.msra.mxu0 0.0
    %1350 = vmatprep.subr.mxu0 0.0
    %1351 = vmatpush1.msra.mxu0 0.0
    %1352 = vmatprep.subr.mxu0 0.0
    %1353 = vmatpush1.msra.mxu0 0.0
    %1354 = vmatprep.subr.mxu0 0.0
    %1355 = vmatpush1.msra.mxu0 0.0
    %1356 = vmatprep.subr.mxu0 0.0
    %1357 = vmatpush1.msra.mxu0 0.0
    %1358 = vmatprep.subr.mxu0 0.0
    %1359 = vmatpush1.msra.mxu0 0.0
    %1360 = vmatprep.subr.mxu0 0.0
    %1361 = vmatpush1.msra.mxu0 0.0
    %1362 = vmatprep.subr.mxu0 0.0
    %1363 = vmatpush1.msra.mxu0 0.0
    %1364 = vmatprep.subr.mxu0 0.0
    %1365 = vmatpush1.msra.mxu0 0.0
    %1366 = vmatprep.subr.mxu0 0.0
    %1367 = vmatpush1.msra.mxu0 0.0
    %1368 = vmatprep.subr.mxu0 0.0
    %1369 = vmatpush1.msra.mxu0 0.0
    %1370 = vmatprep.subr.mxu0 0.0
    %1371 = vmatpush1.msra.mxu0 0.0
    %1372 = vmatprep.mubr.f32.mxu0 0.0
    %1373 = vmatmul.mubr.f32.gmra.mrb[0].mxu0 %v1306
    %v1374 = vpop.f32.mrb[0].mxu0
    %v1375 = vadd.f32 %v1045, %v1374
    %v1376 = vpop.f32.mrb[0].mxu0
    %v1377 = vadd.f32 %v1047, %v1376
    %1378 = vdwg.mxu0
    %1379 = vmatprep.subr.mxu0 %v751
    %1380 = vmatpush1.msra.mxu0 %v750
    %1381 = vmatprep.subr.mxu0 %v755
    %1382 = vmatpush1.msra.mxu0 %v754
    %1383 = vmatprep.subr.mxu0 %v759
    %1384 = vmatpush1.msra.mxu0 %v758
    %1385 = vmatprep.subr.mxu0 %v763
    %1386 = vmatpush1.msra.mxu0 %v762
    %1387 = vmatprep.subr.mxu0 %v767
    %1388 = vmatpush1.msra.mxu0 %v766
    %1389 = vmatprep.subr.mxu0 %v771
    %1390 = vmatpush1.msra.mxu0 %v770
    %1391 = vmatprep.subr.mxu0 %v775
    %1392 = vmatpush1.msra.mxu0 %v774
    %1393 = vmatprep.subr.mxu0 %v779
    %1394 = vmatpush1.msra.mxu0 %v778
    %1395 = vmatprep.subr.mxu0 %v783
    %1396 = vmatpush1.msra.mxu0 %v782
    %1397 = vmatprep.subr.mxu0 %v787
    %1398 = vmatpush1.msra.mxu0 %v786
    %1399 = vmatprep.subr.mxu0 %v791
    %1400 = vmatpush1.msra.mxu0 %v790
    %1401 = vmatprep.subr.mxu0 %v795
    %1402 = vmatpush1.msra.mxu0 %v794
    %1403 = vmatprep.subr.mxu0 %v799
    %1404 = vmatpush1.msra.mxu0 %v798
    %1405 = vmatprep.subr.mxu0 %v803
    %1406 = vmatpush1.msra.mxu0 %v802
    %1407 = vmatprep.subr.mxu0 %v807
    %1408 = vmatpush1.msra.mxu0 %v806
    %1409 = vmatprep.subr.mxu0 %v811
    %1410 = vmatpush1.msra.mxu0 %v810
    %1411 = vmatprep.subr.mxu0 0.0
    %1412 = vmatpush1.msra.mxu0 0.0
    %1413 = vmatprep.subr.mxu0 0.0
    %1414 = vmatpush1.msra.mxu0 0.0
    %1415 = vmatprep.subr.mxu0 0.0
    %1416 = vmatpush1.msra.mxu0 0.0
    %1417 = vmatprep.subr.mxu0 0.0
    %1418 = vmatpush1.msra.mxu0 0.0
    %1419 = vmatprep.subr.mxu0 0.0
    %1420 = vmatpush1.msra.mxu0 0.0
    %1421 = vmatprep.subr.mxu0 0.0
    %1422 = vmatpush1.msra.mxu0 0.0
    %1423 = vmatprep.subr.mxu0 0.0
    %1424 = vmatpush1.msra.mxu0 0.0
    %1425 = vmatprep.subr.mxu0 0.0
    %1426 = vmatpush1.msra.mxu0 0.0
    %1427 = vmatprep.subr.mxu0 0.0
    %1428 = vmatpush1.msra.mxu0 0.0
    %1429 = vmatprep.subr.mxu0 0.0
    %1430 = vmatpush1.msra.mxu0 0.0
    %1431 = vmatprep.subr.mxu0 0.0
    %1432 = vmatpush1.msra.mxu0 0.0
    %1433 = vmatprep.subr.mxu0 0.0
    %1434 = vmatpush1.msra.mxu0 0.0
    %1435 = vmatprep.subr.mxu0 0.0
    %1436 = vmatpush1.msra.mxu0 0.0
    %1437 = vmatprep.subr.mxu0 0.0
    %1438 = vmatpush1.msra.mxu0 0.0
    %1439 = vmatprep.subr.mxu0 0.0
    %1440 = vmatpush1.msra.mxu0 0.0
    %1441 = vmatprep.subr.mxu0 0.0
    %1442 = vmatpush1.msra.mxu0 0.0
    %1443 = vmatprep.mubr.f32.mxu0 0.0
    %1444 = vmatmul.mubr.f32.gmra.mrb[0].mxu0 %v1306
    %v1445 = vpop.f32.mrb[0].mxu0
    %v1446 = vadd.f32 %v1116, %v1445
    %v1447 = vpop.f32.mrb[0].mxu0
    %v1448 = vadd.f32 %v1118, %v1447
    %1449 = vdwg.mxu0
    %v1450 = vxor.u32 %v1375, 2147483648
    %v1451 = vxor.u32 %v1377, 2147483648
    %v1452 = vxor.u32 %v1448, 2147483648
    %v1453 = vmul.f32 %v1450, 1.442695
    %v1454 = vpow.pop %v1453
    %v1455 = vmul.f32 %v1451, 1.442695
    %v1456 = vpow.pop %v1455
    %v1457 = vmul.f32 %v1452, 1.442695
    %v1458 = vpow.pop %v1457
    %v1459 = vadd.f32 %v1454, 1.0
    %v1460 = vadd.f32 %v1456, 1.0
    %v1461 = vadd.f32 %v1458, 1.0
    %v1462 = vrcp.pop %v1459
    %v1463 = vmul.f32 1.0, %v1462
    %v1464 = vrcp.pop %v1460
    %v1465 = vmul.f32 1.0, %v1464
    %v1466 = vrcp.pop %v1461
    %v1467 = vmul.f32 1.0, %v1466
    %v1468 = vtanh.pop %v1446
    %v1469 = vmul.f32 %v1465, %v975
    %v1470 = vmul.f32 %v1463, %v1468
    %v1471 = vadd.f32 %v1469, %v1470
    %v1472 = vtanh.pop %v1471
    %v1473 = vmul.f32 %v1467, %v1472
    %1474 = vmatprep.subr.mxu0 %v287
    %1475 = vmatpush1.msra.mxu0 %v286
    %1476 = vmatprep.subr.mxu0 %v291
    %1477 = vmatpush1.msra.mxu0 %v290
    %1478 = vmatprep.subr.mxu0 %v295
    %1479 = vmatpush1.msra.mxu0 %v294
    %1480 = vmatprep.subr.mxu0 %v299
    %1481 = vmatpush1.msra.mxu0 %v298
    %1482 = vmatprep.subr.mxu0 %v303
    %1483 = vmatpush1.msra.mxu0 %v302
    %1484 = vmatprep.subr.mxu0 %v307
    %1485 = vmatpush1.msra.mxu0 %v306
    %1486 = vmatprep.subr.mxu0 %v311
    %1487 = vmatpush1.msra.mxu0 %v310
    %1488 = vmatprep.subr.mxu0 %v315
    %1489 = vmatpush1.msra.mxu0 %v314
    %1490 = vmatprep.subr.mxu0 %v319
    %1491 = vmatpush1.msra.mxu0 %v318
    %1492 = vmatprep.subr.mxu0 %v323
    %1493 = vmatpush1.msra.mxu0 %v322
    %1494 = vmatprep.subr.mxu0 %v327
    %1495 = vmatpush1.msra.mxu0 %v326
    %1496 = vmatprep.subr.mxu0 %v331
    %1497 = vmatpush1.msra.mxu0 %v330
    %1498 = vmatprep.subr.mxu0 %v335
    %1499 = vmatpush1.msra.mxu0 %v334
    %1500 = vmatprep.subr.mxu0 %v339
    %1501 = vmatpush1.msra.mxu0 %v338
    %1502 = vmatprep.subr.mxu0 %v343
    %1503 = vmatpush1.msra.mxu0 %v342
    %1504 = vmatprep.subr.mxu0 %v347
    %1505 = vmatpush1.msra.mxu0 %v346
    %1506 = vmatprep.subr.mxu0 0.0
    %1507 = vmatpush1.msra.mxu0 0.0
    %1508 = vmatprep.subr.mxu0 0.0
    %1509 = vmatpush1.msra.mxu0 0.0
    %1510 = vmatprep.subr.mxu0 0.0
    %1511 = vmatpush1.msra.mxu0 0.0
    %1512 = vmatprep.subr.mxu0 0.0
    %1513 = vmatpush1.msra.mxu0 0.0
    %1514 = vmatprep.subr.mxu0 0.0
    %1515 = vmatpush1.msra.mxu0 0.0
    %1516 = vmatprep.subr.mxu0 0.0
    %1517 = vmatpush1.msra.mxu0 0.0
    %1518 = vmatprep.subr.mxu0 0.0
    %1519 = vmatpush1.msra.mxu0 0.0
    %1520 = vmatprep.subr.mxu0 0.0
    %1521 = vmatpush1.msra.mxu0 0.0
    %1522 = vmatprep.subr.mxu0 0.0
    %1523 = vmatpush1.msra.mxu0 0.0
    %1524 = vmatprep.subr.mxu0 0.0
    %1525 = vmatpush1.msra.mxu0 0.0
    %1526 = vmatprep.subr.mxu0 0.0
    %1527 = vmatpush1.msra.mxu0 0.0
    %1528 = vmatprep.subr.mxu0 0.0
    %1529 = vmatpush1.msra.mxu0 0.0
    %1530 = vmatprep.subr.mxu0 0.0
    %1531 = vmatpush1.msra.mxu0 0.0
    %1532 = vmatprep.subr.mxu0 0.0
    %1533 = vmatpush1.msra.mxu0 0.0
    %1534 = vmatprep.subr.mxu0 0.0
    %1535 = vmatpush1.msra.mxu0 0.0
    %1536 = vmatprep.subr.mxu0 0.0
    %1537 = vmatpush1.msra.mxu0 0.0
    %1538 = vmatprep.mubr.f32.mxu0 0.0
    %1539 = vmatmul.mubr.f32.gmra.mrb[0].mxu0 %v1473
    %v1540 = vpop.f32.mrb[0].mxu0
    %v1541 = vadd.f32 %v355, %v1540
    %v1542 = vpop.f32.mrb[0].mxu0
    %v1543 = vadd.f32 %v359, %v1542
    %1544 = vdwg.mxu0
    %1545 = vmatprep.subr.mxu0 %v289
    %1546 = vmatpush1.msra.mxu0 %v288
    %1547 = vmatprep.subr.mxu0 %v293
    %1548 = vmatpush1.msra.mxu0 %v292
    %1549 = vmatprep.subr.mxu0 %v297
    %1550 = vmatpush1.msra.mxu0 %v296
    %1551 = vmatprep.subr.mxu0 %v301
    %1552 = vmatpush1.msra.mxu0 %v300
    %1553 = vmatprep.subr.mxu0 %v305
    %1554 = vmatpush1.msra.mxu0 %v304
    %1555 = vmatprep.subr.mxu0 %v309
    %1556 = vmatpush1.msra.mxu0 %v308
    %1557 = vmatprep.subr.mxu0 %v313
    %1558 = vmatpush1.msra.mxu0 %v312
    %1559 = vmatprep.subr.mxu0 %v317
    %1560 = vmatpush1.msra.mxu0 %v316
    %1561 = vmatprep.subr.mxu0 %v321
    %1562 = vmatpush1.msra.mxu0 %v320
    %1563 = vmatprep.subr.mxu0 %v325
    %1564 = vmatpush1.msra.mxu0 %v324
    %1565 = vmatprep.subr.mxu0 %v329
    %1566 = vmatpush1.msra.mxu0 %v328
    %1567 = vmatprep.subr.mxu0 %v333
    %1568 = vmatpush1.msra.mxu0 %v332
    %1569 = vmatprep.subr.mxu0 %v337
    %1570 = vmatpush1.msra.mxu0 %v336
    %1571 = vmatprep.subr.mxu0 %v341
    %1572 = vmatpush1.msra.mxu0 %v340
    %1573 = vmatprep.subr.mxu0 %v345
    %1574 = vmatpush1.msra.mxu0 %v344
    %1575 = vmatprep.subr.mxu0 %v349
    %1576 = vmatpush1.msra.mxu0 %v348
    %1577 = vmatprep.subr.mxu0 0.0
    %1578 = vmatpush1.msra.mxu0 0.0
    %1579 = vmatprep.subr.mxu0 0.0
    %1580 = vmatpush1.msra.mxu0 0.0
    %1581 = vmatprep.subr.mxu0 0.0
    %1582 = vmatpush1.msra.mxu0 0.0
    %1583 = vmatprep.subr.mxu0 0.0
    %1584 = vmatpush1.msra.mxu0 0.0
    %1585 = vmatprep.subr.mxu0 0.0
    %1586 = vmatpush1.msra.mxu0 0.0
    %1587 = vmatprep.subr.mxu0 0.0
    %1588 = vmatpush1.msra.mxu0 0.0
    %1589 = vmatprep.subr.mxu0 0.0
    %1590 = vmatpush1.msra.mxu0 0.0
    %1591 = vmatprep.subr.mxu0 0.0
    %1592 = vmatpush1.msra.mxu0 0.0
    %1593 = vmatprep.subr.mxu0 0.0
    %1594 = vmatpush1.msra.mxu0 0.0
    %1595 = vmatprep.subr.mxu0 0.0
    %1596 = vmatpush1.msra.mxu0 0.0
    %1597 = vmatprep.subr.mxu0 0.0
    %1598 = vmatpush1.msra.mxu0 0.0
    %1599 = vmatprep.subr.mxu0 0.0
    %1600 = vmatpush1.msra.mxu0 0.0
    %1601 = vmatprep.subr.mxu0 0.0
    %1602 = vmatpush1.msra.mxu0 0.0
    %1603 = vmatprep.subr.mxu0 0.0
    %1604 = vmatpush1.msra.mxu0 0.0
    %1605 = vmatprep.subr.mxu0 0.0
    %1606 = vmatpush1.msra.mxu0 0.0
    %1607 = vmatprep.subr.mxu0 0.0
    %1608 = vmatpush1.msra.mxu0 0.0
    %1609 = vmatprep.mubr.f32.mxu0 0.0
    %1610 = vmatmul.mubr.f32.gmra.mrb[0].mxu0 %v1473
    %v1611 = vpop.f32.mrb[0].mxu0
    %v1612 = vadd.f32 %v363, %v1611
    %v1613 = vpop.f32.mrb[0].mxu0
    %v1614 = vadd.f32 %v367, %v1613
    %1615 = vdwg.mxu0
    %1616 = vmatprep.subr.mxu0 %v515
    %1617 = vmatpush1.msra.mxu0 %v514
    %1618 = vmatprep.subr.mxu0 %v519
    %1619 = vmatpush1.msra.mxu0 %v518
    %1620 = vmatprep.subr.mxu0 %v523
    %1621 = vmatpush1.msra.mxu0 %v522
    %1622 = vmatprep.subr.mxu0 %v527
    %1623 = vmatpush1.msra.mxu0 %v526
    %1624 = vmatprep.subr.mxu0 %v531
    %1625 = vmatpush1.msra.mxu0 %v530
    %1626 = vmatprep.subr.mxu0 %v535
    %1627 = vmatpush1.msra.mxu0 %v534
    %1628 = vmatprep.subr.mxu0 %v539
    %1629 = vmatpush1.msra.mxu0 %v538
    %1630 = vmatprep.subr.mxu0 %v543
    %1631 = vmatpush1.msra.mxu0 %v542
    %1632 = vmatprep.subr.mxu0 %v547
    %1633 = vmatpush1.msra.mxu0 %v546
    %1634 = vmatprep.subr.mxu0 %v551
    %1635 = vmatpush1.msra.mxu0 %v550
    %1636 = vmatprep.subr.mxu0 %v555
    %1637 = vmatpush1.msra.mxu0 %v554
    %1638 = vmatprep.subr.mxu0 %v559
    %1639 = vmatpush1.msra.mxu0 %v558
    %1640 = vmatprep.subr.mxu0 %v563
    %1641 = vmatpush1.msra.mxu0 %v562
    %1642 = vmatprep.subr.mxu0 %v567
    %1643 = vmatpush1.msra.mxu0 %v566
    %1644 = vmatprep.subr.mxu0 %v571
    %1645 = vmatpush1.msra.mxu0 %v570
    %1646 = vmatprep.subr.mxu0 %v575
    %1647 = vmatpush1.msra.mxu0 %v574
    %1648 = vmatprep.subr.mxu0 0.0
    %1649 = vmatpush1.msra.mxu0 0.0
    %1650 = vmatprep.subr.mxu0 0.0
    %1651 = vmatpush1.msra.mxu0 0.0
    %1652 = vmatprep.subr.mxu0 0.0
    %1653 = vmatpush1.msra.mxu0 0.0
    %1654 = vmatprep.subr.mxu0 0.0
    %1655 = vmatpush1.msra.mxu0 0.0
    %1656 = vmatprep.subr.mxu0 0.0
    %1657 = vmatpush1.msra.mxu0 0.0
    %1658 = vmatprep.subr.mxu0 0.0
    %1659 = vmatpush1.msra.mxu0 0.0
    %1660 = vmatprep.subr.mxu0 0.0
    %1661 = vmatpush1.msra.mxu0 0.0
    %1662 = vmatprep.subr.mxu0 0.0
    %1663 = vmatpush1.msra.mxu0 0.0
    %1664 = vmatprep.subr.mxu0 0.0
    %1665 = vmatpush1.msra.mxu0 0.0
    %1666 = vmatprep.subr.mxu0 0.0
    %1667 = vmatpush1.msra.mxu0 0.0
    %1668 = vmatprep.subr.mxu0 0.0
    %1669 = vmatpush1.msra.mxu0 0.0
    %1670 = vmatprep.subr.mxu0 0.0
    %1671 = vmatpush1.msra.mxu0 0.0
    %1672 = vmatprep.subr.mxu0 0.0
    %1673 = vmatpush1.msra.mxu0 0.0
    %1674 = vmatprep.subr.mxu0 0.0
    %1675 = vmatpush1.msra.mxu0 0.0
    %1676 = vmatprep.subr.mxu0 0.0
    %1677 = vmatpush1.msra.mxu0 0.0
    %1678 = vmatprep.subr.mxu0 0.0
    %1679 = vmatpush1.msra.mxu0 0.0
    %1680 = vmatprep.mubr.f32.mxu0 0.0
    %1681 = vmatmul.mubr.f32.gmra.mrb[0].mxu0 %v1306
    %v1682 = vpop.f32.mrb[0].mxu0
    %v1683 = vadd.f32 0.0, %v1682
    %v1684 = vpop.f32.mrb[0].mxu0
    %v1685 = vadd.f32 0.0, %v1684
    %1686 = vdwg.mxu0
    %1687 = vmatprep.subr.mxu0 %v517
    %1688 = vmatpush1.msra.mxu0 %v516
    %1689 = vmatprep.subr.mxu0 %v521
    %1690 = vmatpush1.msra.mxu0 %v520
    %1691 = vmatprep.subr.mxu0 %v525
    %1692 = vmatpush1.msra.mxu0 %v524
    %1693 = vmatprep.subr.mxu0 %v529
    %1694 = vmatpush1.msra.mxu0 %v528
    %1695 = vmatprep.subr.mxu0 %v533
    %1696 = vmatpush1.msra.mxu0 %v532
    %1697 = vmatprep.subr.mxu0 %v537
    %1698 = vmatpush1.msra.mxu0 %v536
    %1699 = vmatprep.subr.mxu0 %v541
    %1700 = vmatpush1.msra.mxu0 %v540
    %1701 = vmatprep.subr.mxu0 %v545
    %1702 = vmatpush1.msra.mxu0 %v544
    %1703 = vmatprep.subr.mxu0 %v549
    %1704 = vmatpush1.msra.mxu0 %v548
    %1705 = vmatprep.subr.mxu0 %v553
    %1706 = vmatpush1.msra.mxu0 %v552
    %1707 = vmatprep.subr.mxu0 %v557
    %1708 = vmatpush1.msra.mxu0 %v556
    %1709 = vmatprep.subr.mxu0 %v561
    %1710 = vmatpush1.msra.mxu0 %v560
    %1711 = vmatprep.subr.mxu0 %v565
    %1712 = vmatpush1.msra.mxu0 %v564
    %1713 = vmatprep.subr.mxu0 %v569
    %1714 = vmatpush1.msra.mxu0 %v568
    %1715 = vmatprep.subr.mxu0 %v573
    %1716 = vmatpush1.msra.mxu0 %v572
    %1717 = vmatprep.subr.mxu0 %v577
    %1718 = vmatpush1.msra.mxu0 %v576
    %1719 = vmatprep.subr.mxu0 0.0
    %1720 = vmatpush1.msra.mxu0 0.0
    %1721 = vmatprep.subr.mxu0 0.0
    %1722 = vmatpush1.msra.mxu0 0.0
    %1723 = vmatprep.subr.mxu0 0.0
    %1724 = vmatpush1.msra.mxu0 0.0
    %1725 = vmatprep.subr.mxu0 0.0
    %1726 = vmatpush1.msra.mxu0 0.0
    %1727 = vmatprep.subr.mxu0 0.0
    %1728 = vmatpush1.msra.mxu0 0.0
    %1729 = vmatprep.subr.mxu0 0.0
    %1730 = vmatpush1.msra.mxu0 0.0
    %1731 = vmatprep.subr.mxu0 0.0
    %1732 = vmatpush1.msra.mxu0 0.0
    %1733 = vmatprep.subr.mxu0 0.0
    %1734 = vmatpush1.msra.mxu0 0.0
    %1735 = vmatprep.subr.mxu0 0.0
    %1736 = vmatpush1.msra.mxu0 0.0
    %1737 = vmatprep.subr.mxu0 0.0
    %1738 = vmatpush1.msra.mxu0 0.0
    %1739 = vmatprep.subr.mxu0 0.0
    %1740 = vmatpush1.msra.mxu0 0.0
    %1741 = vmatprep.subr.mxu0 0.0
    %1742 = vmatpush1.msra.mxu0 0.0
    %1743 = vmatprep.subr.mxu0 0.0
    %1744 = vmatpush1.msra.mxu0 0.0
    %1745 = vmatprep.subr.mxu0 0.0
    %1746 = vmatpush1.msra.mxu0 0.0
    %1747 = vmatprep.subr.mxu0 0.0
    %1748 = vmatpush1.msra.mxu0 0.0
    %1749 = vmatprep.subr.mxu0 0.0
    %1750 = vmatpush1.msra.mxu0 0.0
    %1751 = vmatprep.mubr.f32.mxu0 0.0
    %1752 = vmatmul.mubr.f32.gmra.mrb[0].mxu0 %v1306
    %v1753 = vpop.f32.mrb[0].mxu0
    %v1754 = vadd.f32 0.0, %v1753
    %v1755 = vpop.f32.mrb[0].mxu0
    %v1756 = vadd.f32 0.0, %v1755
    %1757 = vdwg.mxu0
    %v1762 = vrot.slane %v1683, 6
    %v1763 = vrot.slane %v1685, 6
    %v1764 = vrot.slane %v1754, 6
    %v1765 = vrot.slane %v1756, 6
    %v1770 = vadd.f32 %v207, %v1762
    %v1771 = vadd.f32 %v209, %v1763
    %v1772 = vadd.f32 %v278, %v1764
    %v1773 = vadd.f32 %v280, %v1765
    %v1774 = vxor.u32 %v1770, 2147483648
    %v1775 = vxor.u32 %v1771, 2147483648
    %v1776 = vxor.u32 %v1773, 2147483648
    %v1777 = vmul.f32 %v1774, 1.442695
    %v1778 = vpow.pop %v1777
    %v1779 = vmul.f32 %v1775, 1.442695
    %v1780 = vpow.pop %v1779
    %v1781 = vmul.f32 %v1776, 1.442695
    %v1782 = vpow.pop %v1781
    %v1783 = vadd.f32 %v1778, 1.0
    %v1784 = vadd.f32 %v1780, 1.0
    %v1785 = vadd.f32 %v1782, 1.0
    %v1786 = vrcp.pop %v1783
    %v1787 = vmul.f32 1.0, %v1786
    %v1788 = vrcp.pop %v1784
    %v1789 = vmul.f32 1.0, %v1788
    %v1790 = vrcp.pop %v1785
    %v1791 = vmul.f32 1.0, %v1790
    %v1792 = vtanh.pop %v1772
    %v1794 = vrot.slane %v1302, 7
    %v1796 = vmul.f32 %v1789, %v1794
    %v1797 = vmul.f32 %v1787, %v1792
    %v1798 = vadd.f32 %v1796, %v1797
    %v1799 = vtanh.pop %v1798
    %v1800 = vmul.f32 %v1791, %v1799
    %v1802 = vrot.slane %v1800, 2
    %1804 = vmatprep.subr.mxu0 %v749
    %1805 = vmatpush1.msra.mxu0 %v748
    %1806 = vmatprep.subr.mxu0 %v753
    %1807 = vmatpush1.msra.mxu0 %v752
    %1808 = vmatprep.subr.mxu0 %v757
    %1809 = vmatpush1.msra.mxu0 %v756
    %1810 = vmatprep.subr.mxu0 %v761
    %1811 = vmatpush1.msra.mxu0 %v760
    %1812 = vmatprep.subr.mxu0 %v765
    %1813 = vmatpush1.msra.mxu0 %v764
    %1814 = vmatprep.subr.mxu0 %v769
    %1815 = vmatpush1.msra.mxu0 %v768
    %1816 = vmatprep.subr.mxu0 %v773
    %1817 = vmatpush1.msra.mxu0 %v772
    %1818 = vmatprep.subr.mxu0 %v777
    %1819 = vmatpush1.msra.mxu0 %v776
    %1820 = vmatprep.subr.mxu0 %v781
    %1821 = vmatpush1.msra.mxu0 %v780
    %1822 = vmatprep.subr.mxu0 %v785
    %1823 = vmatpush1.msra.mxu0 %v784
    %1824 = vmatprep.subr.mxu0 %v789
    %1825 = vmatpush1.msra.mxu0 %v788
    %1826 = vmatprep.subr.mxu0 %v793
    %1827 = vmatpush1.msra.mxu0 %v792
    %1828 = vmatprep.subr.mxu0 %v797
    %1829 = vmatpush1.msra.mxu0 %v796
    %1830 = vmatprep.subr.mxu0 %v801
    %1831 = vmatpush1.msra.mxu0 %v800
    %1832 = vmatprep.subr.mxu0 %v805
    %1833 = vmatpush1.msra.mxu0 %v804
    %1834 = vmatprep.subr.mxu0 %v809
    %1835 = vmatpush1.msra.mxu0 %v808
    %1836 = vmatprep.subr.mxu0 0.0
    %1837 = vmatpush1.msra.mxu0 0.0
    %1838 = vmatprep.subr.mxu0 0.0
    %1839 = vmatpush1.msra.mxu0 0.0
    %1840 = vmatprep.subr.mxu0 0.0
    %1841 = vmatpush1.msra.mxu0 0.0
    %1842 = vmatprep.subr.mxu0 0.0
    %1843 = vmatpush1.msra.mxu0 0.0
    %1844 = vmatprep.subr.mxu0 0.0
    %1845 = vmatpush1.msra.mxu0 0.0
    %1846 = vmatprep.subr.mxu0 0.0
    %1847 = vmatpush1.msra.mxu0 0.0
    %1848 = vmatprep.subr.mxu0 0.0
    %1849 = vmatpush1.msra.mxu0 0.0
    %1850 = vmatprep.subr.mxu0 0.0
    %1851 = vmatpush1.msra.mxu0 0.0
    %1852 = vmatprep.subr.mxu0 0.0
    %1853 = vmatpush1.msra.mxu0 0.0
    %1854 = vmatprep.subr.mxu0 0.0
    %1855 = vmatpush1.msra.mxu0 0.0
    %1856 = vmatprep.subr.mxu0 0.0
    %1857 = vmatpush1.msra.mxu0 0.0
    %1858 = vmatprep.subr.mxu0 0.0
    %1859 = vmatpush1.msra.mxu0 0.0
    %1860 = vmatprep.subr.mxu0 0.0
    %1861 = vmatpush1.msra.mxu0 0.0
    %1862 = vmatprep.subr.mxu0 0.0
    %1863 = vmatpush1.msra.mxu0 0.0
    %1864 = vmatprep.subr.mxu0 0.0
    %1865 = vmatpush1.msra.mxu0 0.0
    %1866 = vmatprep.subr.mxu0 0.0
    %1867 = vmatpush1.msra.mxu0 0.0
    %1868 = vmatprep.mubr.f32.mxu0 0.0
    %1869 = vmatmul.mubr.f32.gmra.mrb[0].mxu0 %v1802
    %v1870 = vpop.f32.mrb[0].mxu0
    %v1871 = vadd.f32 %v1541, %v1870
    %v1872 = vpop.f32.mrb[0].mxu0
    %v1873 = vadd.f32 %v1543, %v1872
    %1874 = vdwg.mxu0
    %1875 = vmatprep.subr.mxu0 %v751
    %1876 = vmatpush1.msra.mxu0 %v750
    %1877 = vmatprep.subr.mxu0 %v755
    %1878 = vmatpush1.msra.mxu0 %v754
    %1879 = vmatprep.subr.mxu0 %v759
    %1880 = vmatpush1.msra.mxu0 %v758
    %1881 = vmatprep.subr.mxu0 %v763
    %1882 = vmatpush1.msra.mxu0 %v762
    %1883 = vmatprep.subr.mxu0 %v767
    %1884 = vmatpush1.msra.mxu0 %v766
    %1885 = vmatprep.subr.mxu0 %v771
    %1886 = vmatpush1.msra.mxu0 %v770
    %1887 = vmatprep.subr.mxu0 %v775
    %1888 = vmatpush1.msra.mxu0 %v774
    %1889 = vmatprep.subr.mxu0 %v779
    %1890 = vmatpush1.msra.mxu0 %v778
    %1891 = vmatprep.subr.mxu0 %v783
    %1892 = vmatpush1.msra.mxu0 %v782
    %1893 = vmatprep.subr.mxu0 %v787
    %1894 = vmatpush1.msra.mxu0 %v786
    %1895 = vmatprep.subr.mxu0 %v791
    %1896 = vmatpush1.msra.mxu0 %v790
    %1897 = vmatprep.subr.mxu0 %v795
    %1898 = vmatpush1.msra.mxu0 %v794
    %1899 = vmatprep.subr.mxu0 %v799
    %1900 = vmatpush1.msra.mxu0 %v798
    %1901 = vmatprep.subr.mxu0 %v803
    %1902 = vmatpush1.msra.mxu0 %v802
    %1903 = vmatprep.subr.mxu0 %v807
    %1904 = vmatpush1.msra.mxu0 %v806
    %1905 = vmatprep.subr.mxu0 %v811
    %1906 = vmatpush1.msra.mxu0 %v810
    %1907 = vmatprep.subr.mxu0 0.0
    %1908 = vmatpush1.msra.mxu0 0.0
    %1909 = vmatprep.subr.mxu0 0.0
    %1910 = vmatpush1.msra.mxu0 0.0
    %1911 = vmatprep.subr.mxu0 0.0
    %1912 = vmatpush1.msra.mxu0 0.0
    %1913 = vmatprep.subr.mxu0 0.0
    %1914 = vmatpush1.msra.mxu0 0.0
    %1915 = vmatprep.subr.mxu0 0.0
    %1916 = vmatpush1.msra.mxu0 0.0
    %1917 = vmatprep.subr.mxu0 0.0
    %1918 = vmatpush1.msra.mxu0 0.0
    %1919 = vmatprep.subr.mxu0 0.0
    %1920 = vmatpush1.msra.mxu0 0.0
    %1921 = vmatprep.subr.mxu0 0.0
    %1922 = vmatpush1.msra.mxu0 0.0
    %1923 = vmatprep.subr.mxu0 0.0
    %1924 = vmatpush1.msra.mxu0 0.0
    %1925 = vmatprep.subr.mxu0 0.0
    %1926 = vmatpush1.msra.mxu0 0.0
    %1927 = vmatprep.subr.mxu0 0.0
    %1928 = vmatpush1.msra.mxu0 0.0
    %1929 = vmatprep.subr.mxu0 0.0
    %1930 = vmatpush1.msra.mxu0 0.0
    %1931 = vmatprep.subr.mxu0 0.0
    %1932 = vmatpush1.msra.mxu0 0.0
    %1933 = vmatprep.subr.mxu0 0.0
    %1934 = vmatpush1.msra.mxu0 0.0
    %1935 = vmatprep.subr.mxu0 0.0
    %1936 = vmatpush1.msra.mxu0 0.0
    %1937 = vmatprep.subr.mxu0 0.0
    %1938 = vmatpush1.msra.mxu0 0.0
    %1939 = vmatprep.mubr.f32.mxu0 0.0
    %1940 = vmatmul.mubr.f32.gmra.mrb[0].mxu0 %v1802
    %v1941 = vpop.f32.mrb[0].mxu0
    %v1942 = vadd.f32 %v1612, %v1941
    %v1943 = vpop.f32.mrb[0].mxu0
    %v1944 = vadd.f32 %v1614, %v1943
    %1945 = vdwg.mxu0
    %v1946 = vxor.u32 %v1871, 2147483648
    %v1947 = vxor.u32 %v1873, 2147483648
    %v1948 = vxor.u32 %v1944, 2147483648
    %v1949 = vmul.f32 %v1946, 1.442695
    %v1950 = vpow.pop %v1949
    %v1951 = vmul.f32 %v1947, 1.442695
    %v1952 = vpow.pop %v1951
    %v1953 = vmul.f32 %v1948, 1.442695
    %v1954 = vpow.pop %v1953
    %v1955 = vadd.f32 %v1950, 1.0
    %v1956 = vadd.f32 %v1952, 1.0
    %v1957 = vadd.f32 %v1954, 1.0
    %v1958 = vrcp.pop %v1955
    %v1959 = vmul.f32 1.0, %v1958
    %v1960 = vrcp.pop %v1956
    %v1961 = vmul.f32 1.0, %v1960
    %v1962 = vrcp.pop %v1957
    %v1963 = vmul.f32 1.0, %v1962
    %v1964 = vtanh.pop %v1942
    %v1965 = vmul.f32 %v1961, %v1471
    %v1966 = vmul.f32 %v1959, %v1964
    %v1967 = vadd.f32 %v1965, %v1966
    %v1968 = vtanh.pop %v1967
    %v1969 = vmul.f32 %v1963, %v1968
    %1970 = vmatprep.subr.mxu0 %v287
    %1971 = vmatpush1.msra.mxu0 %v286
    %1972 = vmatprep.subr.mxu0 %v291
    %1973 = vmatpush1.msra.mxu0 %v290
    %1974 = vmatprep.subr.mxu0 %v295
    %1975 = vmatpush1.msra.mxu0 %v294
    %1976 = vmatprep.subr.mxu0 %v299
    %1977 = vmatpush1.msra.mxu0 %v298
    %1978 = vmatprep.subr.mxu0 %v303
    %1979 = vmatpush1.msra.mxu0 %v302
    %1980 = vmatprep.subr.mxu0 %v307
    %1981 = vmatpush1.msra.mxu0 %v306
    %1982 = vmatprep.subr.mxu0 %v311
    %1983 = vmatpush1.msra.mxu0 %v310
    %1984 = vmatprep.subr.mxu0 %v315
    %1985 = vmatpush1.msra.mxu0 %v314
    %1986 = vmatprep.subr.mxu0 %v319
    %1987 = vmatpush1.msra.mxu0 %v318
    %1988 = vmatprep.subr.mxu0 %v323
    %1989 = vmatpush1.msra.mxu0 %v322
    %1990 = vmatprep.subr.mxu0 %v327
    %1991 = vmatpush1.msra.mxu0 %v326
    %1992 = vmatprep.subr.mxu0 %v331
    %1993 = vmatpush1.msra.mxu0 %v330
    %1994 = vmatprep.subr.mxu0 %v335
    %1995 = vmatpush1.msra.mxu0 %v334
    %1996 = vmatprep.subr.mxu0 %v339
    %1997 = vmatpush1.msra.mxu0 %v338
    %1998 = vmatprep.subr.mxu0 %v343
    %1999 = vmatpush1.msra.mxu0 %v342
    %2000 = vmatprep.subr.mxu0 %v347
    %2001 = vmatpush1.msra.mxu0 %v346
    %2002 = vmatprep.subr.mxu0 0.0
    %2003 = vmatpush1.msra.mxu0 0.0
    %2004 = vmatprep.subr.mxu0 0.0
    %2005 = vmatpush1.msra.mxu0 0.0
    %2006 = vmatprep.subr.mxu0 0.0
    %2007 = vmatpush1.msra.mxu0 0.0
    %2008 = vmatprep.subr.mxu0 0.0
    %2009 = vmatpush1.msra.mxu0 0.0
    %2010 = vmatprep.subr.mxu0 0.0
    %2011 = vmatpush1.msra.mxu0 0.0
    %2012 = vmatprep.subr.mxu0 0.0
    %2013 = vmatpush1.msra.mxu0 0.0
    %2014 = vmatprep.subr.mxu0 0.0
    %2015 = vmatpush1.msra.mxu0 0.0
    %2016 = vmatprep.subr.mxu0 0.0
    %2017 = vmatpush1.msra.mxu0 0.0
    %2018 = vmatprep.subr.mxu0 0.0
    %2019 = vmatpush1.msra.mxu0 0.0
    %2020 = vmatprep.subr.mxu0 0.0
    %2021 = vmatpush1.msra.mxu0 0.0
    %2022 = vmatprep.subr.mxu0 0.0
    %2023 = vmatpush1.msra.mxu0 0.0
    %2024 = vmatprep.subr.mxu0 0.0
    %2025 = vmatpush1.msra.mxu0 0.0
    %2026 = vmatprep.subr.mxu0 0.0
    %2027 = vmatpush1.msra.mxu0 0.0
    %2028 = vmatprep.subr.mxu0 0.0
    %2029 = vmatpush1.msra.mxu0 0.0
    %2030 = vmatprep.subr.mxu0 0.0
    %2031 = vmatpush1.msra.mxu0 0.0
    %2032 = vmatprep.subr.mxu0 0.0
    %2033 = vmatpush1.msra.mxu0 0.0
    %2034 = vmatprep.mubr.f32.mxu0 0.0
    %2035 = vmatmul.mubr.f32.gmra.mrb[0].mxu0 %v1969
    %v2036 = vpop.f32.mrb[0].mxu0
    %v2037 = vadd.f32 %v355, %v2036
    %v2038 = vpop.f32.mrb[0].mxu0
    %v2039 = vadd.f32 %v359, %v2038
    %2040 = vdwg.mxu0
    %2041 = vmatprep.subr.mxu0 %v289
    %2042 = vmatpush1.msra.mxu0 %v288
    %2043 = vmatprep.subr.mxu0 %v293
    %2044 = vmatpush1.msra.mxu0 %v292
    %2045 = vmatprep.subr.mxu0 %v297
    %2046 = vmatpush1.msra.mxu0 %v296
    %2047 = vmatprep.subr.mxu0 %v301
    %2048 = vmatpush1.msra.mxu0 %v300
    %2049 = vmatprep.subr.mxu0 %v305
    %2050 = vmatpush1.msra.mxu0 %v304
    %2051 = vmatprep.subr.mxu0 %v309
    %2052 = vmatpush1.msra.mxu0 %v308
    %2053 = vmatprep.subr.mxu0 %v313
    %2054 = vmatpush1.msra.mxu0 %v312
    %2055 = vmatprep.subr.mxu0 %v317
    %2056 = vmatpush1.msra.mxu0 %v316
    %2057 = vmatprep.subr.mxu0 %v321
    %2058 = vmatpush1.msra.mxu0 %v320
    %2059 = vmatprep.subr.mxu0 %v325
    %2060 = vmatpush1.msra.mxu0 %v324
    %2061 = vmatprep.subr.mxu0 %v329
    %2062 = vmatpush1.msra.mxu0 %v328
    %2063 = vmatprep.subr.mxu0 %v333
    %2064 = vmatpush1.msra.mxu0 %v332
    %2065 = vmatprep.subr.mxu0 %v337
    %2066 = vmatpush1.msra.mxu0 %v336
    %2067 = vmatprep.subr.mxu0 %v341
    %2068 = vmatpush1.msra.mxu0 %v340
    %2069 = vmatprep.subr.mxu0 %v345
    %2070 = vmatpush1.msra.mxu0 %v344
    %2071 = vmatprep.subr.mxu0 %v349
    %2072 = vmatpush1.msra.mxu0 %v348
    %2073 = vmatprep.subr.mxu0 0.0
    %2074 = vmatpush1.msra.mxu0 0.0
    %2075 = vmatprep.subr.mxu0 0.0
    %2076 = vmatpush1.msra.mxu0 0.0
    %2077 = vmatprep.subr.mxu0 0.0
    %2078 = vmatpush1.msra.mxu0 0.0
    %2079 = vmatprep.subr.mxu0 0.0
    %2080 = vmatpush1.msra.mxu0 0.0
    %2081 = vmatprep.subr.mxu0 0.0
    %2082 = vmatpush1.msra.mxu0 0.0
    %2083 = vmatprep.subr.mxu0 0.0
    %2084 = vmatpush1.msra.mxu0 0.0
    %2085 = vmatprep.subr.mxu0 0.0
    %2086 = vmatpush1.msra.mxu0 0.0
    %2087 = vmatprep.subr.mxu0 0.0
    %2088 = vmatpush1.msra.mxu0 0.0
    %2089 = vmatprep.subr.mxu0 0.0
    %2090 = vmatpush1.msra.mxu0 0.0
    %2091 = vmatprep.subr.mxu0 0.0
    %2092 = vmatpush1.msra.mxu0 0.0
    %2093 = vmatprep.subr.mxu0 0.0
    %2094 = vmatpush1.msra.mxu0 0.0
    %2095 = vmatprep.subr.mxu0 0.0
    %2096 = vmatpush1.msra.mxu0 0.0
    %2097 = vmatprep.subr.mxu0 0.0
    %2098 = vmatpush1.msra.mxu0 0.0
    %2099 = vmatprep.subr.mxu0 0.0
    %2100 = vmatpush1.msra.mxu0 0.0
    %2101 = vmatprep.subr.mxu0 0.0
    %2102 = vmatpush1.msra.mxu0 0.0
    %2103 = vmatprep.subr.mxu0 0.0
    %2104 = vmatpush1.msra.mxu0 0.0
    %2105 = vmatprep.mubr.f32.mxu0 0.0
    %2106 = vmatmul.mubr.f32.gmra.mrb[0].mxu0 %v1969
    %v2107 = vpop.f32.mrb[0].mxu0
    %v2108 = vadd.f32 %v363, %v2107
    %v2109 = vpop.f32.mrb[0].mxu0
    %v2110 = vadd.f32 %v367, %v2109
    %2111 = vdwg.mxu0
    %2112 = vmatprep.subr.mxu0 %v515
    %2113 = vmatpush1.msra.mxu0 %v514
    %2114 = vmatprep.subr.mxu0 %v519
    %2115 = vmatpush1.msra.mxu0 %v518
    %2116 = vmatprep.subr.mxu0 %v523
    %2117 = vmatpush1.msra.mxu0 %v522
    %2118 = vmatprep.subr.mxu0 %v527
    %2119 = vmatpush1.msra.mxu0 %v526
    %2120 = vmatprep.subr.mxu0 %v531
    %2121 = vmatpush1.msra.mxu0 %v530
    %2122 = vmatprep.subr.mxu0 %v535
    %2123 = vmatpush1.msra.mxu0 %v534
    %2124 = vmatprep.subr.mxu0 %v539
    %2125 = vmatpush1.msra.mxu0 %v538
    %2126 = vmatprep.subr.mxu0 %v543
    %2127 = vmatpush1.msra.mxu0 %v542
    %2128 = vmatprep.subr.mxu0 %v547
    %2129 = vmatpush1.msra.mxu0 %v546
    %2130 = vmatprep.subr.mxu0 %v551
    %2131 = vmatpush1.msra.mxu0 %v550
    %2132 = vmatprep.subr.mxu0 %v555
    %2133 = vmatpush1.msra.mxu0 %v554
    %2134 = vmatprep.subr.mxu0 %v559
    %2135 = vmatpush1.msra.mxu0 %v558
    %2136 = vmatprep.subr.mxu0 %v563
    %2137 = vmatpush1.msra.mxu0 %v562
    %2138 = vmatprep.subr.mxu0 %v567
    %2139 = vmatpush1.msra.mxu0 %v566
    %2140 = vmatprep.subr.mxu0 %v571
    %2141 = vmatpush1.msra.mxu0 %v570
    %2142 = vmatprep.subr.mxu0 %v575
    %2143 = vmatpush1.msra.mxu0 %v574
    %2144 = vmatprep.subr.mxu0 0.0
    %2145 = vmatpush1.msra.mxu0 0.0
    %2146 = vmatprep.subr.mxu0 0.0
    %2147 = vmatpush1.msra.mxu0 0.0
    %2148 = vmatprep.subr.mxu0 0.0
    %2149 = vmatpush1.msra.mxu0 0.0
    %2150 = vmatprep.subr.mxu0 0.0
    %2151 = vmatpush1.msra.mxu0 0.0
    %2152 = vmatprep.subr.mxu0 0.0
    %2153 = vmatpush1.msra.mxu0 0.0
    %2154 = vmatprep.subr.mxu0 0.0
    %2155 = vmatpush1.msra.mxu0 0.0
    %2156 = vmatprep.subr.mxu0 0.0
    %2157 = vmatpush1.msra.mxu0 0.0
    %2158 = vmatprep.subr.mxu0 0.0
    %2159 = vmatpush1.msra.mxu0 0.0
    %2160 = vmatprep.subr.mxu0 0.0
    %2161 = vmatpush1.msra.mxu0 0.0
    %2162 = vmatprep.subr.mxu0 0.0
    %2163 = vmatpush1.msra.mxu0 0.0
    %2164 = vmatprep.subr.mxu0 0.0
    %2165 = vmatpush1.msra.mxu0 0.0
    %2166 = vmatprep.subr.mxu0 0.0
    %2167 = vmatpush1.msra.mxu0 0.0
    %2168 = vmatprep.subr.mxu0 0.0
    %2169 = vmatpush1.msra.mxu0 0.0
    %2170 = vmatprep.subr.mxu0 0.0
    %2171 = vmatpush1.msra.mxu0 0.0
    %2172 = vmatprep.subr.mxu0 0.0
    %2173 = vmatpush1.msra.mxu0 0.0
    %2174 = vmatprep.subr.mxu0 0.0
    %2175 = vmatpush1.msra.mxu0 0.0
    %2176 = vmatprep.mubr.f32.mxu0 0.0
    %2177 = vmatmul.mubr.f32.gmra.mrb[0].mxu0 %v1802
    %v2178 = vpop.f32.mrb[0].mxu0
    %v2179 = vadd.f32 0.0, %v2178
    %v2180 = vpop.f32.mrb[0].mxu0
    %v2181 = vadd.f32 0.0, %v2180
    %2182 = vdwg.mxu0
    %2183 = vmatprep.subr.mxu0 %v517
    %2184 = vmatpush1.msra.mxu0 %v516
    %2185 = vmatprep.subr.mxu0 %v521
    %2186 = vmatpush1.msra.mxu0 %v520
    %2187 = vmatprep.subr.mxu0 %v525
    %2188 = vmatpush1.msra.mxu0 %v524
    %2189 = vmatprep.subr.mxu0 %v529
    %2190 = vmatpush1.msra.mxu0 %v528
    %2191 = vmatprep.subr.mxu0 %v533
    %2192 = vmatpush1.msra.mxu0 %v532
    %2193 = vmatprep.subr.mxu0 %v537
    %2194 = vmatpush1.msra.mxu0 %v536
    %2195 = vmatprep.subr.mxu0 %v541
    %2196 = vmatpush1.msra.mxu0 %v540
    %2197 = vmatprep.subr.mxu0 %v545
    %2198 = vmatpush1.msra.mxu0 %v544
    %2199 = vmatprep.subr.mxu0 %v549
    %2200 = vmatpush1.msra.mxu0 %v548
    %2201 = vmatprep.subr.mxu0 %v553
    %2202 = vmatpush1.msra.mxu0 %v552
    %2203 = vmatprep.subr.mxu0 %v557
    %2204 = vmatpush1.msra.mxu0 %v556
    %2205 = vmatprep.subr.mxu0 %v561
    %2206 = vmatpush1.msra.mxu0 %v560
    %2207 = vmatprep.subr.mxu0 %v565
    %2208 = vmatpush1.msra.mxu0 %v564
    %2209 = vmatprep.subr.mxu0 %v569
    %2210 = vmatpush1.msra.mxu0 %v568
    %2211 = vmatprep.subr.mxu0 %v573
    %2212 = vmatpush1.msra.mxu0 %v572
    %2213 = vmatprep.subr.mxu0 %v577
    %2214 = vmatpush1.msra.mxu0 %v576
    %2215 = vmatprep.subr.mxu0 0.0
    %2216 = vmatpush1.msra.mxu0 0.0
    %2217 = vmatprep.subr.mxu0 0.0
    %2218 = vmatpush1.msra.mxu0 0.0
    %2219 = vmatprep.subr.mxu0 0.0
    %2220 = vmatpush1.msra.mxu0 0.0
    %2221 = vmatprep.subr.mxu0 0.0
    %2222 = vmatpush1.msra.mxu0 0.0
    %2223 = vmatprep.subr.mxu0 0.0
    %2224 = vmatpush1.msra.mxu0 0.0
    %2225 = vmatprep.subr.mxu0 0.0
    %2226 = vmatpush1.msra.mxu0 0.0
    %2227 = vmatprep.subr.mxu0 0.0
    %2228 = vmatpush1.msra.mxu0 0.0
    %2229 = vmatprep.subr.mxu0 0.0
    %2230 = vmatpush1.msra.mxu0 0.0
    %2231 = vmatprep.subr.mxu0 0.0
    %2232 = vmatpush1.msra.mxu0 0.0
    %2233 = vmatprep.subr.mxu0 0.0
    %2234 = vmatpush1.msra.mxu0 0.0
    %2235 = vmatprep.subr.mxu0 0.0
    %2236 = vmatpush1.msra.mxu0 0.0
    %2237 = vmatprep.subr.mxu0 0.0
    %2238 = vmatpush1.msra.mxu0 0.0
    %2239 = vmatprep.subr.mxu0 0.0
    %2240 = vmatpush1.msra.mxu0 0.0
    %2241 = vmatprep.subr.mxu0 0.0
    %2242 = vmatpush1.msra.mxu0 0.0
    %2243 = vmatprep.subr.mxu0 0.0
    %2244 = vmatpush1.msra.mxu0 0.0
    %2245 = vmatprep.subr.mxu0 0.0
    %2246 = vmatpush1.msra.mxu0 0.0
    %2247 = vmatprep.mubr.f32.mxu0 0.0
    %2248 = vmatmul.mubr.f32.gmra.mrb[0].mxu0 %v1802
    %v2249 = vpop.f32.mrb[0].mxu0
    %v2250 = vadd.f32 0.0, %v2249
    %v2251 = vpop.f32.mrb[0].mxu0
    %v2252 = vadd.f32 0.0, %v2251
    %2253 = vdwg.mxu0
    %v2258 = vrot.slane %v2179, 5
    %v2259 = vrot.slane %v2181, 5
    %v2260 = vrot.slane %v2250, 5
    %v2261 = vrot.slane %v2252, 5
    %v2266 = vadd.f32 %v207, %v2258
    %v2267 = vadd.f32 %v209, %v2259
    %v2268 = vadd.f32 %v278, %v2260
    %v2269 = vadd.f32 %v280, %v2261
    %v2270 = vxor.u32 %v2266, 2147483648
    %v2271 = vxor.u32 %v2267, 2147483648
    %v2272 = vxor.u32 %v2269, 2147483648
    %v2273 = vmul.f32 %v2270, 1.442695
    %v2274 = vpow.pop %v2273
    %v2275 = vmul.f32 %v2271, 1.442695
    %v2276 = vpow.pop %v2275
    %v2277 = vmul.f32 %v2272, 1.442695
    %v2278 = vpow.pop %v2277
    %v2279 = vadd.f32 %v2274, 1.0
    %v2280 = vadd.f32 %v2276, 1.0
    %v2281 = vadd.f32 %v2278, 1.0
    %v2282 = vrcp.pop %v2279
    %v2283 = vmul.f32 1.0, %v2282
    %v2284 = vrcp.pop %v2280
    %v2285 = vmul.f32 1.0, %v2284
    %v2286 = vrcp.pop %v2281
    %v2287 = vmul.f32 1.0, %v2286
    %v2288 = vtanh.pop %v2268
    %v2290 = vrot.slane %v1798, 7
    %v2292 = vmul.f32 %v2285, %v2290
    %v2293 = vmul.f32 %v2283, %v2288
    %v2294 = vadd.f32 %v2292, %v2293
    %v2295 = vtanh.pop %v2294
    %v2296 = vmul.f32 %v2287, %v2295
    %v2298 = vrot.slane %v2296, 3
    %2300 = vmatprep.subr.mxu0 %v749
    %2301 = vmatpush1.msra.mxu0 %v748
    %2302 = vmatprep.subr.mxu0 %v753
    %2303 = vmatpush1.msra.mxu0 %v752
    %2304 = vmatprep.subr.mxu0 %v757
    %2305 = vmatpush1.msra.mxu0 %v756
    %2306 = vmatprep.subr.mxu0 %v761
    %2307 = vmatpush1.msra.mxu0 %v760
    %2308 = vmatprep.subr.mxu0 %v765
    %2309 = vmatpush1.msra.mxu0 %v764
    %2310 = vmatprep.subr.mxu0 %v769
    %2311 = vmatpush1.msra.mxu0 %v768
    %2312 = vmatprep.subr.mxu0 %v773
    %2313 = vmatpush1.msra.mxu0 %v772
    %2314 = vmatprep.subr.mxu0 %v777
    %2315 = vmatpush1.msra.mxu0 %v776
    %2316 = vmatprep.subr.mxu0 %v781
    %2317 = vmatpush1.msra.mxu0 %v780
    %2318 = vmatprep.subr.mxu0 %v785
    %2319 = vmatpush1.msra.mxu0 %v784
    %2320 = vmatprep.subr.mxu0 %v789
    %2321 = vmatpush1.msra.mxu0 %v788
    %2322 = vmatprep.subr.mxu0 %v793
    %2323 = vmatpush1.msra.mxu0 %v792
    %2324 = vmatprep.subr.mxu0 %v797
    %2325 = vmatpush1.msra.mxu0 %v796
    %2326 = vmatprep.subr.mxu0 %v801
    %2327 = vmatpush1.msra.mxu0 %v800
    %2328 = vmatprep.subr.mxu0 %v805
    %2329 = vmatpush1.msra.mxu0 %v804
    %2330 = vmatprep.subr.mxu0 %v809
    %2331 = vmatpush1.msra.mxu0 %v808
    %2332 = vmatprep.subr.mxu0 0.0
    %2333 = vmatpush1.msra.mxu0 0.0
    %2334 = vmatprep.subr.mxu0 0.0
    %2335 = vmatpush1.msra.mxu0 0.0
    %2336 = vmatprep.subr.mxu0 0.0
    %2337 = vmatpush1.msra.mxu0 0.0
    %2338 = vmatprep.subr.mxu0 0.0
    %2339 = vmatpush1.msra.mxu0 0.0
    %2340 = vmatprep.subr.mxu0 0.0
    %2341 = vmatpush1.msra.mxu0 0.0
    %2342 = vmatprep.subr.mxu0 0.0
    %2343 = vmatpush1.msra.mxu0 0.0
    %2344 = vmatprep.subr.mxu0 0.0
    %2345 = vmatpush1.msra.mxu0 0.0
    %2346 = vmatprep.subr.mxu0 0.0
    %2347 = vmatpush1.msra.mxu0 0.0
    %2348 = vmatprep.subr.mxu0 0.0
    %2349 = vmatpush1.msra.mxu0 0.0
    %2350 = vmatprep.subr.mxu0 0.0
    %2351 = vmatpush1.msra.mxu0 0.0
    %2352 = vmatprep.subr.mxu0 0.0
    %2353 = vmatpush1.msra.mxu0 0.0
    %2354 = vmatprep.subr.mxu0 0.0
    %2355 = vmatpush1.msra.mxu0 0.0
    %2356 = vmatprep.subr.mxu0 0.0
    %2357 = vmatpush1.msra.mxu0 0.0
    %2358 = vmatprep.subr.mxu0 0.0
    %2359 = vmatpush1.msra.mxu0 0.0
    %2360 = vmatprep.subr.mxu0 0.0
    %2361 = vmatpush1.msra.mxu0 0.0
    %2362 = vmatprep.subr.mxu0 0.0
    %2363 = vmatpush1.msra.mxu0 0.0
    %2364 = vmatprep.mubr.f32.mxu0 0.0
    %2365 = vmatmul.mubr.f32.gmra.mrb[0].mxu0 %v2298
    %v2366 = vpop.f32.mrb[0].mxu0
    %v2367 = vadd.f32 %v2037, %v2366
    %v2368 = vpop.f32.mrb[0].mxu0
    %v2369 = vadd.f32 %v2039, %v2368
    %2370 = vdwg.mxu0
    %2371 = vmatprep.subr.mxu0 %v751
    %2372 = vmatpush1.msra.mxu0 %v750
    %2373 = vmatprep.subr.mxu0 %v755
    %2374 = vmatpush1.msra.mxu0 %v754
    %2375 = vmatprep.subr.mxu0 %v759
    %2376 = vmatpush1.msra.mxu0 %v758
    %2377 = vmatprep.subr.mxu0 %v763
    %2378 = vmatpush1.msra.mxu0 %v762
    %2379 = vmatprep.subr.mxu0 %v767
    %2380 = vmatpush1.msra.mxu0 %v766
    %2381 = vmatprep.subr.mxu0 %v771
    %2382 = vmatpush1.msra.mxu0 %v770
    %2383 = vmatprep.subr.mxu0 %v775
    %2384 = vmatpush1.msra.mxu0 %v774
    %2385 = vmatprep.subr.mxu0 %v779
    %2386 = vmatpush1.msra.mxu0 %v778
    %2387 = vmatprep.subr.mxu0 %v783
    %2388 = vmatpush1.msra.mxu0 %v782
    %2389 = vmatprep.subr.mxu0 %v787
    %2390 = vmatpush1.msra.mxu0 %v786
    %2391 = vmatprep.subr.mxu0 %v791
    %2392 = vmatpush1.msra.mxu0 %v790
    %2393 = vmatprep.subr.mxu0 %v795
    %2394 = vmatpush1.msra.mxu0 %v794
    %2395 = vmatprep.subr.mxu0 %v799
    %2396 = vmatpush1.msra.mxu0 %v798
    %2397 = vmatprep.subr.mxu0 %v803
    %2398 = vmatpush1.msra.mxu0 %v802
    %2399 = vmatprep.subr.mxu0 %v807
    %2400 = vmatpush1.msra.mxu0 %v806
    %2401 = vmatprep.subr.mxu0 %v811
    %2402 = vmatpush1.msra.mxu0 %v810
    %2403 = vmatprep.subr.mxu0 0.0
    %2404 = vmatpush1.msra.mxu0 0.0
    %2405 = vmatprep.subr.mxu0 0.0
    %2406 = vmatpush1.msra.mxu0 0.0
    %2407 = vmatprep.subr.mxu0 0.0
    %2408 = vmatpush1.msra.mxu0 0.0
    %2409 = vmatprep.subr.mxu0 0.0
    %2410 = vmatpush1.msra.mxu0 0.0
    %2411 = vmatprep.subr.mxu0 0.0
    %2412 = vmatpush1.msra.mxu0 0.0
    %2413 = vmatprep.subr.mxu0 0.0
    %2414 = vmatpush1.msra.mxu0 0.0
    %2415 = vmatprep.subr.mxu0 0.0
    %2416 = vmatpush1.msra.mxu0 0.0
    %2417 = vmatprep.subr.mxu0 0.0
    %2418 = vmatpush1.msra.mxu0 0.0
    %2419 = vmatprep.subr.mxu0 0.0
    %2420 = vmatpush1.msra.mxu0 0.0
    %2421 = vmatprep.subr.mxu0 0.0
    %2422 = vmatpush1.msra.mxu0 0.0
    %2423 = vmatprep.subr.mxu0 0.0
    %2424 = vmatpush1.msra.mxu0 0.0
    %2425 = vmatprep.subr.mxu0 0.0
    %2426 = vmatpush1.msra.mxu0 0.0
    %2427 = vmatprep.subr.mxu0 0.0
    %2428 = vmatpush1.msra.mxu0 0.0
    %2429 = vmatprep.subr.mxu0 0.0
    %2430 = vmatpush1.msra.mxu0 0.0
    %2431 = vmatprep.subr.mxu0 0.0
    %2432 = vmatpush1.msra.mxu0 0.0
    %2433 = vmatprep.subr.mxu0 0.0
    %2434 = vmatpush1.msra.mxu0 0.0
    %2435 = vmatprep.mubr.f32.mxu0 0.0
    %2436 = vmatmul.mubr.f32.gmra.mrb[0].mxu0 %v2298
    %v2437 = vpop.f32.mrb[0].mxu0
    %v2438 = vadd.f32 %v2108, %v2437
    %v2439 = vpop.f32.mrb[0].mxu0
    %v2440 = vadd.f32 %v2110, %v2439
    %2441 = vdwg.mxu0
    %v2442 = vxor.u32 %v2367, 2147483648
    %v2443 = vxor.u32 %v2369, 2147483648
    %v2444 = vxor.u32 %v2440, 2147483648
    %v2445 = vmul.f32 %v2442, 1.442695
    %v2446 = vpow.pop %v2445
    %v2447 = vmul.f32 %v2443, 1.442695
    %v2448 = vpow.pop %v2447
    %v2449 = vmul.f32 %v2444, 1.442695
    %v2450 = vpow.pop %v2449
    %v2451 = vadd.f32 %v2446, 1.0
    %v2452 = vadd.f32 %v2448, 1.0
    %v2453 = vadd.f32 %v2450, 1.0
    %v2454 = vrcp.pop %v2451
    %v2455 = vmul.f32 1.0, %v2454
    %v2456 = vrcp.pop %v2452
    %v2457 = vmul.f32 1.0, %v2456
    %v2458 = vrcp.pop %v2453
    %v2459 = vmul.f32 1.0, %v2458
    %v2460 = vtanh.pop %v2438
    %v2461 = vmul.f32 %v2457, %v1967
    %v2462 = vmul.f32 %v2455, %v2460
    %v2463 = vadd.f32 %v2461, %v2462
    %v2464 = vtanh.pop %v2463
    %v2465 = vmul.f32 %v2459, %v2464
    %2466 = vmatprep.subr.mxu0 %v287
    %2467 = vmatpush1.msra.mxu0 %v286
    %2468 = vmatprep.subr.mxu0 %v291
    %2469 = vmatpush1.msra.mxu0 %v290
    %2470 = vmatprep.subr.mxu0 %v295
    %2471 = vmatpush1.msra.mxu0 %v294
    %2472 = vmatprep.subr.mxu0 %v299
    %2473 = vmatpush1.msra.mxu0 %v298
    %2474 = vmatprep.subr.mxu0 %v303
    %2475 = vmatpush1.msra.mxu0 %v302
    %2476 = vmatprep.subr.mxu0 %v307
    %2477 = vmatpush1.msra.mxu0 %v306
    %2478 = vmatprep.subr.mxu0 %v311
    %2479 = vmatpush1.msra.mxu0 %v310
    %2480 = vmatprep.subr.mxu0 %v315
    %2481 = vmatpush1.msra.mxu0 %v314
    %2482 = vmatprep.subr.mxu0 %v319
    %2483 = vmatpush1.msra.mxu0 %v318
    %2484 = vmatprep.subr.mxu0 %v323
    %2485 = vmatpush1.msra.mxu0 %v322
    %2486 = vmatprep.subr.mxu0 %v327
    %2487 = vmatpush1.msra.mxu0 %v326
    %2488 = vmatprep.subr.mxu0 %v331
    %2489 = vmatpush1.msra.mxu0 %v330
    %2490 = vmatprep.subr.mxu0 %v335
    %2491 = vmatpush1.msra.mxu0 %v334
    %2492 = vmatprep.subr.mxu0 %v339
    %2493 = vmatpush1.msra.mxu0 %v338
    %2494 = vmatprep.subr.mxu0 %v343
    %2495 = vmatpush1.msra.mxu0 %v342
    %2496 = vmatprep.subr.mxu0 %v347
    %2497 = vmatpush1.msra.mxu0 %v346
    %2498 = vmatprep.subr.mxu0 0.0
    %2499 = vmatpush1.msra.mxu0 0.0
    %2500 = vmatprep.subr.mxu0 0.0
    %2501 = vmatpush1.msra.mxu0 0.0
    %2502 = vmatprep.subr.mxu0 0.0
    %2503 = vmatpush1.msra.mxu0 0.0
    %2504 = vmatprep.subr.mxu0 0.0
    %2505 = vmatpush1.msra.mxu0 0.0
    %2506 = vmatprep.subr.mxu0 0.0
    %2507 = vmatpush1.msra.mxu0 0.0
    %2508 = vmatprep.subr.mxu0 0.0
    %2509 = vmatpush1.msra.mxu0 0.0
    %2510 = vmatprep.subr.mxu0 0.0
    %2511 = vmatpush1.msra.mxu0 0.0
    %2512 = vmatprep.subr.mxu0 0.0
    %2513 = vmatpush1.msra.mxu0 0.0
    %2514 = vmatprep.subr.mxu0 0.0
    %2515 = vmatpush1.msra.mxu0 0.0
    %2516 = vmatprep.subr.mxu0 0.0
    %2517 = vmatpush1.msra.mxu0 0.0
    %2518 = vmatprep.subr.mxu0 0.0
    %2519 = vmatpush1.msra.mxu0 0.0
    %2520 = vmatprep.subr.mxu0 0.0
    %2521 = vmatpush1.msra.mxu0 0.0
    %2522 = vmatprep.subr.mxu0 0.0
    %2523 = vmatpush1.msra.mxu0 0.0
    %2524 = vmatprep.subr.mxu0 0.0
    %2525 = vmatpush1.msra.mxu0 0.0
    %2526 = vmatprep.subr.mxu0 0.0
    %2527 = vmatpush1.msra.mxu0 0.0
    %2528 = vmatprep.subr.mxu0 0.0
    %2529 = vmatpush1.msra.mxu0 0.0
    %2530 = vmatprep.mubr.f32.mxu0 0.0
    %2531 = vmatmul.mubr.f32.gmra.mrb[0].mxu0 %v2465
    %v2532 = vpop.f32.mrb[0].mxu0
    %v2533 = vadd.f32 %v355, %v2532
    %v2534 = vpop.f32.mrb[0].mxu0
    %v2535 = vadd.f32 %v359, %v2534
    %2536 = vdwg.mxu0
    %2537 = vmatprep.subr.mxu0 %v289
    %2538 = vmatpush1.msra.mxu0 %v288
    %2539 = vmatprep.subr.mxu0 %v293
    %2540 = vmatpush1.msra.mxu0 %v292
    %2541 = vmatprep.subr.mxu0 %v297
    %2542 = vmatpush1.msra.mxu0 %v296
    %2543 = vmatprep.subr.mxu0 %v301
    %2544 = vmatpush1.msra.mxu0 %v300
    %2545 = vmatprep.subr.mxu0 %v305
    %2546 = vmatpush1.msra.mxu0 %v304
    %2547 = vmatprep.subr.mxu0 %v309
    %2548 = vmatpush1.msra.mxu0 %v308
    %2549 = vmatprep.subr.mxu0 %v313
    %2550 = vmatpush1.msra.mxu0 %v312
    %2551 = vmatprep.subr.mxu0 %v317
    %2552 = vmatpush1.msra.mxu0 %v316
    %2553 = vmatprep.subr.mxu0 %v321
    %2554 = vmatpush1.msra.mxu0 %v320
    %2555 = vmatprep.subr.mxu0 %v325
    %2556 = vmatpush1.msra.mxu0 %v324
    %2557 = vmatprep.subr.mxu0 %v329
    %2558 = vmatpush1.msra.mxu0 %v328
    %2559 = vmatprep.subr.mxu0 %v333
    %2560 = vmatpush1.msra.mxu0 %v332
    %2561 = vmatprep.subr.mxu0 %v337
    %2562 = vmatpush1.msra.mxu0 %v336
    %2563 = vmatprep.subr.mxu0 %v341
    %2564 = vmatpush1.msra.mxu0 %v340
    %2565 = vmatprep.subr.mxu0 %v345
    %2566 = vmatpush1.msra.mxu0 %v344
    %2567 = vmatprep.subr.mxu0 %v349
    %2568 = vmatpush1.msra.mxu0 %v348
    %2569 = vmatprep.subr.mxu0 0.0
    %2570 = vmatpush1.msra.mxu0 0.0
    %2571 = vmatprep.subr.mxu0 0.0
    %2572 = vmatpush1.msra.mxu0 0.0
    %2573 = vmatprep.subr.mxu0 0.0
    %2574 = vmatpush1.msra.mxu0 0.0
    %2575 = vmatprep.subr.mxu0 0.0
    %2576 = vmatpush1.msra.mxu0 0.0
    %2577 = vmatprep.subr.mxu0 0.0
    %2578 = vmatpush1.msra.mxu0 0.0
    %2579 = vmatprep.subr.mxu0 0.0
    %2580 = vmatpush1.msra.mxu0 0.0
    %2581 = vmatprep.subr.mxu0 0.0
    %2582 = vmatpush1.msra.mxu0 0.0
    %2583 = vmatprep.subr.mxu0 0.0
    %2584 = vmatpush1.msra.mxu0 0.0
    %2585 = vmatprep.subr.mxu0 0.0
    %2586 = vmatpush1.msra.mxu0 0.0
    %2587 = vmatprep.subr.mxu0 0.0
    %2588 = vmatpush1.msra.mxu0 0.0
    %2589 = vmatprep.subr.mxu0 0.0
    %2590 = vmatpush1.msra.mxu0 0.0
    %2591 = vmatprep.subr.mxu0 0.0
    %2592 = vmatpush1.msra.mxu0 0.0
    %2593 = vmatprep.subr.mxu0 0.0
    %2594 = vmatpush1.msra.mxu0 0.0
    %2595 = vmatprep.subr.mxu0 0.0
    %2596 = vmatpush1.msra.mxu0 0.0
    %2597 = vmatprep.subr.mxu0 0.0
    %2598 = vmatpush1.msra.mxu0 0.0
    %2599 = vmatprep.subr.mxu0 0.0
    %2600 = vmatpush1.msra.mxu0 0.0
    %2601 = vmatprep.mubr.f32.mxu0 0.0
    %2602 = vmatmul.mubr.f32.gmra.mrb[0].mxu0 %v2465
    %v2603 = vpop.f32.mrb[0].mxu0
    %v2604 = vadd.f32 %v363, %v2603
    %v2605 = vpop.f32.mrb[0].mxu0
    %v2606 = vadd.f32 %v367, %v2605
    %2607 = vdwg.mxu0
    %2608 = vmatprep.subr.mxu0 %v515
    %2609 = vmatpush1.msra.mxu0 %v514
    %2610 = vmatprep.subr.mxu0 %v519
    %2611 = vmatpush1.msra.mxu0 %v518
    %2612 = vmatprep.subr.mxu0 %v523
    %2613 = vmatpush1.msra.mxu0 %v522
    %2614 = vmatprep.subr.mxu0 %v527
    %2615 = vmatpush1.msra.mxu0 %v526
    %2616 = vmatprep.subr.mxu0 %v531
    %2617 = vmatpush1.msra.mxu0 %v530
    %2618 = vmatprep.subr.mxu0 %v535
    %2619 = vmatpush1.msra.mxu0 %v534
    %2620 = vmatprep.subr.mxu0 %v539
    %2621 = vmatpush1.msra.mxu0 %v538
    %2622 = vmatprep.subr.mxu0 %v543
    %2623 = vmatpush1.msra.mxu0 %v542
    %2624 = vmatprep.subr.mxu0 %v547
    %2625 = vmatpush1.msra.mxu0 %v546
    %2626 = vmatprep.subr.mxu0 %v551
    %2627 = vmatpush1.msra.mxu0 %v550
    %2628 = vmatprep.subr.mxu0 %v555
    %2629 = vmatpush1.msra.mxu0 %v554
    %2630 = vmatprep.subr.mxu0 %v559
    %2631 = vmatpush1.msra.mxu0 %v558
    %2632 = vmatprep.subr.mxu0 %v563
    %2633 = vmatpush1.msra.mxu0 %v562
    %2634 = vmatprep.subr.mxu0 %v567
    %2635 = vmatpush1.msra.mxu0 %v566
    %2636 = vmatprep.subr.mxu0 %v571
    %2637 = vmatpush1.msra.mxu0 %v570
    %2638 = vmatprep.subr.mxu0 %v575
    %2639 = vmatpush1.msra.mxu0 %v574
    %2640 = vmatprep.subr.mxu0 0.0
    %2641 = vmatpush1.msra.mxu0 0.0
    %2642 = vmatprep.subr.mxu0 0.0
    %2643 = vmatpush1.msra.mxu0 0.0
    %2644 = vmatprep.subr.mxu0 0.0
    %2645 = vmatpush1.msra.mxu0 0.0
    %2646 = vmatprep.subr.mxu0 0.0
    %2647 = vmatpush1.msra.mxu0 0.0
    %2648 = vmatprep.subr.mxu0 0.0
    %2649 = vmatpush1.msra.mxu0 0.0
    %2650 = vmatprep.subr.mxu0 0.0
    %2651 = vmatpush1.msra.mxu0 0.0
    %2652 = vmatprep.subr.mxu0 0.0
    %2653 = vmatpush1.msra.mxu0 0.0
    %2654 = vmatprep.subr.mxu0 0.0
    %2655 = vmatpush1.msra.mxu0 0.0
    %2656 = vmatprep.subr.mxu0 0.0
    %2657 = vmatpush1.msra.mxu0 0.0
    %2658 = vmatprep.subr.mxu0 0.0
    %2659 = vmatpush1.msra.mxu0 0.0
    %2660 = vmatprep.subr.mxu0 0.0
    %2661 = vmatpush1.msra.mxu0 0.0
    %2662 = vmatprep.subr.mxu0 0.0
    %2663 = vmatpush1.msra.mxu0 0.0
    %2664 = vmatprep.subr.mxu0 0.0
    %2665 = vmatpush1.msra.mxu0 0.0
    %2666 = vmatprep.subr.mxu0 0.0
    %2667 = vmatpush1.msra.mxu0 0.0
    %2668 = vmatprep.subr.mxu0 0.0
    %2669 = vmatpush1.msra.mxu0 0.0
    %2670 = vmatprep.subr.mxu0 0.0
    %2671 = vmatpush1.msra.mxu0 0.0
    %2672 = vmatprep.mubr.f32.mxu0 0.0
    %2673 = vmatmul.mubr.f32.gmra.mrb[0].mxu0 %v2298
    %v2674 = vpop.f32.mrb[0].mxu0
    %v2675 = vadd.f32 0.0, %v2674
    %v2676 = vpop.f32.mrb[0].mxu0
    %v2677 = vadd.f32 0.0, %v2676
    %2678 = vdwg.mxu0
    %2679 = vmatprep.subr.mxu0 %v517
    %2680 = vmatpush1.msra.mxu0 %v516
    %2681 = vmatprep.subr.mxu0 %v521
    %2682 = vmatpush1.msra.mxu0 %v520
    %2683 = vmatprep.subr.mxu0 %v525
    %2684 = vmatpush1.msra.mxu0 %v524
    %2685 = vmatprep.subr.mxu0 %v529
    %2686 = vmatpush1.msra.mxu0 %v528
    %2687 = vmatprep.subr.mxu0 %v533
    %2688 = vmatpush1.msra.mxu0 %v532
    %2689 = vmatprep.subr.mxu0 %v537
    %2690 = vmatpush1.msra.mxu0 %v536
    %2691 = vmatprep.subr.mxu0 %v541
    %2692 = vmatpush1.msra.mxu0 %v540
    %2693 = vmatprep.subr.mxu0 %v545
    %2694 = vmatpush1.msra.mxu0 %v544
    %2695 = vmatprep.subr.mxu0 %v549
    %2696 = vmatpush1.msra.mxu0 %v548
    %2697 = vmatprep.subr.mxu0 %v553
    %2698 = vmatpush1.msra.mxu0 %v552
    %2699 = vmatprep.subr.mxu0 %v557
    %2700 = vmatpush1.msra.mxu0 %v556
    %2701 = vmatprep.subr.mxu0 %v561
    %2702 = vmatpush1.msra.mxu0 %v560
    %2703 = vmatprep.subr.mxu0 %v565
    %2704 = vmatpush1.msra.mxu0 %v564
    %2705 = vmatprep.subr.mxu0 %v569
    %2706 = vmatpush1.msra.mxu0 %v568
    %2707 = vmatprep.subr.mxu0 %v573
    %2708 = vmatpush1.msra.mxu0 %v572
    %2709 = vmatprep.subr.mxu0 %v577
    %2710 = vmatpush1.msra.mxu0 %v576
    %2711 = vmatprep.subr.mxu0 0.0
    %2712 = vmatpush1.msra.mxu0 0.0
    %2713 = vmatprep.subr.mxu0 0.0
    %2714 = vmatpush1.msra.mxu0 0.0
    %2715 = vmatprep.subr.mxu0 0.0
    %2716 = vmatpush1.msra.mxu0 0.0
    %2717 = vmatprep.subr.mxu0 0.0
    %2718 = vmatpush1.msra.mxu0 0.0
    %2719 = vmatprep.subr.mxu0 0.0
    %2720 = vmatpush1.msra.mxu0 0.0
    %2721 = vmatprep.subr.mxu0 0.0
    %2722 = vmatpush1.msra.mxu0 0.0
    %2723 = vmatprep.subr.mxu0 0.0
    %2724 = vmatpush1.msra.mxu0 0.0
    %2725 = vmatprep.subr.mxu0 0.0
    %2726 = vmatpush1.msra.mxu0 0.0
    %2727 = vmatprep.subr.mxu0 0.0
    %2728 = vmatpush1.msra.mxu0 0.0
    %2729 = vmatprep.subr.mxu0 0.0
    %2730 = vmatpush1.msra.mxu0 0.0
    %2731 = vmatprep.subr.mxu0 0.0
    %2732 = vmatpush1.msra.mxu0 0.0
    %2733 = vmatprep.subr.mxu0 0.0
    %2734 = vmatpush1.msra.mxu0 0.0
    %2735 = vmatprep.subr.mxu0 0.0
    %2736 = vmatpush1.msra.mxu0 0.0
    %2737 = vmatprep.subr.mxu0 0.0
    %2738 = vmatpush1.msra.mxu0 0.0
    %2739 = vmatprep.subr.mxu0 0.0
    %2740 = vmatpush1.msra.mxu0 0.0
    %2741 = vmatprep.subr.mxu0 0.0
    %2742 = vmatpush1.msra.mxu0 0.0
    %2743 = vmatprep.mubr.f32.mxu0 0.0
    %2744 = vmatmul.mubr.f32.gmra.mrb[0].mxu0 %v2298
    %v2745 = vpop.f32.mrb[0].mxu0
    %v2746 = vadd.f32 0.0, %v2745
    %v2747 = vpop.f32.mrb[0].mxu0
    %v2748 = vadd.f32 0.0, %v2747
    %2749 = vdwg.mxu0
    %v2754 = vrot.slane %v2675, 4
    %v2755 = vrot.slane %v2677, 4
    %v2756 = vrot.slane %v2746, 4
    %v2757 = vrot.slane %v2748, 4
    %v2762 = vadd.f32 %v207, %v2754
    %v2763 = vadd.f32 %v209, %v2755
    %v2764 = vadd.f32 %v278, %v2756
    %v2765 = vadd.f32 %v280, %v2757
    %v2766 = vxor.u32 %v2762, 2147483648
    %v2767 = vxor.u32 %v2763, 2147483648
    %v2768 = vxor.u32 %v2765, 2147483648
    %v2769 = vmul.f32 %v2766, 1.442695
    %v2770 = vpow.pop %v2769
    %v2771 = vmul.f32 %v2767, 1.442695
    %v2772 = vpow.pop %v2771
    %v2773 = vmul.f32 %v2768, 1.442695
    %v2774 = vpow.pop %v2773
    %v2775 = vadd.f32 %v2770, 1.0
    %v2776 = vadd.f32 %v2772, 1.0
    %v2777 = vadd.f32 %v2774, 1.0
    %v2778 = vrcp.pop %v2775
    %v2779 = vmul.f32 1.0, %v2778
    %v2780 = vrcp.pop %v2776
    %v2781 = vmul.f32 1.0, %v2780
    %v2782 = vrcp.pop %v2777
    %v2783 = vmul.f32 1.0, %v2782
    %v2784 = vtanh.pop %v2764
    %v2786 = vrot.slane %v2294, 7
    %v2788 = vmul.f32 %v2781, %v2786
    %v2789 = vmul.f32 %v2779, %v2784
    %v2790 = vadd.f32 %v2788, %v2789
    %v2791 = vtanh.pop %v2790
    %v2792 = vmul.f32 %v2783, %v2791
    %v2794 = vrot.slane %v2792, 4
    %2796 = vmatprep.subr.mxu0 %v749
    %2797 = vmatpush1.msra.mxu0 %v748
    %2798 = vmatprep.subr.mxu0 %v753
    %2799 = vmatpush1.msra.mxu0 %v752
    %2800 = vmatprep.subr.mxu0 %v757
    %2801 = vmatpush1.msra.mxu0 %v756
    %2802 = vmatprep.subr.mxu0 %v761
    %2803 = vmatpush1.msra.mxu0 %v760
    %2804 = vmatprep.subr.mxu0 %v765
    %2805 = vmatpush1.msra.mxu0 %v764
    %2806 = vmatprep.subr.mxu0 %v769
    %2807 = vmatpush1.msra.mxu0 %v768
    %2808 = vmatprep.subr.mxu0 %v773
    %2809 = vmatpush1.msra.mxu0 %v772
    %2810 = vmatprep.subr.mxu0 %v777
    %2811 = vmatpush1.msra.mxu0 %v776
    %2812 = vmatprep.subr.mxu0 %v781
    %2813 = vmatpush1.msra.mxu0 %v780
    %2814 = vmatprep.subr.mxu0 %v785
    %2815 = vmatpush1.msra.mxu0 %v784
    %2816 = vmatprep.subr.mxu0 %v789
    %2817 = vmatpush1.msra.mxu0 %v788
    %2818 = vmatprep.subr.mxu0 %v793
    %2819 = vmatpush1.msra.mxu0 %v792
    %2820 = vmatprep.subr.mxu0 %v797
    %2821 = vmatpush1.msra.mxu0 %v796
    %2822 = vmatprep.subr.mxu0 %v801
    %2823 = vmatpush1.msra.mxu0 %v800
    %2824 = vmatprep.subr.mxu0 %v805
    %2825 = vmatpush1.msra.mxu0 %v804
    %2826 = vmatprep.subr.mxu0 %v809
    %2827 = vmatpush1.msra.mxu0 %v808
    %2828 = vmatprep.subr.mxu0 0.0
    %2829 = vmatpush1.msra.mxu0 0.0
    %2830 = vmatprep.subr.mxu0 0.0
    %2831 = vmatpush1.msra.mxu0 0.0
    %2832 = vmatprep.subr.mxu0 0.0
    %2833 = vmatpush1.msra.mxu0 0.0
    %2834 = vmatprep.subr.mxu0 0.0
    %2835 = vmatpush1.msra.mxu0 0.0
    %2836 = vmatprep.subr.mxu0 0.0
    %2837 = vmatpush1.msra.mxu0 0.0
    %2838 = vmatprep.subr.mxu0 0.0
    %2839 = vmatpush1.msra.mxu0 0.0
    %2840 = vmatprep.subr.mxu0 0.0
    %2841 = vmatpush1.msra.mxu0 0.0
    %2842 = vmatprep.subr.mxu0 0.0
    %2843 = vmatpush1.msra.mxu0 0.0
    %2844 = vmatprep.subr.mxu0 0.0
    %2845 = vmatpush1.msra.mxu0 0.0
    %2846 = vmatprep.subr.mxu0 0.0
    %2847 = vmatpush1.msra.mxu0 0.0
    %2848 = vmatprep.subr.mxu0 0.0
    %2849 = vmatpush1.msra.mxu0 0.0
    %2850 = vmatprep.subr.mxu0 0.0
    %2851 = vmatpush1.msra.mxu0 0.0
    %2852 = vmatprep.subr.mxu0 0.0
    %2853 = vmatpush1.msra.mxu0 0.0
    %2854 = vmatprep.subr.mxu0 0.0
    %2855 = vmatpush1.msra.mxu0 0.0
    %2856 = vmatprep.subr.mxu0 0.0
    %2857 = vmatpush1.msra.mxu0 0.0
    %2858 = vmatprep.subr.mxu0 0.0
    %2859 = vmatpush1.msra.mxu0 0.0
    %2860 = vmatprep.mubr.f32.mxu0 0.0
    %2861 = vmatmul.mubr.f32.gmra.mrb[0].mxu0 %v2794
    %v2862 = vpop.f32.mrb[0].mxu0
    %v2863 = vadd.f32 %v2533, %v2862
    %v2864 = vpop.f32.mrb[0].mxu0
    %v2865 = vadd.f32 %v2535, %v2864
    %2866 = vdwg.mxu0
    %2867 = vmatprep.subr.mxu0 %v751
    %2868 = vmatpush1.msra.mxu0 %v750
    %2869 = vmatprep.subr.mxu0 %v755
    %2870 = vmatpush1.msra.mxu0 %v754
    %2871 = vmatprep.subr.mxu0 %v759
    %2872 = vmatpush1.msra.mxu0 %v758
    %2873 = vmatprep.subr.mxu0 %v763
    %2874 = vmatpush1.msra.mxu0 %v762
    %2875 = vmatprep.subr.mxu0 %v767
    %2876 = vmatpush1.msra.mxu0 %v766
    %2877 = vmatprep.subr.mxu0 %v771
    %2878 = vmatpush1.msra.mxu0 %v770
    %2879 = vmatprep.subr.mxu0 %v775
    %2880 = vmatpush1.msra.mxu0 %v774
    %2881 = vmatprep.subr.mxu0 %v779
    %2882 = vmatpush1.msra.mxu0 %v778
    %2883 = vmatprep.subr.mxu0 %v783
    %2884 = vmatpush1.msra.mxu0 %v782
    %2885 = vmatprep.subr.mxu0 %v787
    %2886 = vmatpush1.msra.mxu0 %v786
    %2887 = vmatprep.subr.mxu0 %v791
    %2888 = vmatpush1.msra.mxu0 %v790
    %2889 = vmatprep.subr.mxu0 %v795
    %2890 = vmatpush1.msra.mxu0 %v794
    %2891 = vmatprep.subr.mxu0 %v799
    %2892 = vmatpush1.msra.mxu0 %v798
    %2893 = vmatprep.subr.mxu0 %v803
    %2894 = vmatpush1.msra.mxu0 %v802
    %2895 = vmatprep.subr.mxu0 %v807
    %2896 = vmatpush1.msra.mxu0 %v806
    %2897 = vmatprep.subr.mxu0 %v811
    %2898 = vmatpush1.msra.mxu0 %v810
    %2899 = vmatprep.subr.mxu0 0.0
    %2900 = vmatpush1.msra.mxu0 0.0
    %2901 = vmatprep.subr.mxu0 0.0
    %2902 = vmatpush1.msra.mxu0 0.0
    %2903 = vmatprep.subr.mxu0 0.0
    %2904 = vmatpush1.msra.mxu0 0.0
    %2905 = vmatprep.subr.mxu0 0.0
    %2906 = vmatpush1.msra.mxu0 0.0
    %2907 = vmatprep.subr.mxu0 0.0
    %2908 = vmatpush1.msra.mxu0 0.0
    %2909 = vmatprep.subr.mxu0 0.0
    %2910 = vmatpush1.msra.mxu0 0.0
    %2911 = vmatprep.subr.mxu0 0.0
    %2912 = vmatpush1.msra.mxu0 0.0
    %2913 = vmatprep.subr.mxu0 0.0
    %2914 = vmatpush1.msra.mxu0 0.0
    %2915 = vmatprep.subr.mxu0 0.0
    %2916 = vmatpush1.msra.mxu0 0.0
    %2917 = vmatprep.subr.mxu0 0.0
    %2918 = vmatpush1.msra.mxu0 0.0
    %2919 = vmatprep.subr.mxu0 0.0
    %2920 = vmatpush1.msra.mxu0 0.0
    %2921 = vmatprep.subr.mxu0 0.0
    %2922 = vmatpush1.msra.mxu0 0.0
    %2923 = vmatprep.subr.mxu0 0.0
    %2924 = vmatpush1.msra.mxu0 0.0
    %2925 = vmatprep.subr.mxu0 0.0
    %2926 = vmatpush1.msra.mxu0 0.0
    %2927 = vmatprep.subr.mxu0 0.0
    %2928 = vmatpush1.msra.mxu0 0.0
    %2929 = vmatprep.subr.mxu0 0.0
    %2930 = vmatpush1.msra.mxu0 0.0
    %2931 = vmatprep.mubr.f32.mxu0 0.0
    %2932 = vmatmul.mubr.f32.gmra.mrb[0].mxu0 %v2794
    %v2933 = vpop.f32.mrb[0].mxu0
    %v2934 = vadd.f32 %v2604, %v2933
    %v2935 = vpop.f32.mrb[0].mxu0
    %v2936 = vadd.f32 %v2606, %v2935
    %2937 = vdwg.mxu0
    %v2938 = vxor.u32 %v2863, 2147483648
    %v2939 = vxor.u32 %v2865, 2147483648
    %v2940 = vxor.u32 %v2936, 2147483648
    %v2941 = vmul.f32 %v2938, 1.442695
    %v2942 = vpow.pop %v2941
    %v2943 = vmul.f32 %v2939, 1.442695
    %v2944 = vpow.pop %v2943
    %v2945 = vmul.f32 %v2940, 1.442695
    %v2946 = vpow.pop %v2945
    %v2947 = vadd.f32 %v2942, 1.0
    %v2948 = vadd.f32 %v2944, 1.0
    %v2949 = vadd.f32 %v2946, 1.0
    %v2950 = vrcp.pop %v2947
    %v2951 = vmul.f32 1.0, %v2950
    %v2952 = vrcp.pop %v2948
    %v2953 = vmul.f32 1.0, %v2952
    %v2954 = vrcp.pop %v2949
    %v2955 = vmul.f32 1.0, %v2954
    %v2956 = vtanh.pop %v2934
    %v2957 = vmul.f32 %v2953, %v2463
    %v2958 = vmul.f32 %v2951, %v2956
    %v2959 = vadd.f32 %v2957, %v2958
    %v2960 = vtanh.pop %v2959
    %v2961 = vmul.f32 %v2955, %v2960
    %2962 = vmatprep.subr.mxu0 %v287
    %2963 = vmatpush1.msra.mxu0 %v286
    %2964 = vmatprep.subr.mxu0 %v291
    %2965 = vmatpush1.msra.mxu0 %v290
    %2966 = vmatprep.subr.mxu0 %v295
    %2967 = vmatpush1.msra.mxu0 %v294
    %2968 = vmatprep.subr.mxu0 %v299
    %2969 = vmatpush1.msra.mxu0 %v298
    %2970 = vmatprep.subr.mxu0 %v303
    %2971 = vmatpush1.msra.mxu0 %v302
    %2972 = vmatprep.subr.mxu0 %v307
    %2973 = vmatpush1.msra.mxu0 %v306
    %2974 = vmatprep.subr.mxu0 %v311
    %2975 = vmatpush1.msra.mxu0 %v310
    %2976 = vmatprep.subr.mxu0 %v315
    %2977 = vmatpush1.msra.mxu0 %v314
    %2978 = vmatprep.subr.mxu0 %v319
    %2979 = vmatpush1.msra.mxu0 %v318
    %2980 = vmatprep.subr.mxu0 %v323
    %2981 = vmatpush1.msra.mxu0 %v322
    %2982 = vmatprep.subr.mxu0 %v327
    %2983 = vmatpush1.msra.mxu0 %v326
    %2984 = vmatprep.subr.mxu0 %v331
    %2985 = vmatpush1.msra.mxu0 %v330
    %2986 = vmatprep.subr.mxu0 %v335
    %2987 = vmatpush1.msra.mxu0 %v334
    %2988 = vmatprep.subr.mxu0 %v339
    %2989 = vmatpush1.msra.mxu0 %v338
    %2990 = vmatprep.subr.mxu0 %v343
    %2991 = vmatpush1.msra.mxu0 %v342
    %2992 = vmatprep.subr.mxu0 %v347
    %2993 = vmatpush1.msra.mxu0 %v346
    %2994 = vmatprep.subr.mxu0 0.0
    %2995 = vmatpush1.msra.mxu0 0.0
    %2996 = vmatprep.subr.mxu0 0.0
    %2997 = vmatpush1.msra.mxu0 0.0
    %2998 = vmatprep.subr.mxu0 0.0
    %2999 = vmatpush1.msra.mxu0 0.0
    %3000 = vmatprep.subr.mxu0 0.0
    %3001 = vmatpush1.msra.mxu0 0.0
    %3002 = vmatprep.subr.mxu0 0.0
    %3003 = vmatpush1.msra.mxu0 0.0
    %3004 = vmatprep.subr.mxu0 0.0
    %3005 = vmatpush1.msra.mxu0 0.0
    %3006 = vmatprep.subr.mxu0 0.0
    %3007 = vmatpush1.msra.mxu0 0.0
    %3008 = vmatprep.subr.mxu0 0.0
    %3009 = vmatpush1.msra.mxu0 0.0
    %3010 = vmatprep.subr.mxu0 0.0
    %3011 = vmatpush1.msra.mxu0 0.0
    %3012 = vmatprep.subr.mxu0 0.0
    %3013 = vmatpush1.msra.mxu0 0.0
    %3014 = vmatprep.subr.mxu0 0.0
    %3015 = vmatpush1.msra.mxu0 0.0
    %3016 = vmatprep.subr.mxu0 0.0
    %3017 = vmatpush1.msra.mxu0 0.0
    %3018 = vmatprep.subr.mxu0 0.0
    %3019 = vmatpush1.msra.mxu0 0.0
    %3020 = vmatprep.subr.mxu0 0.0
    %3021 = vmatpush1.msra.mxu0 0.0
    %3022 = vmatprep.subr.mxu0 0.0
    %3023 = vmatpush1.msra.mxu0 0.0
    %3024 = vmatprep.subr.mxu0 0.0
    %3025 = vmatpush1.msra.mxu0 0.0
    %3026 = vmatprep.mubr.f32.mxu0 0.0
    %3027 = vmatmul.mubr.f32.gmra.mrb[0].mxu0 %v2961
    %v3028 = vpop.f32.mrb[0].mxu0
    %v3029 = vadd.f32 %v355, %v3028
    %v3030 = vpop.f32.mrb[0].mxu0
    %v3031 = vadd.f32 %v359, %v3030
    %3032 = vdwg.mxu0
    %3033 = vmatprep.subr.mxu0 %v289
    %3034 = vmatpush1.msra.mxu0 %v288
    %3035 = vmatprep.subr.mxu0 %v293
    %3036 = vmatpush1.msra.mxu0 %v292
    %3037 = vmatprep.subr.mxu0 %v297
    %3038 = vmatpush1.msra.mxu0 %v296
    %3039 = vmatprep.subr.mxu0 %v301
    %3040 = vmatpush1.msra.mxu0 %v300
    %3041 = vmatprep.subr.mxu0 %v305
    %3042 = vmatpush1.msra.mxu0 %v304
    %3043 = vmatprep.subr.mxu0 %v309
    %3044 = vmatpush1.msra.mxu0 %v308
    %3045 = vmatprep.subr.mxu0 %v313
    %3046 = vmatpush1.msra.mxu0 %v312
    %3047 = vmatprep.subr.mxu0 %v317
    %3048 = vmatpush1.msra.mxu0 %v316
    %3049 = vmatprep.subr.mxu0 %v321
    %3050 = vmatpush1.msra.mxu0 %v320
    %3051 = vmatprep.subr.mxu0 %v325
    %3052 = vmatpush1.msra.mxu0 %v324
    %3053 = vmatprep.subr.mxu0 %v329
    %3054 = vmatpush1.msra.mxu0 %v328
    %3055 = vmatprep.subr.mxu0 %v333
    %3056 = vmatpush1.msra.mxu0 %v332
    %3057 = vmatprep.subr.mxu0 %v337
    %3058 = vmatpush1.msra.mxu0 %v336
    %3059 = vmatprep.subr.mxu0 %v341
    %3060 = vmatpush1.msra.mxu0 %v340
    %3061 = vmatprep.subr.mxu0 %v345
    %3062 = vmatpush1.msra.mxu0 %v344
    %3063 = vmatprep.subr.mxu0 %v349
    %3064 = vmatpush1.msra.mxu0 %v348
    %3065 = vmatprep.subr.mxu0 0.0
    %3066 = vmatpush1.msra.mxu0 0.0
    %3067 = vmatprep.subr.mxu0 0.0
    %3068 = vmatpush1.msra.mxu0 0.0
    %3069 = vmatprep.subr.mxu0 0.0
    %3070 = vmatpush1.msra.mxu0 0.0
    %3071 = vmatprep.subr.mxu0 0.0
    %3072 = vmatpush1.msra.mxu0 0.0
    %3073 = vmatprep.subr.mxu0 0.0
    %3074 = vmatpush1.msra.mxu0 0.0
    %3075 = vmatprep.subr.mxu0 0.0
    %3076 = vmatpush1.msra.mxu0 0.0
    %3077 = vmatprep.subr.mxu0 0.0
    %3078 = vmatpush1.msra.mxu0 0.0
    %3079 = vmatprep.subr.mxu0 0.0
    %3080 = vmatpush1.msra.mxu0 0.0
    %3081 = vmatprep.subr.mxu0 0.0
    %3082 = vmatpush1.msra.mxu0 0.0
    %3083 = vmatprep.subr.mxu0 0.0
    %3084 = vmatpush1.msra.mxu0 0.0
    %3085 = vmatprep.subr.mxu0 0.0
    %3086 = vmatpush1.msra.mxu0 0.0
    %3087 = vmatprep.subr.mxu0 0.0
    %3088 = vmatpush1.msra.mxu0 0.0
    %3089 = vmatprep.subr.mxu0 0.0
    %3090 = vmatpush1.msra.mxu0 0.0
    %3091 = vmatprep.subr.mxu0 0.0
    %3092 = vmatpush1.msra.mxu0 0.0
    %3093 = vmatprep.subr.mxu0 0.0
    %3094 = vmatpush1.msra.mxu0 0.0
    %3095 = vmatprep.subr.mxu0 0.0
    %3096 = vmatpush1.msra.mxu0 0.0
    %3097 = vmatprep.mubr.f32.mxu0 0.0
    %3098 = vmatmul.mubr.f32.gmra.mrb[0].mxu0 %v2961
    %v3099 = vpop.f32.mrb[0].mxu0
    %v3100 = vadd.f32 %v363, %v3099
    %v3101 = vpop.f32.mrb[0].mxu0
    %v3102 = vadd.f32 %v367, %v3101
    %3103 = vdwg.mxu0
    %3104 = vmatprep.subr.mxu0 %v515
    %3105 = vmatpush1.msra.mxu0 %v514
    %3106 = vmatprep.subr.mxu0 %v519
    %3107 = vmatpush1.msra.mxu0 %v518
    %3108 = vmatprep.subr.mxu0 %v523
    %3109 = vmatpush1.msra.mxu0 %v522
    %3110 = vmatprep.subr.mxu0 %v527
    %3111 = vmatpush1.msra.mxu0 %v526
    %3112 = vmatprep.subr.mxu0 %v531
    %3113 = vmatpush1.msra.mxu0 %v530
    %3114 = vmatprep.subr.mxu0 %v535
    %3115 = vmatpush1.msra.mxu0 %v534
    %3116 = vmatprep.subr.mxu0 %v539
    %3117 = vmatpush1.msra.mxu0 %v538
    %3118 = vmatprep.subr.mxu0 %v543
    %3119 = vmatpush1.msra.mxu0 %v542
    %3120 = vmatprep.subr.mxu0 %v547
    %3121 = vmatpush1.msra.mxu0 %v546
    %3122 = vmatprep.subr.mxu0 %v551
    %3123 = vmatpush1.msra.mxu0 %v550
    %3124 = vmatprep.subr.mxu0 %v555
    %3125 = vmatpush1.msra.mxu0 %v554
    %3126 = vmatprep.subr.mxu0 %v559
    %3127 = vmatpush1.msra.mxu0 %v558
    %3128 = vmatprep.subr.mxu0 %v563
    %3129 = vmatpush1.msra.mxu0 %v562
    %3130 = vmatprep.subr.mxu0 %v567
    %3131 = vmatpush1.msra.mxu0 %v566
    %3132 = vmatprep.subr.mxu0 %v571
    %3133 = vmatpush1.msra.mxu0 %v570
    %3134 = vmatprep.subr.mxu0 %v575
    %3135 = vmatpush1.msra.mxu0 %v574
    %3136 = vmatprep.subr.mxu0 0.0
    %3137 = vmatpush1.msra.mxu0 0.0
    %3138 = vmatprep.subr.mxu0 0.0
    %3139 = vmatpush1.msra.mxu0 0.0
    %3140 = vmatprep.subr.mxu0 0.0
    %3141 = vmatpush1.msra.mxu0 0.0
    %3142 = vmatprep.subr.mxu0 0.0
    %3143 = vmatpush1.msra.mxu0 0.0
    %3144 = vmatprep.subr.mxu0 0.0
    %3145 = vmatpush1.msra.mxu0 0.0
    %3146 = vmatprep.subr.mxu0 0.0
    %3147 = vmatpush1.msra.mxu0 0.0
    %3148 = vmatprep.subr.mxu0 0.0
    %3149 = vmatpush1.msra.mxu0 0.0
    %3150 = vmatprep.subr.mxu0 0.0
    %3151 = vmatpush1.msra.mxu0 0.0
    %3152 = vmatprep.subr.mxu0 0.0
    %3153 = vmatpush1.msra.mxu0 0.0
    %3154 = vmatprep.subr.mxu0 0.0
    %3155 = vmatpush1.msra.mxu0 0.0
    %3156 = vmatprep.subr.mxu0 0.0
    %3157 = vmatpush1.msra.mxu0 0.0
    %3158 = vmatprep.subr.mxu0 0.0
    %3159 = vmatpush1.msra.mxu0 0.0
    %3160 = vmatprep.subr.mxu0 0.0
    %3161 = vmatpush1.msra.mxu0 0.0
    %3162 = vmatprep.subr.mxu0 0.0
    %3163 = vmatpush1.msra.mxu0 0.0
    %3164 = vmatprep.subr.mxu0 0.0
    %3165 = vmatpush1.msra.mxu0 0.0
    %3166 = vmatprep.subr.mxu0 0.0
    %3167 = vmatpush1.msra.mxu0 0.0
    %3168 = vmatprep.mubr.f32.mxu0 0.0
    %3169 = vmatmul.mubr.f32.gmra.mrb[0].mxu0 %v2794
    %v3170 = vpop.f32.mrb[0].mxu0
    %v3171 = vadd.f32 0.0, %v3170
    %v3172 = vpop.f32.mrb[0].mxu0
    %v3173 = vadd.f32 0.0, %v3172
    %3174 = vdwg.mxu0
    %3175 = vmatprep.subr.mxu0 %v517
    %3176 = vmatpush1.msra.mxu0 %v516
    %3177 = vmatprep.subr.mxu0 %v521
    %3178 = vmatpush1.msra.mxu0 %v520
    %3179 = vmatprep.subr.mxu0 %v525
    %3180 = vmatpush1.msra.mxu0 %v524
    %3181 = vmatprep.subr.mxu0 %v529
    %3182 = vmatpush1.msra.mxu0 %v528
    %3183 = vmatprep.subr.mxu0 %v533
    %3184 = vmatpush1.msra.mxu0 %v532
    %3185 = vmatprep.subr.mxu0 %v537
    %3186 = vmatpush1.msra.mxu0 %v536
    %3187 = vmatprep.subr.mxu0 %v541
    %3188 = vmatpush1.msra.mxu0 %v540
    %3189 = vmatprep.subr.mxu0 %v545
    %3190 = vmatpush1.msra.mxu0 %v544
    %3191 = vmatprep.subr.mxu0 %v549
    %3192 = vmatpush1.msra.mxu0 %v548
    %3193 = vmatprep.subr.mxu0 %v553
    %3194 = vmatpush1.msra.mxu0 %v552
    %3195 = vmatprep.subr.mxu0 %v557
    %3196 = vmatpush1.msra.mxu0 %v556
    %3197 = vmatprep.subr.mxu0 %v561
    %3198 = vmatpush1.msra.mxu0 %v560
    %3199 = vmatprep.subr.mxu0 %v565
    %3200 = vmatpush1.msra.mxu0 %v564
    %3201 = vmatprep.subr.mxu0 %v569
    %3202 = vmatpush1.msra.mxu0 %v568
    %3203 = vmatprep.subr.mxu0 %v573
    %3204 = vmatpush1.msra.mxu0 %v572
    %3205 = vmatprep.subr.mxu0 %v577
    %3206 = vmatpush1.msra.mxu0 %v576
    %3207 = vmatprep.subr.mxu0 0.0
    %3208 = vmatpush1.msra.mxu0 0.0
    %3209 = vmatprep.subr.mxu0 0.0
    %3210 = vmatpush1.msra.mxu0 0.0
    %3211 = vmatprep.subr.mxu0 0.0
    %3212 = vmatpush1.msra.mxu0 0.0
    %3213 = vmatprep.subr.mxu0 0.0
    %3214 = vmatpush1.msra.mxu0 0.0
    %3215 = vmatprep.subr.mxu0 0.0
    %3216 = vmatpush1.msra.mxu0 0.0
    %3217 = vmatprep.subr.mxu0 0.0
    %3218 = vmatpush1.msra.mxu0 0.0
    %3219 = vmatprep.subr.mxu0 0.0
    %3220 = vmatpush1.msra.mxu0 0.0
    %3221 = vmatprep.subr.mxu0 0.0
    %3222 = vmatpush1.msra.mxu0 0.0
    %3223 = vmatprep.subr.mxu0 0.0
    %3224 = vmatpush1.msra.mxu0 0.0
    %3225 = vmatprep.subr.mxu0 0.0
    %3226 = vmatpush1.msra.mxu0 0.0
    %3227 = vmatprep.subr.mxu0 0.0
    %3228 = vmatpush1.msra.mxu0 0.0
    %3229 = vmatprep.subr.mxu0 0.0
    %3230 = vmatpush1.msra.mxu0 0.0
    %3231 = vmatprep.subr.mxu0 0.0
    %3232 = vmatpush1.msra.mxu0 0.0
    %3233 = vmatprep.subr.mxu0 0.0
    %3234 = vmatpush1.msra.mxu0 0.0
    %3235 = vmatprep.subr.mxu0 0.0
    %3236 = vmatpush1.msra.mxu0 0.0
    %3237 = vmatprep.subr.mxu0 0.0
    %3238 = vmatpush1.msra.mxu0 0.0
    %3239 = vmatprep.mubr.f32.mxu0 0.0
    %3240 = vmatmul.mubr.f32.gmra.mrb[0].mxu0 %v2794
    %v3241 = vpop.f32.mrb[0].mxu0
    %v3242 = vadd.f32 0.0, %v3241
    %v3243 = vpop.f32.mrb[0].mxu0
    %v3244 = vadd.f32 0.0, %v3243
    %3245 = vdwg.mxu0
    %v3250 = vrot.slane %v3171, 3
    %v3251 = vrot.slane %v3173, 3
    %v3252 = vrot.slane %v3242, 3
    %v3253 = vrot.slane %v3244, 3
    %v3258 = vadd.f32 %v207, %v3250
    %v3259 = vadd.f32 %v209, %v3251
    %v3260 = vadd.f32 %v278, %v3252
    %v3261 = vadd.f32 %v280, %v3253
    %v3262 = vxor.u32 %v3258, 2147483648
    %v3263 = vxor.u32 %v3259, 2147483648
    %v3264 = vxor.u32 %v3261, 2147483648
    %v3265 = vmul.f32 %v3262, 1.442695
    %v3266 = vpow.pop %v3265
    %v3267 = vmul.f32 %v3263, 1.442695
    %v3268 = vpow.pop %v3267
    %v3269 = vmul.f32 %v3264, 1.442695
    %v3270 = vpow.pop %v3269
    %v3271 = vadd.f32 %v3266, 1.0
    %v3272 = vadd.f32 %v3268, 1.0
    %v3273 = vadd.f32 %v3270, 1.0
    %v3274 = vrcp.pop %v3271
    %v3275 = vmul.f32 1.0, %v3274
    %v3276 = vrcp.pop %v3272
    %v3277 = vmul.f32 1.0, %v3276
    %v3278 = vrcp.pop %v3273
    %v3279 = vmul.f32 1.0, %v3278
    %v3280 = vtanh.pop %v3260
    %v3282 = vrot.slane %v2790, 7
    %v3284 = vmul.f32 %v3277, %v3282
    %v3285 = vmul.f32 %v3275, %v3280
    %v3286 = vadd.f32 %v3284, %v3285
    %v3287 = vtanh.pop %v3286
    %v3288 = vmul.f32 %v3279, %v3287
    %v3290 = vrot.slane %v3288, 5
    %3292 = vmatprep.subr.mxu0 %v749
    %3293 = vmatpush1.msra.mxu0 %v748
    %3294 = vmatprep.subr.mxu0 %v753
    %3295 = vmatpush1.msra.mxu0 %v752
    %3296 = vmatprep.subr.mxu0 %v757
    %3297 = vmatpush1.msra.mxu0 %v756
    %3298 = vmatprep.subr.mxu0 %v761
    %3299 = vmatpush1.msra.mxu0 %v760
    %3300 = vmatprep.subr.mxu0 %v765
    %3301 = vmatpush1.msra.mxu0 %v764
    %3302 = vmatprep.subr.mxu0 %v769
    %3303 = vmatpush1.msra.mxu0 %v768
    %3304 = vmatprep.subr.mxu0 %v773
    %3305 = vmatpush1.msra.mxu0 %v772
    %3306 = vmatprep.subr.mxu0 %v777
    %3307 = vmatpush1.msra.mxu0 %v776
    %3308 = vmatprep.subr.mxu0 %v781
    %3309 = vmatpush1.msra.mxu0 %v780
    %3310 = vmatprep.subr.mxu0 %v785
    %3311 = vmatpush1.msra.mxu0 %v784
    %3312 = vmatprep.subr.mxu0 %v789
    %3313 = vmatpush1.msra.mxu0 %v788
    %3314 = vmatprep.subr.mxu0 %v793
    %3315 = vmatpush1.msra.mxu0 %v792
    %3316 = vmatprep.subr.mxu0 %v797
    %3317 = vmatpush1.msra.mxu0 %v796
    %3318 = vmatprep.subr.mxu0 %v801
    %3319 = vmatpush1.msra.mxu0 %v800
    %3320 = vmatprep.subr.mxu0 %v805
    %3321 = vmatpush1.msra.mxu0 %v804
    %3322 = vmatprep.subr.mxu0 %v809
    %3323 = vmatpush1.msra.mxu0 %v808
    %3324 = vmatprep.subr.mxu0 0.0
    %3325 = vmatpush1.msra.mxu0 0.0
    %3326 = vmatprep.subr.mxu0 0.0
    %3327 = vmatpush1.msra.mxu0 0.0
    %3328 = vmatprep.subr.mxu0 0.0
    %3329 = vmatpush1.msra.mxu0 0.0
    %3330 = vmatprep.subr.mxu0 0.0
    %3331 = vmatpush1.msra.mxu0 0.0
    %3332 = vmatprep.subr.mxu0 0.0
    %3333 = vmatpush1.msra.mxu0 0.0
    %3334 = vmatprep.subr.mxu0 0.0
    %3335 = vmatpush1.msra.mxu0 0.0
    %3336 = vmatprep.subr.mxu0 0.0
    %3337 = vmatpush1.msra.mxu0 0.0
    %3338 = vmatprep.subr.mxu0 0.0
    %3339 = vmatpush1.msra.mxu0 0.0
    %3340 = vmatprep.subr.mxu0 0.0
    %3341 = vmatpush1.msra.mxu0 0.0
    %3342 = vmatprep.subr.mxu0 0.0
    %3343 = vmatpush1.msra.mxu0 0.0
    %3344 = vmatprep.subr.mxu0 0.0
    %3345 = vmatpush1.msra.mxu0 0.0
    %3346 = vmatprep.subr.mxu0 0.0
    %3347 = vmatpush1.msra.mxu0 0.0
    %3348 = vmatprep.subr.mxu0 0.0
    %3349 = vmatpush1.msra.mxu0 0.0
    %3350 = vmatprep.subr.mxu0 0.0
    %3351 = vmatpush1.msra.mxu0 0.0
    %3352 = vmatprep.subr.mxu0 0.0
    %3353 = vmatpush1.msra.mxu0 0.0
    %3354 = vmatprep.subr.mxu0 0.0
    %3355 = vmatpush1.msra.mxu0 0.0
    %3356 = vmatprep.mubr.f32.mxu0 0.0
    %3357 = vmatmul.mubr.f32.gmra.mrb[0].mxu0 %v3290
    %v3358 = vpop.f32.mrb[0].mxu0
    %v3359 = vadd.f32 %v3029, %v3358
    %v3360 = vpop.f32.mrb[0].mxu0
    %v3361 = vadd.f32 %v3031, %v3360
    %3362 = vdwg.mxu0
    %3363 = vmatprep.subr.mxu0 %v751
    %3364 = vmatpush1.msra.mxu0 %v750
    %3365 = vmatprep.subr.mxu0 %v755
    %3366 = vmatpush1.msra.mxu0 %v754
    %3367 = vmatprep.subr.mxu0 %v759
    %3368 = vmatpush1.msra.mxu0 %v758
    %3369 = vmatprep.subr.mxu0 %v763
    %3370 = vmatpush1.msra.mxu0 %v762
    %3371 = vmatprep.subr.mxu0 %v767
    %3372 = vmatpush1.msra.mxu0 %v766
    %3373 = vmatprep.subr.mxu0 %v771
    %3374 = vmatpush1.msra.mxu0 %v770
    %3375 = vmatprep.subr.mxu0 %v775
    %3376 = vmatpush1.msra.mxu0 %v774
    %3377 = vmatprep.subr.mxu0 %v779
    %3378 = vmatpush1.msra.mxu0 %v778
    %3379 = vmatprep.subr.mxu0 %v783
    %3380 = vmatpush1.msra.mxu0 %v782
    %3381 = vmatprep.subr.mxu0 %v787
    %3382 = vmatpush1.msra.mxu0 %v786
    %3383 = vmatprep.subr.mxu0 %v791
    %3384 = vmatpush1.msra.mxu0 %v790
    %3385 = vmatprep.subr.mxu0 %v795
    %3386 = vmatpush1.msra.mxu0 %v794
    %3387 = vmatprep.subr.mxu0 %v799
    %3388 = vmatpush1.msra.mxu0 %v798
    %3389 = vmatprep.subr.mxu0 %v803
    %3390 = vmatpush1.msra.mxu0 %v802
    %3391 = vmatprep.subr.mxu0 %v807
    %3392 = vmatpush1.msra.mxu0 %v806
    %3393 = vmatprep.subr.mxu0 %v811
    %3394 = vmatpush1.msra.mxu0 %v810
    %3395 = vmatprep.subr.mxu0 0.0
    %3396 = vmatpush1.msra.mxu0 0.0
    %3397 = vmatprep.subr.mxu0 0.0
    %3398 = vmatpush1.msra.mxu0 0.0
    %3399 = vmatprep.subr.mxu0 0.0
    %3400 = vmatpush1.msra.mxu0 0.0
    %3401 = vmatprep.subr.mxu0 0.0
    %3402 = vmatpush1.msra.mxu0 0.0
    %3403 = vmatprep.subr.mxu0 0.0
    %3404 = vmatpush1.msra.mxu0 0.0
    %3405 = vmatprep.subr.mxu0 0.0
    %3406 = vmatpush1.msra.mxu0 0.0
    %3407 = vmatprep.subr.mxu0 0.0
    %3408 = vmatpush1.msra.mxu0 0.0
    %3409 = vmatprep.subr.mxu0 0.0
    %3410 = vmatpush1.msra.mxu0 0.0
    %3411 = vmatprep.subr.mxu0 0.0
    %3412 = vmatpush1.msra.mxu0 0.0
    %3413 = vmatprep.subr.mxu0 0.0
    %3414 = vmatpush1.msra.mxu0 0.0
    %3415 = vmatprep.subr.mxu0 0.0
    %3416 = vmatpush1.msra.mxu0 0.0
    %3417 = vmatprep.subr.mxu0 0.0
    %3418 = vmatpush1.msra.mxu0 0.0
    %3419 = vmatprep.subr.mxu0 0.0
    %3420 = vmatpush1.msra.mxu0 0.0
    %3421 = vmatprep.subr.mxu0 0.0
    %3422 = vmatpush1.msra.mxu0 0.0
    %3423 = vmatprep.subr.mxu0 0.0
    %3424 = vmatpush1.msra.mxu0 0.0
    %3425 = vmatprep.subr.mxu0 0.0
    %3426 = vmatpush1.msra.mxu0 0.0
    %3427 = vmatprep.mubr.f32.mxu0 0.0
    %3428 = vmatmul.mubr.f32.gmra.mrb[0].mxu0 %v3290
    %v3429 = vpop.f32.mrb[0].mxu0
    %v3430 = vadd.f32 %v3100, %v3429
    %v3431 = vpop.f32.mrb[0].mxu0
    %v3432 = vadd.f32 %v3102, %v3431
    %3433 = vdwg.mxu0
    %v3434 = vxor.u32 %v3359, 2147483648
    %v3435 = vxor.u32 %v3361, 2147483648
    %v3436 = vxor.u32 %v3432, 2147483648
    %v3437 = vmul.f32 %v3434, 1.442695
    %v3438 = vpow.pop %v3437
    %v3439 = vmul.f32 %v3435, 1.442695
    %v3440 = vpow.pop %v3439
    %v3441 = vmul.f32 %v3436, 1.442695
    %v3442 = vpow.pop %v3441
    %v3443 = vadd.f32 %v3438, 1.0
    %v3444 = vadd.f32 %v3440, 1.0
    %v3445 = vadd.f32 %v3442, 1.0
    %v3446 = vrcp.pop %v3443
    %v3447 = vmul.f32 1.0, %v3446
    %v3448 = vrcp.pop %v3444
    %v3449 = vmul.f32 1.0, %v3448
    %v3450 = vrcp.pop %v3445
    %v3451 = vmul.f32 1.0, %v3450
    %v3452 = vtanh.pop %v3430
    %v3453 = vmul.f32 %v3449, %v2959
    %v3454 = vmul.f32 %v3447, %v3452
    %v3455 = vadd.f32 %v3453, %v3454
    %v3456 = vtanh.pop %v3455
    %v3457 = vmul.f32 %v3451, %v3456
    %3458 = vmatprep.subr.mxu0 %v287
    %3459 = vmatpush1.msra.mxu0 %v286
    %3460 = vmatprep.subr.mxu0 %v291
    %3461 = vmatpush1.msra.mxu0 %v290
    %3462 = vmatprep.subr.mxu0 %v295
    %3463 = vmatpush1.msra.mxu0 %v294
    %3464 = vmatprep.subr.mxu0 %v299
    %3465 = vmatpush1.msra.mxu0 %v298
    %3466 = vmatprep.subr.mxu0 %v303
    %3467 = vmatpush1.msra.mxu0 %v302
    %3468 = vmatprep.subr.mxu0 %v307
    %3469 = vmatpush1.msra.mxu0 %v306
    %3470 = vmatprep.subr.mxu0 %v311
    %3471 = vmatpush1.msra.mxu0 %v310
    %3472 = vmatprep.subr.mxu0 %v315
    %3473 = vmatpush1.msra.mxu0 %v314
    %3474 = vmatprep.subr.mxu0 %v319
    %3475 = vmatpush1.msra.mxu0 %v318
    %3476 = vmatprep.subr.mxu0 %v323
    %3477 = vmatpush1.msra.mxu0 %v322
    %3478 = vmatprep.subr.mxu0 %v327
    %3479 = vmatpush1.msra.mxu0 %v326
    %3480 = vmatprep.subr.mxu0 %v331
    %3481 = vmatpush1.msra.mxu0 %v330
    %3482 = vmatprep.subr.mxu0 %v335
    %3483 = vmatpush1.msra.mxu0 %v334
    %3484 = vmatprep.subr.mxu0 %v339
    %3485 = vmatpush1.msra.mxu0 %v338
    %3486 = vmatprep.subr.mxu0 %v343
    %3487 = vmatpush1.msra.mxu0 %v342
    %3488 = vmatprep.subr.mxu0 %v347
    %3489 = vmatpush1.msra.mxu0 %v346
    %3490 = vmatprep.subr.mxu0 0.0
    %3491 = vmatpush1.msra.mxu0 0.0
    %3492 = vmatprep.subr.mxu0 0.0
    %3493 = vmatpush1.msra.mxu0 0.0
    %3494 = vmatprep.subr.mxu0 0.0
    %3495 = vmatpush1.msra.mxu0 0.0
    %3496 = vmatprep.subr.mxu0 0.0
    %3497 = vmatpush1.msra.mxu0 0.0
    %3498 = vmatprep.subr.mxu0 0.0
    %3499 = vmatpush1.msra.mxu0 0.0
    %3500 = vmatprep.subr.mxu0 0.0
    %3501 = vmatpush1.msra.mxu0 0.0
    %3502 = vmatprep.subr.mxu0 0.0
    %3503 = vmatpush1.msra.mxu0 0.0
    %3504 = vmatprep.subr.mxu0 0.0
    %3505 = vmatpush1.msra.mxu0 0.0
    %3506 = vmatprep.subr.mxu0 0.0
    %3507 = vmatpush1.msra.mxu0 0.0
    %3508 = vmatprep.subr.mxu0 0.0
    %3509 = vmatpush1.msra.mxu0 0.0
    %3510 = vmatprep.subr.mxu0 0.0
    %3511 = vmatpush1.msra.mxu0 0.0
    %3512 = vmatprep.subr.mxu0 0.0
    %3513 = vmatpush1.msra.mxu0 0.0
    %3514 = vmatprep.subr.mxu0 0.0
    %3515 = vmatpush1.msra.mxu0 0.0
    %3516 = vmatprep.subr.mxu0 0.0
    %3517 = vmatpush1.msra.mxu0 0.0
    %3518 = vmatprep.subr.mxu0 0.0
    %3519 = vmatpush1.msra.mxu0 0.0
    %3520 = vmatprep.subr.mxu0 0.0
    %3521 = vmatpush1.msra.mxu0 0.0
    %3522 = vmatprep.mubr.f32.mxu0 0.0
    %3523 = vmatmul.mubr.f32.gmra.mrb[0].mxu0 %v3457
    %v3524 = vpop.f32.mrb[0].mxu0
    %v3525 = vadd.f32 %v355, %v3524
    %v3526 = vpop.f32.mrb[0].mxu0
    %v3527 = vadd.f32 %v359, %v3526
    %3528 = vdwg.mxu0
    %3529 = vmatprep.subr.mxu0 %v289
    %3530 = vmatpush1.msra.mxu0 %v288
    %3531 = vmatprep.subr.mxu0 %v293
    %3532 = vmatpush1.msra.mxu0 %v292
    %3533 = vmatprep.subr.mxu0 %v297
    %3534 = vmatpush1.msra.mxu0 %v296
    %3535 = vmatprep.subr.mxu0 %v301
    %3536 = vmatpush1.msra.mxu0 %v300
    %3537 = vmatprep.subr.mxu0 %v305
    %3538 = vmatpush1.msra.mxu0 %v304
    %3539 = vmatprep.subr.mxu0 %v309
    %3540 = vmatpush1.msra.mxu0 %v308
    %3541 = vmatprep.subr.mxu0 %v313
    %3542 = vmatpush1.msra.mxu0 %v312
    %3543 = vmatprep.subr.mxu0 %v317
    %3544 = vmatpush1.msra.mxu0 %v316
    %3545 = vmatprep.subr.mxu0 %v321
    %3546 = vmatpush1.msra.mxu0 %v320
    %3547 = vmatprep.subr.mxu0 %v325
    %3548 = vmatpush1.msra.mxu0 %v324
    %3549 = vmatprep.subr.mxu0 %v329
    %3550 = vmatpush1.msra.mxu0 %v328
    %3551 = vmatprep.subr.mxu0 %v333
    %3552 = vmatpush1.msra.mxu0 %v332
    %3553 = vmatprep.subr.mxu0 %v337
    %3554 = vmatpush1.msra.mxu0 %v336
    %3555 = vmatprep.subr.mxu0 %v341
    %3556 = vmatpush1.msra.mxu0 %v340
    %3557 = vmatprep.subr.mxu0 %v345
    %3558 = vmatpush1.msra.mxu0 %v344
    %3559 = vmatprep.subr.mxu0 %v349
    %3560 = vmatpush1.msra.mxu0 %v348
    %3561 = vmatprep.subr.mxu0 0.0
    %3562 = vmatpush1.msra.mxu0 0.0
    %3563 = vmatprep.subr.mxu0 0.0
    %3564 = vmatpush1.msra.mxu0 0.0
    %3565 = vmatprep.subr.mxu0 0.0
    %3566 = vmatpush1.msra.mxu0 0.0
    %3567 = vmatprep.subr.mxu0 0.0
    %3568 = vmatpush1.msra.mxu0 0.0
    %3569 = vmatprep.subr.mxu0 0.0
    %3570 = vmatpush1.msra.mxu0 0.0
    %3571 = vmatprep.subr.mxu0 0.0
    %3572 = vmatpush1.msra.mxu0 0.0
    %3573 = vmatprep.subr.mxu0 0.0
    %3574 = vmatpush1.msra.mxu0 0.0
    %3575 = vmatprep.subr.mxu0 0.0
    %3576 = vmatpush1.msra.mxu0 0.0
    %3577 = vmatprep.subr.mxu0 0.0
    %3578 = vmatpush1.msra.mxu0 0.0
    %3579 = vmatprep.subr.mxu0 0.0
    %3580 = vmatpush1.msra.mxu0 0.0
    %3581 = vmatprep.subr.mxu0 0.0
    %3582 = vmatpush1.msra.mxu0 0.0
    %3583 = vmatprep.subr.mxu0 0.0
    %3584 = vmatpush1.msra.mxu0 0.0
    %3585 = vmatprep.subr.mxu0 0.0
    %3586 = vmatpush1.msra.mxu0 0.0
    %3587 = vmatprep.subr.mxu0 0.0
    %3588 = vmatpush1.msra.mxu0 0.0
    %3589 = vmatprep.subr.mxu0 0.0
    %3590 = vmatpush1.msra.mxu0 0.0
    %3591 = vmatprep.subr.mxu0 0.0
    %3592 = vmatpush1.msra.mxu0 0.0
    %3593 = vmatprep.mubr.f32.mxu0 0.0
    %3594 = vmatmul.mubr.f32.gmra.mrb[0].mxu0 %v3457
    %v3595 = vpop.f32.mrb[0].mxu0
    %v3596 = vadd.f32 %v363, %v3595
    %v3597 = vpop.f32.mrb[0].mxu0
    %v3598 = vadd.f32 %v367, %v3597
    %3599 = vdwg.mxu0
    %3600 = vmatprep.subr.mxu0 %v515
    %3601 = vmatpush1.msra.mxu0 %v514
    %3602 = vmatprep.subr.mxu0 %v519
    %3603 = vmatpush1.msra.mxu0 %v518
    %3604 = vmatprep.subr.mxu0 %v523
    %3605 = vmatpush1.msra.mxu0 %v522
    %3606 = vmatprep.subr.mxu0 %v527
    %3607 = vmatpush1.msra.mxu0 %v526
    %3608 = vmatprep.subr.mxu0 %v531
    %3609 = vmatpush1.msra.mxu0 %v530
    %3610 = vmatprep.subr.mxu0 %v535
    %3611 = vmatpush1.msra.mxu0 %v534
    %3612 = vmatprep.subr.mxu0 %v539
    %3613 = vmatpush1.msra.mxu0 %v538
    %3614 = vmatprep.subr.mxu0 %v543
    %3615 = vmatpush1.msra.mxu0 %v542
    %3616 = vmatprep.subr.mxu0 %v547
    %3617 = vmatpush1.msra.mxu0 %v546
    %3618 = vmatprep.subr.mxu0 %v551
    %3619 = vmatpush1.msra.mxu0 %v550
    %3620 = vmatprep.subr.mxu0 %v555
    %3621 = vmatpush1.msra.mxu0 %v554
    %3622 = vmatprep.subr.mxu0 %v559
    %3623 = vmatpush1.msra.mxu0 %v558
    %3624 = vmatprep.subr.mxu0 %v563
    %3625 = vmatpush1.msra.mxu0 %v562
    %3626 = vmatprep.subr.mxu0 %v567
    %3627 = vmatpush1.msra.mxu0 %v566
    %3628 = vmatprep.subr.mxu0 %v571
    %3629 = vmatpush1.msra.mxu0 %v570
    %3630 = vmatprep.subr.mxu0 %v575
    %3631 = vmatpush1.msra.mxu0 %v574
    %3632 = vmatprep.subr.mxu0 0.0
    %3633 = vmatpush1.msra.mxu0 0.0
    %3634 = vmatprep.subr.mxu0 0.0
    %3635 = vmatpush1.msra.mxu0 0.0
    %3636 = vmatprep.subr.mxu0 0.0
    %3637 = vmatpush1.msra.mxu0 0.0
    %3638 = vmatprep.subr.mxu0 0.0
    %3639 = vmatpush1.msra.mxu0 0.0
    %3640 = vmatprep.subr.mxu0 0.0
    %3641 = vmatpush1.msra.mxu0 0.0
    %3642 = vmatprep.subr.mxu0 0.0
    %3643 = vmatpush1.msra.mxu0 0.0
    %3644 = vmatprep.subr.mxu0 0.0
    %3645 = vmatpush1.msra.mxu0 0.0
    %3646 = vmatprep.subr.mxu0 0.0
    %3647 = vmatpush1.msra.mxu0 0.0
    %3648 = vmatprep.subr.mxu0 0.0
    %3649 = vmatpush1.msra.mxu0 0.0
    %3650 = vmatprep.subr.mxu0 0.0
    %3651 = vmatpush1.msra.mxu0 0.0
    %3652 = vmatprep.subr.mxu0 0.0
    %3653 = vmatpush1.msra.mxu0 0.0
    %3654 = vmatprep.subr.mxu0 0.0
    %3655 = vmatpush1.msra.mxu0 0.0
    %3656 = vmatprep.subr.mxu0 0.0
    %3657 = vmatpush1.msra.mxu0 0.0
    %3658 = vmatprep.subr.mxu0 0.0
    %3659 = vmatpush1.msra.mxu0 0.0
    %3660 = vmatprep.subr.mxu0 0.0
    %3661 = vmatpush1.msra.mxu0 0.0
    %3662 = vmatprep.subr.mxu0 0.0
    %3663 = vmatpush1.msra.mxu0 0.0
    %3664 = vmatprep.mubr.f32.mxu0 0.0
    %3665 = vmatmul.mubr.f32.gmra.mrb[0].mxu0 %v3290
    %v3666 = vpop.f32.mrb[0].mxu0
    %v3667 = vadd.f32 0.0, %v3666
    %v3668 = vpop.f32.mrb[0].mxu0
    %v3669 = vadd.f32 0.0, %v3668
    %3670 = vdwg.mxu0
    %3671 = vmatprep.subr.mxu0 %v517
    %3672 = vmatpush1.msra.mxu0 %v516
    %3673 = vmatprep.subr.mxu0 %v521
    %3674 = vmatpush1.msra.mxu0 %v520
    %3675 = vmatprep.subr.mxu0 %v525
    %3676 = vmatpush1.msra.mxu0 %v524
    %3677 = vmatprep.subr.mxu0 %v529
    %3678 = vmatpush1.msra.mxu0 %v528
    %3679 = vmatprep.subr.mxu0 %v533
    %3680 = vmatpush1.msra.mxu0 %v532
    %3681 = vmatprep.subr.mxu0 %v537
    %3682 = vmatpush1.msra.mxu0 %v536
    %3683 = vmatprep.subr.mxu0 %v541
    %3684 = vmatpush1.msra.mxu0 %v540
    %3685 = vmatprep.subr.mxu0 %v545
    %3686 = vmatpush1.msra.mxu0 %v544
    %3687 = vmatprep.subr.mxu0 %v549
    %3688 = vmatpush1.msra.mxu0 %v548
    %3689 = vmatprep.subr.mxu0 %v553
    %3690 = vmatpush1.msra.mxu0 %v552
    %3691 = vmatprep.subr.mxu0 %v557
    %3692 = vmatpush1.msra.mxu0 %v556
    %3693 = vmatprep.subr.mxu0 %v561
    %3694 = vmatpush1.msra.mxu0 %v560
    %3695 = vmatprep.subr.mxu0 %v565
    %3696 = vmatpush1.msra.mxu0 %v564
    %3697 = vmatprep.subr.mxu0 %v569
    %3698 = vmatpush1.msra.mxu0 %v568
    %3699 = vmatprep.subr.mxu0 %v573
    %3700 = vmatpush1.msra.mxu0 %v572
    %3701 = vmatprep.subr.mxu0 %v577
    %3702 = vmatpush1.msra.mxu0 %v576
    %3703 = vmatprep.subr.mxu0 0.0
    %3704 = vmatpush1.msra.mxu0 0.0
    %3705 = vmatprep.subr.mxu0 0.0
    %3706 = vmatpush1.msra.mxu0 0.0
    %3707 = vmatprep.subr.mxu0 0.0
    %3708 = vmatpush1.msra.mxu0 0.0
    %3709 = vmatprep.subr.mxu0 0.0
    %3710 = vmatpush1.msra.mxu0 0.0
    %3711 = vmatprep.subr.mxu0 0.0
    %3712 = vmatpush1.msra.mxu0 0.0
    %3713 = vmatprep.subr.mxu0 0.0
    %3714 = vmatpush1.msra.mxu0 0.0
    %3715 = vmatprep.subr.mxu0 0.0
    %3716 = vmatpush1.msra.mxu0 0.0
    %3717 = vmatprep.subr.mxu0 0.0
    %3718 = vmatpush1.msra.mxu0 0.0
    %3719 = vmatprep.subr.mxu0 0.0
    %3720 = vmatpush1.msra.mxu0 0.0
    %3721 = vmatprep.subr.mxu0 0.0
    %3722 = vmatpush1.msra.mxu0 0.0
    %3723 = vmatprep.subr.mxu0 0.0
    %3724 = vmatpush1.msra.mxu0 0.0
    %3725 = vmatprep.subr.mxu0 0.0
    %3726 = vmatpush1.msra.mxu0 0.0
    %3727 = vmatprep.subr.mxu0 0.0
    %3728 = vmatpush1.msra.mxu0 0.0
    %3729 = vmatprep.subr.mxu0 0.0
    %3730 = vmatpush1.msra.mxu0 0.0
    %3731 = vmatprep.subr.mxu0 0.0
    %3732 = vmatpush1.msra.mxu0 0.0
    %3733 = vmatprep.subr.mxu0 0.0
    %3734 = vmatpush1.msra.mxu0 0.0
    %3735 = vmatprep.mubr.f32.mxu0 0.0
    %3736 = vmatmul.mubr.f32.gmra.mrb[0].mxu0 %v3290
    %v3737 = vpop.f32.mrb[0].mxu0
    %v3738 = vadd.f32 0.0, %v3737
    %v3739 = vpop.f32.mrb[0].mxu0
    %v3740 = vadd.f32 0.0, %v3739
    %3741 = vdwg.mxu0
    %v3746 = vrot.slane %v3667, 2
    %v3747 = vrot.slane %v3669, 2
    %v3748 = vrot.slane %v3738, 2
    %v3749 = vrot.slane %v3740, 2
    %v3754 = vadd.f32 %v207, %v3746
    %v3755 = vadd.f32 %v209, %v3747
    %v3756 = vadd.f32 %v278, %v3748
    %v3757 = vadd.f32 %v280, %v3749
    %v3758 = vxor.u32 %v3754, 2147483648
    %v3759 = vxor.u32 %v3755, 2147483648
    %v3760 = vxor.u32 %v3757, 2147483648
    %v3761 = vmul.f32 %v3758, 1.442695
    %v3762 = vpow.pop %v3761
    %v3763 = vmul.f32 %v3759, 1.442695
    %v3764 = vpow.pop %v3763
    %v3765 = vmul.f32 %v3760, 1.442695
    %v3766 = vpow.pop %v3765
    %v3767 = vadd.f32 %v3762, 1.0
    %v3768 = vadd.f32 %v3764, 1.0
    %v3769 = vadd.f32 %v3766, 1.0
    %v3770 = vrcp.pop %v3767
    %v3771 = vmul.f32 1.0, %v3770
    %v3772 = vrcp.pop %v3768
    %v3773 = vmul.f32 1.0, %v3772
    %v3774 = vrcp.pop %v3769
    %v3775 = vmul.f32 1.0, %v3774
    %v3776 = vtanh.pop %v3756
    %v3778 = vrot.slane %v3286, 7
    %v3780 = vmul.f32 %v3773, %v3778
    %v3781 = vmul.f32 %v3771, %v3776
    %v3782 = vadd.f32 %v3780, %v3781
    %v3783 = vtanh.pop %v3782
    %v3784 = vmul.f32 %v3775, %v3783
    %v3786 = vrot.slane %v3784, 6
    %3788 = vmatprep.subr.mxu0 %v749
    %3789 = vmatpush1.msra.mxu0 %v748
    %3790 = vmatprep.subr.mxu0 %v753
    %3791 = vmatpush1.msra.mxu0 %v752
    %3792 = vmatprep.subr.mxu0 %v757
    %3793 = vmatpush1.msra.mxu0 %v756
    %3794 = vmatprep.subr.mxu0 %v761
    %3795 = vmatpush1.msra.mxu0 %v760
    %3796 = vmatprep.subr.mxu0 %v765
    %3797 = vmatpush1.msra.mxu0 %v764
    %3798 = vmatprep.subr.mxu0 %v769
    %3799 = vmatpush1.msra.mxu0 %v768
    %3800 = vmatprep.subr.mxu0 %v773
    %3801 = vmatpush1.msra.mxu0 %v772
    %3802 = vmatprep.subr.mxu0 %v777
    %3803 = vmatpush1.msra.mxu0 %v776
    %3804 = vmatprep.subr.mxu0 %v781
    %3805 = vmatpush1.msra.mxu0 %v780
    %3806 = vmatprep.subr.mxu0 %v785
    %3807 = vmatpush1.msra.mxu0 %v784
    %3808 = vmatprep.subr.mxu0 %v789
    %3809 = vmatpush1.msra.mxu0 %v788
    %3810 = vmatprep.subr.mxu0 %v793
    %3811 = vmatpush1.msra.mxu0 %v792
    %3812 = vmatprep.subr.mxu0 %v797
    %3813 = vmatpush1.msra.mxu0 %v796
    %3814 = vmatprep.subr.mxu0 %v801
    %3815 = vmatpush1.msra.mxu0 %v800
    %3816 = vmatprep.subr.mxu0 %v805
    %3817 = vmatpush1.msra.mxu0 %v804
    %3818 = vmatprep.subr.mxu0 %v809
    %3819 = vmatpush1.msra.mxu0 %v808
    %3820 = vmatprep.subr.mxu0 0.0
    %3821 = vmatpush1.msra.mxu0 0.0
    %3822 = vmatprep.subr.mxu0 0.0
    %3823 = vmatpush1.msra.mxu0 0.0
    %3824 = vmatprep.subr.mxu0 0.0
    %3825 = vmatpush1.msra.mxu0 0.0
    %3826 = vmatprep.subr.mxu0 0.0
    %3827 = vmatpush1.msra.mxu0 0.0
    %3828 = vmatprep.subr.mxu0 0.0
    %3829 = vmatpush1.msra.mxu0 0.0
    %3830 = vmatprep.subr.mxu0 0.0
    %3831 = vmatpush1.msra.mxu0 0.0
    %3832 = vmatprep.subr.mxu0 0.0
    %3833 = vmatpush1.msra.mxu0 0.0
    %3834 = vmatprep.subr.mxu0 0.0
    %3835 = vmatpush1.msra.mxu0 0.0
    %3836 = vmatprep.subr.mxu0 0.0
    %3837 = vmatpush1.msra.mxu0 0.0
    %3838 = vmatprep.subr.mxu0 0.0
    %3839 = vmatpush1.msra.mxu0 0.0
    %3840 = vmatprep.subr.mxu0 0.0
    %3841 = vmatpush1.msra.mxu0 0.0
    %3842 = vmatprep.subr.mxu0 0.0
    %3843 = vmatpush1.msra.mxu0 0.0
    %3844 = vmatprep.subr.mxu0 0.0
    %3845 = vmatpush1.msra.mxu0 0.0
    %3846 = vmatprep.subr.mxu0 0.0
    %3847 = vmatpush1.msra.mxu0 0.0
    %3848 = vmatprep.subr.mxu0 0.0
    %3849 = vmatpush1.msra.mxu0 0.0
    %3850 = vmatprep.subr.mxu0 0.0
    %3851 = vmatpush1.msra.mxu0 0.0
    %3852 = vmatprep.mubr.f32.mxu0 0.0
    %3853 = vmatmul.mubr.f32.gmra.mrb[0].mxu0 %v3786
    %v3854 = vpop.f32.mrb[0].mxu0
    %v3855 = vadd.f32 %v3525, %v3854
    %v3856 = vpop.f32.mrb[0].mxu0
    %v3857 = vadd.f32 %v3527, %v3856
    %3858 = vdwg.mxu0
    %3859 = vmatprep.subr.mxu0 %v751
    %3860 = vmatpush1.msra.mxu0 %v750
    %3861 = vmatprep.subr.mxu0 %v755
    %3862 = vmatpush1.msra.mxu0 %v754
    %3863 = vmatprep.subr.mxu0 %v759
    %3864 = vmatpush1.msra.mxu0 %v758
    %3865 = vmatprep.subr.mxu0 %v763
    %3866 = vmatpush1.msra.mxu0 %v762
    %3867 = vmatprep.subr.mxu0 %v767
    %3868 = vmatpush1.msra.mxu0 %v766
    %3869 = vmatprep.subr.mxu0 %v771
    %3870 = vmatpush1.msra.mxu0 %v770
    %3871 = vmatprep.subr.mxu0 %v775
    %3872 = vmatpush1.msra.mxu0 %v774
    %3873 = vmatprep.subr.mxu0 %v779
    %3874 = vmatpush1.msra.mxu0 %v778
    %3875 = vmatprep.subr.mxu0 %v783
    %3876 = vmatpush1.msra.mxu0 %v782
    %3877 = vmatprep.subr.mxu0 %v787
    %3878 = vmatpush1.msra.mxu0 %v786
    %3879 = vmatprep.subr.mxu0 %v791
    %3880 = vmatpush1.msra.mxu0 %v790
    %3881 = vmatprep.subr.mxu0 %v795
    %3882 = vmatpush1.msra.mxu0 %v794
    %3883 = vmatprep.subr.mxu0 %v799
    %3884 = vmatpush1.msra.mxu0 %v798
    %3885 = vmatprep.subr.mxu0 %v803
    %3886 = vmatpush1.msra.mxu0 %v802
    %3887 = vmatprep.subr.mxu0 %v807
    %3888 = vmatpush1.msra.mxu0 %v806
    %3889 = vmatprep.subr.mxu0 %v811
    %3890 = vmatpush1.msra.mxu0 %v810
    %3891 = vmatprep.subr.mxu0 0.0
    %3892 = vmatpush1.msra.mxu0 0.0
    %3893 = vmatprep.subr.mxu0 0.0
    %3894 = vmatpush1.msra.mxu0 0.0
    %3895 = vmatprep.subr.mxu0 0.0
    %3896 = vmatpush1.msra.mxu0 0.0
    %3897 = vmatprep.subr.mxu0 0.0
    %3898 = vmatpush1.msra.mxu0 0.0
    %3899 = vmatprep.subr.mxu0 0.0
    %3900 = vmatpush1.msra.mxu0 0.0
    %3901 = vmatprep.subr.mxu0 0.0
    %3902 = vmatpush1.msra.mxu0 0.0
    %3903 = vmatprep.subr.mxu0 0.0
    %3904 = vmatpush1.msra.mxu0 0.0
    %3905 = vmatprep.subr.mxu0 0.0
    %3906 = vmatpush1.msra.mxu0 0.0
    %3907 = vmatprep.subr.mxu0 0.0
    %3908 = vmatpush1.msra.mxu0 0.0
    %3909 = vmatprep.subr.mxu0 0.0
    %3910 = vmatpush1.msra.mxu0 0.0
    %3911 = vmatprep.subr.mxu0 0.0
    %3912 = vmatpush1.msra.mxu0 0.0
    %3913 = vmatprep.subr.mxu0 0.0
    %3914 = vmatpush1.msra.mxu0 0.0
    %3915 = vmatprep.subr.mxu0 0.0
    %3916 = vmatpush1.msra.mxu0 0.0
    %3917 = vmatprep.subr.mxu0 0.0
    %3918 = vmatpush1.msra.mxu0 0.0
    %3919 = vmatprep.subr.mxu0 0.0
    %3920 = vmatpush1.msra.mxu0 0.0
    %3921 = vmatprep.subr.mxu0 0.0
    %3922 = vmatpush1.msra.mxu0 0.0
    %3923 = vmatprep.mubr.f32.mxu0 0.0
    %3924 = vmatmul.mubr.f32.gmra.mrb[0].mxu0 %v3786
    %v3925 = vpop.f32.mrb[0].mxu0
    %v3926 = vadd.f32 %v3596, %v3925
    %v3927 = vpop.f32.mrb[0].mxu0
    %v3928 = vadd.f32 %v3598, %v3927
    %3929 = vdwg.mxu0
    %v3930 = vxor.u32 %v3855, 2147483648
    %v3931 = vxor.u32 %v3857, 2147483648
    %v3932 = vxor.u32 %v3928, 2147483648
    %v3933 = vmul.f32 %v3930, 1.442695
    %v3934 = vpow.pop %v3933
    %v3935 = vmul.f32 %v3931, 1.442695
    %v3936 = vpow.pop %v3935
    %v3937 = vmul.f32 %v3932, 1.442695
    %v3938 = vpow.pop %v3937
    %v3939 = vadd.f32 %v3934, 1.0
    %v3940 = vadd.f32 %v3936, 1.0
    %v3941 = vadd.f32 %v3938, 1.0
    %v3942 = vrcp.pop %v3939
    %v3943 = vmul.f32 1.0, %v3942
    %v3944 = vrcp.pop %v3940
    %v3945 = vmul.f32 1.0, %v3944
    %v3946 = vrcp.pop %v3941
    %v3947 = vmul.f32 1.0, %v3946
    %v3948 = vtanh.pop %v3926
    %v3949 = vmul.f32 %v3945, %v3455
    %v3950 = vmul.f32 %v3943, %v3948
    %v3951 = vadd.f32 %v3949, %v3950
    %v3952 = vtanh.pop %v3951
    %v3953 = vmul.f32 %v3947, %v3952
    %3954 = vmatprep.subr.mxu0 %v287
    %3955 = vmatpush1.msra.mxu0 %v286
    %3956 = vmatprep.subr.mxu0 %v291
    %3957 = vmatpush1.msra.mxu0 %v290
    %3958 = vmatprep.subr.mxu0 %v295
    %3959 = vmatpush1.msra.mxu0 %v294
    %3960 = vmatprep.subr.mxu0 %v299
    %3961 = vmatpush1.msra.mxu0 %v298
    %3962 = vmatprep.subr.mxu0 %v303
    %3963 = vmatpush1.msra.mxu0 %v302
    %3964 = vmatprep.subr.mxu0 %v307
    %3965 = vmatpush1.msra.mxu0 %v306
    %3966 = vmatprep.subr.mxu0 %v311
    %3967 = vmatpush1.msra.mxu0 %v310
    %3968 = vmatprep.subr.mxu0 %v315
    %3969 = vmatpush1.msra.mxu0 %v314
    %3970 = vmatprep.subr.mxu0 %v319
    %3971 = vmatpush1.msra.mxu0 %v318
    %3972 = vmatprep.subr.mxu0 %v323
    %3973 = vmatpush1.msra.mxu0 %v322
    %3974 = vmatprep.subr.mxu0 %v327
    %3975 = vmatpush1.msra.mxu0 %v326
    %3976 = vmatprep.subr.mxu0 %v331
    %3977 = vmatpush1.msra.mxu0 %v330
    %3978 = vmatprep.subr.mxu0 %v335
    %3979 = vmatpush1.msra.mxu0 %v334
    %3980 = vmatprep.subr.mxu0 %v339
    %3981 = vmatpush1.msra.mxu0 %v338
    %3982 = vmatprep.subr.mxu0 %v343
    %3983 = vmatpush1.msra.mxu0 %v342
    %3984 = vmatprep.subr.mxu0 %v347
    %3985 = vmatpush1.msra.mxu0 %v346
    %3986 = vmatprep.subr.mxu0 0.0
    %3987 = vmatpush1.msra.mxu0 0.0
    %3988 = vmatprep.subr.mxu0 0.0
    %3989 = vmatpush1.msra.mxu0 0.0
    %3990 = vmatprep.subr.mxu0 0.0
    %3991 = vmatpush1.msra.mxu0 0.0
    %3992 = vmatprep.subr.mxu0 0.0
    %3993 = vmatpush1.msra.mxu0 0.0
    %3994 = vmatprep.subr.mxu0 0.0
    %3995 = vmatpush1.msra.mxu0 0.0
    %3996 = vmatprep.subr.mxu0 0.0
    %3997 = vmatpush1.msra.mxu0 0.0
    %3998 = vmatprep.subr.mxu0 0.0
    %3999 = vmatpush1.msra.mxu0 0.0
    %4000 = vmatprep.subr.mxu0 0.0
    %4001 = vmatpush1.msra.mxu0 0.0
    %4002 = vmatprep.subr.mxu0 0.0
    %4003 = vmatpush1.msra.mxu0 0.0
    %4004 = vmatprep.subr.mxu0 0.0
    %4005 = vmatpush1.msra.mxu0 0.0
    %4006 = vmatprep.subr.mxu0 0.0
    %4007 = vmatpush1.msra.mxu0 0.0
    %4008 = vmatprep.subr.mxu0 0.0
    %4009 = vmatpush1.msra.mxu0 0.0
    %4010 = vmatprep.subr.mxu0 0.0
    %4011 = vmatpush1.msra.mxu0 0.0
    %4012 = vmatprep.subr.mxu0 0.0
    %4013 = vmatpush1.msra.mxu0 0.0
    %4014 = vmatprep.subr.mxu0 0.0
    %4015 = vmatpush1.msra.mxu0 0.0
    %4016 = vmatprep.subr.mxu0 0.0
    %4017 = vmatpush1.msra.mxu0 0.0
    %4018 = vmatprep.mubr.f32.mxu0 0.0
    %4019 = vmatmul.mubr.f32.gmra.mrb[0].mxu0 %v3953
    %v4020 = vpop.f32.mrb[0].mxu0
    %v4021 = vadd.f32 %v355, %v4020
    %v4022 = vpop.f32.mrb[0].mxu0
    %v4023 = vadd.f32 %v359, %v4022
    %4024 = vdwg.mxu0
    %4025 = vmatprep.subr.mxu0 %v289
    %4026 = vmatpush1.msra.mxu0 %v288
    %4027 = vmatprep.subr.mxu0 %v293
    %4028 = vmatpush1.msra.mxu0 %v292
    %4029 = vmatprep.subr.mxu0 %v297
    %4030 = vmatpush1.msra.mxu0 %v296
    %4031 = vmatprep.subr.mxu0 %v301
    %4032 = vmatpush1.msra.mxu0 %v300
    %4033 = vmatprep.subr.mxu0 %v305
    %4034 = vmatpush1.msra.mxu0 %v304
    %4035 = vmatprep.subr.mxu0 %v309
    %4036 = vmatpush1.msra.mxu0 %v308
    %4037 = vmatprep.subr.mxu0 %v313
    %4038 = vmatpush1.msra.mxu0 %v312
    %4039 = vmatprep.subr.mxu0 %v317
    %4040 = vmatpush1.msra.mxu0 %v316
    %4041 = vmatprep.subr.mxu0 %v321
    %4042 = vmatpush1.msra.mxu0 %v320
    %4043 = vmatprep.subr.mxu0 %v325
    %4044 = vmatpush1.msra.mxu0 %v324
    %4045 = vmatprep.subr.mxu0 %v329
    %4046 = vmatpush1.msra.mxu0 %v328
    %4047 = vmatprep.subr.mxu0 %v333
    %4048 = vmatpush1.msra.mxu0 %v332
    %4049 = vmatprep.subr.mxu0 %v337
    %4050 = vmatpush1.msra.mxu0 %v336
    %4051 = vmatprep.subr.mxu0 %v341
    %4052 = vmatpush1.msra.mxu0 %v340
    %4053 = vmatprep.subr.mxu0 %v345
    %4054 = vmatpush1.msra.mxu0 %v344
    %4055 = vmatprep.subr.mxu0 %v349
    %4056 = vmatpush1.msra.mxu0 %v348
    %4057 = vmatprep.subr.mxu0 0.0
    %4058 = vmatpush1.msra.mxu0 0.0
    %4059 = vmatprep.subr.mxu0 0.0
    %4060 = vmatpush1.msra.mxu0 0.0
    %4061 = vmatprep.subr.mxu0 0.0
    %4062 = vmatpush1.msra.mxu0 0.0
    %4063 = vmatprep.subr.mxu0 0.0
    %4064 = vmatpush1.msra.mxu0 0.0
    %4065 = vmatprep.subr.mxu0 0.0
    %4066 = vmatpush1.msra.mxu0 0.0
    %4067 = vmatprep.subr.mxu0 0.0
    %4068 = vmatpush1.msra.mxu0 0.0
    %4069 = vmatprep.subr.mxu0 0.0
    %4070 = vmatpush1.msra.mxu0 0.0
    %4071 = vmatprep.subr.mxu0 0.0
    %4072 = vmatpush1.msra.mxu0 0.0
    %4073 = vmatprep.subr.mxu0 0.0
    %4074 = vmatpush1.msra.mxu0 0.0
    %4075 = vmatprep.subr.mxu0 0.0
    %4076 = vmatpush1.msra.mxu0 0.0
    %4077 = vmatprep.subr.mxu0 0.0
    %4078 = vmatpush1.msra.mxu0 0.0
    %4079 = vmatprep.subr.mxu0 0.0
    %4080 = vmatpush1.msra.mxu0 0.0
    %4081 = vmatprep.subr.mxu0 0.0
    %4082 = vmatpush1.msra.mxu0 0.0
    %4083 = vmatprep.subr.mxu0 0.0
    %4084 = vmatpush1.msra.mxu0 0.0
    %4085 = vmatprep.subr.mxu0 0.0
    %4086 = vmatpush1.msra.mxu0 0.0
    %4087 = vmatprep.subr.mxu0 0.0
    %4088 = vmatpush1.msra.mxu0 0.0
    %4089 = vmatprep.mubr.f32.mxu0 0.0
    %4090 = vmatmul.mubr.f32.gmra.mrb[0].mxu0 %v3953
    %v4091 = vpop.f32.mrb[0].mxu0
    %v4092 = vadd.f32 %v363, %v4091
    %v4093 = vpop.f32.mrb[0].mxu0
    %v4094 = vadd.f32 %v367, %v4093
    %4095 = vdwg.mxu0
    %4096 = vmatprep.subr.mxu0 %v515
    %4097 = vmatpush1.msra.mxu0 %v514
    %4098 = vmatprep.subr.mxu0 %v519
    %4099 = vmatpush1.msra.mxu0 %v518
    %4100 = vmatprep.subr.mxu0 %v523
    %4101 = vmatpush1.msra.mxu0 %v522
    %4102 = vmatprep.subr.mxu0 %v527
    %4103 = vmatpush1.msra.mxu0 %v526
    %4104 = vmatprep.subr.mxu0 %v531
    %4105 = vmatpush1.msra.mxu0 %v530
    %4106 = vmatprep.subr.mxu0 %v535
    %4107 = vmatpush1.msra.mxu0 %v534
    %4108 = vmatprep.subr.mxu0 %v539
    %4109 = vmatpush1.msra.mxu0 %v538
    %4110 = vmatprep.subr.mxu0 %v543
    %4111 = vmatpush1.msra.mxu0 %v542
    %4112 = vmatprep.subr.mxu0 %v547
    %4113 = vmatpush1.msra.mxu0 %v546
    %4114 = vmatprep.subr.mxu0 %v551
    %4115 = vmatpush1.msra.mxu0 %v550
    %4116 = vmatprep.subr.mxu0 %v555
    %4117 = vmatpush1.msra.mxu0 %v554
    %4118 = vmatprep.subr.mxu0 %v559
    %4119 = vmatpush1.msra.mxu0 %v558
    %4120 = vmatprep.subr.mxu0 %v563
    %4121 = vmatpush1.msra.mxu0 %v562
    %4122 = vmatprep.subr.mxu0 %v567
    %4123 = vmatpush1.msra.mxu0 %v566
    %4124 = vmatprep.subr.mxu0 %v571
    %4125 = vmatpush1.msra.mxu0 %v570
    %4126 = vmatprep.subr.mxu0 %v575
    %4127 = vmatpush1.msra.mxu0 %v574
    %4128 = vmatprep.subr.mxu0 0.0
    %4129 = vmatpush1.msra.mxu0 0.0
    %4130 = vmatprep.subr.mxu0 0.0
    %4131 = vmatpush1.msra.mxu0 0.0
    %4132 = vmatprep.subr.mxu0 0.0
    %4133 = vmatpush1.msra.mxu0 0.0
    %4134 = vmatprep.subr.mxu0 0.0
    %4135 = vmatpush1.msra.mxu0 0.0
    %4136 = vmatprep.subr.mxu0 0.0
    %4137 = vmatpush1.msra.mxu0 0.0
    %4138 = vmatprep.subr.mxu0 0.0
    %4139 = vmatpush1.msra.mxu0 0.0
    %4140 = vmatprep.subr.mxu0 0.0
    %4141 = vmatpush1.msra.mxu0 0.0
    %4142 = vmatprep.subr.mxu0 0.0
    %4143 = vmatpush1.msra.mxu0 0.0
    %4144 = vmatprep.subr.mxu0 0.0
    %4145 = vmatpush1.msra.mxu0 0.0
    %4146 = vmatprep.subr.mxu0 0.0
    %4147 = vmatpush1.msra.mxu0 0.0
    %4148 = vmatprep.subr.mxu0 0.0
    %4149 = vmatpush1.msra.mxu0 0.0
    %4150 = vmatprep.subr.mxu0 0.0
    %4151 = vmatpush1.msra.mxu0 0.0
    %4152 = vmatprep.subr.mxu0 0.0
    %4153 = vmatpush1.msra.mxu0 0.0
    %4154 = vmatprep.subr.mxu0 0.0
    %4155 = vmatpush1.msra.mxu0 0.0
    %4156 = vmatprep.subr.mxu0 0.0
    %4157 = vmatpush1.msra.mxu0 0.0
    %4158 = vmatprep.subr.mxu0 0.0
    %4159 = vmatpush1.msra.mxu0 0.0
    %4160 = vmatprep.mubr.f32.mxu0 0.0
    %4161 = vmatmul.mubr.f32.gmra.mrb[0].mxu0 %v3786
    %v4162 = vpop.f32.mrb[0].mxu0
    %v4163 = vadd.f32 0.0, %v4162
    %v4164 = vpop.f32.mrb[0].mxu0
    %v4165 = vadd.f32 0.0, %v4164
    %4166 = vdwg.mxu0
    %4167 = vmatprep.subr.mxu0 %v517
    %4168 = vmatpush1.msra.mxu0 %v516
    %4169 = vmatprep.subr.mxu0 %v521
    %4170 = vmatpush1.msra.mxu0 %v520
    %4171 = vmatprep.subr.mxu0 %v525
    %4172 = vmatpush1.msra.mxu0 %v524
    %4173 = vmatprep.subr.mxu0 %v529
    %4174 = vmatpush1.msra.mxu0 %v528
    %4175 = vmatprep.subr.mxu0 %v533
    %4176 = vmatpush1.msra.mxu0 %v532
    %4177 = vmatprep.subr.mxu0 %v537
    %4178 = vmatpush1.msra.mxu0 %v536
    %4179 = vmatprep.subr.mxu0 %v541
    %4180 = vmatpush1.msra.mxu0 %v540
    %4181 = vmatprep.subr.mxu0 %v545
    %4182 = vmatpush1.msra.mxu0 %v544
    %4183 = vmatprep.subr.mxu0 %v549
    %4184 = vmatpush1.msra.mxu0 %v548
    %4185 = vmatprep.subr.mxu0 %v553
    %4186 = vmatpush1.msra.mxu0 %v552
    %4187 = vmatprep.subr.mxu0 %v557
    %4188 = vmatpush1.msra.mxu0 %v556
    %4189 = vmatprep.subr.mxu0 %v561
    %4190 = vmatpush1.msra.mxu0 %v560
    %4191 = vmatprep.subr.mxu0 %v565
    %4192 = vmatpush1.msra.mxu0 %v564
    %4193 = vmatprep.subr.mxu0 %v569
    %4194 = vmatpush1.msra.mxu0 %v568
    %4195 = vmatprep.subr.mxu0 %v573
    %4196 = vmatpush1.msra.mxu0 %v572
    %4197 = vmatprep.subr.mxu0 %v577
    %4198 = vmatpush1.msra.mxu0 %v576
    %4199 = vmatprep.subr.mxu0 0.0
    %4200 = vmatpush1.msra.mxu0 0.0
    %4201 = vmatprep.subr.mxu0 0.0
    %4202 = vmatpush1.msra.mxu0 0.0
    %4203 = vmatprep.subr.mxu0 0.0
    %4204 = vmatpush1.msra.mxu0 0.0
    %4205 = vmatprep.subr.mxu0 0.0
    %4206 = vmatpush1.msra.mxu0 0.0
    %4207 = vmatprep.subr.mxu0 0.0
    %4208 = vmatpush1.msra.mxu0 0.0
    %4209 = vmatprep.subr.mxu0 0.0
    %4210 = vmatpush1.msra.mxu0 0.0
    %4211 = vmatprep.subr.mxu0 0.0
    %4212 = vmatpush1.msra.mxu0 0.0
    %4213 = vmatprep.subr.mxu0 0.0
    %4214 = vmatpush1.msra.mxu0 0.0
    %4215 = vmatprep.subr.mxu0 0.0
    %4216 = vmatpush1.msra.mxu0 0.0
    %4217 = vmatprep.subr.mxu0 0.0
    %4218 = vmatpush1.msra.mxu0 0.0
    %4219 = vmatprep.subr.mxu0 0.0
    %4220 = vmatpush1.msra.mxu0 0.0
    %4221 = vmatprep.subr.mxu0 0.0
    %4222 = vmatpush1.msra.mxu0 0.0
    %4223 = vmatprep.subr.mxu0 0.0
    %4224 = vmatpush1.msra.mxu0 0.0
    %4225 = vmatprep.subr.mxu0 0.0
    %4226 = vmatpush1.msra.mxu0 0.0
    %4227 = vmatprep.subr.mxu0 0.0
    %4228 = vmatpush1.msra.mxu0 0.0
    %4229 = vmatprep.subr.mxu0 0.0
    %4230 = vmatpush1.msra.mxu0 0.0
    %4231 = vmatprep.mubr.f32.mxu0 0.0
    %4232 = vmatmul.mubr.f32.gmra.mrb[0].mxu0 %v3786
    %v4233 = vpop.f32.mrb[0].mxu0
    %v4234 = vadd.f32 0.0, %v4233
    %v4235 = vpop.f32.mrb[0].mxu0
    %v4236 = vadd.f32 0.0, %v4235
    %4237 = vdwg.mxu0
    %v4242 = vrot.slane %v4163, 1
    %v4243 = vrot.slane %v4165, 1
    %v4244 = vrot.slane %v4234, 1
    %v4245 = vrot.slane %v4236, 1
    %v4250 = vadd.f32 %v207, %v4242
    %v4251 = vadd.f32 %v209, %v4243
    %v4252 = vadd.f32 %v278, %v4244
    %v4253 = vadd.f32 %v280, %v4245
    %v4254 = vxor.u32 %v4250, 2147483648
    %v4255 = vxor.u32 %v4251, 2147483648
    %v4256 = vxor.u32 %v4253, 2147483648
    %v4257 = vmul.f32 %v4254, 1.442695
    %v4258 = vpow.pop %v4257
    %v4259 = vmul.f32 %v4255, 1.442695
    %v4260 = vpow.pop %v4259
    %v4261 = vmul.f32 %v4256, 1.442695
    %v4262 = vpow.pop %v4261
    %v4263 = vadd.f32 %v4258, 1.0
    %v4264 = vadd.f32 %v4260, 1.0
    %v4265 = vadd.f32 %v4262, 1.0
    %v4266 = vrcp.pop %v4263
    %v4267 = vmul.f32 1.0, %v4266
    %v4268 = vrcp.pop %v4264
    %v4269 = vmul.f32 1.0, %v4268
    %v4270 = vrcp.pop %v4265
    %v4271 = vmul.f32 1.0, %v4270
    %v4272 = vtanh.pop %v4252
    %v4274 = vrot.slane %v3782, 7
    %v4276 = vmul.f32 %v4269, %v4274
    %v4277 = vmul.f32 %v4267, %v4272
    %v4278 = vadd.f32 %v4276, %v4277
    %v4279 = vtanh.pop %v4278
    %v4280 = vmul.f32 %v4271, %v4279
    %v4282 = vrot.slane %v4280, 7
    %4284 = vmatprep.subr.mxu0 %v749
    %4285 = vmatpush1.msra.mxu0 %v748
    %4286 = vmatprep.subr.mxu0 %v753
    %4287 = vmatpush1.msra.mxu0 %v752
    %4288 = vmatprep.subr.mxu0 %v757
    %4289 = vmatpush1.msra.mxu0 %v756
    %4290 = vmatprep.subr.mxu0 %v761
    %4291 = vmatpush1.msra.mxu0 %v760
    %4292 = vmatprep.subr.mxu0 %v765
    %4293 = vmatpush1.msra.mxu0 %v764
    %4294 = vmatprep.subr.mxu0 %v769
    %4295 = vmatpush1.msra.mxu0 %v768
    %4296 = vmatprep.subr.mxu0 %v773
    %4297 = vmatpush1.msra.mxu0 %v772
    %4298 = vmatprep.subr.mxu0 %v777
    %4299 = vmatpush1.msra.mxu0 %v776
    %4300 = vmatprep.subr.mxu0 %v781
    %4301 = vmatpush1.msra.mxu0 %v780
    %4302 = vmatprep.subr.mxu0 %v785
    %4303 = vmatpush1.msra.mxu0 %v784
    %4304 = vmatprep.subr.mxu0 %v789
    %4305 = vmatpush1.msra.mxu0 %v788
    %4306 = vmatprep.subr.mxu0 %v793
    %4307 = vmatpush1.msra.mxu0 %v792
    %4308 = vmatprep.subr.mxu0 %v797
    %4309 = vmatpush1.msra.mxu0 %v796
    %4310 = vmatprep.subr.mxu0 %v801
    %4311 = vmatpush1.msra.mxu0 %v800
    %4312 = vmatprep.subr.mxu0 %v805
    %4313 = vmatpush1.msra.mxu0 %v804
    %4314 = vmatprep.subr.mxu0 %v809
    %4315 = vmatpush1.msra.mxu0 %v808
    %4316 = vmatprep.subr.mxu0 0.0
    %4317 = vmatpush1.msra.mxu0 0.0
    %4318 = vmatprep.subr.mxu0 0.0
    %4319 = vmatpush1.msra.mxu0 0.0
    %4320 = vmatprep.subr.mxu0 0.0
    %4321 = vmatpush1.msra.mxu0 0.0
    %4322 = vmatprep.subr.mxu0 0.0
    %4323 = vmatpush1.msra.mxu0 0.0
    %4324 = vmatprep.subr.mxu0 0.0
    %4325 = vmatpush1.msra.mxu0 0.0
    %4326 = vmatprep.subr.mxu0 0.0
    %4327 = vmatpush1.msra.mxu0 0.0
    %4328 = vmatprep.subr.mxu0 0.0
    %4329 = vmatpush1.msra.mxu0 0.0
    %4330 = vmatprep.subr.mxu0 0.0
    %4331 = vmatpush1.msra.mxu0 0.0
    %4332 = vmatprep.subr.mxu0 0.0
    %4333 = vmatpush1.msra.mxu0 0.0
    %4334 = vmatprep.subr.mxu0 0.0
    %4335 = vmatpush1.msra.mxu0 0.0
    %4336 = vmatprep.subr.mxu0 0.0
    %4337 = vmatpush1.msra.mxu0 0.0
    %4338 = vmatprep.subr.mxu0 0.0
    %4339 = vmatpush1.msra.mxu0 0.0
    %4340 = vmatprep.subr.mxu0 0.0
    %4341 = vmatpush1.msra.mxu0 0.0
    %4342 = vmatprep.subr.mxu0 0.0
    %4343 = vmatpush1.msra.mxu0 0.0
    %4344 = vmatprep.subr.mxu0 0.0
    %4345 = vmatpush1.msra.mxu0 0.0
    %4346 = vmatprep.subr.mxu0 0.0
    %4347 = vmatpush1.msra.mxu0 0.0
    %4348 = vmatprep.mubr.f32.mxu0 0.0
    %4349 = vmatmul.mubr.f32.gmra.mrb[0].mxu0 %v4282
    %v4350 = vpop.f32.mrb[0].mxu0
    %v4351 = vadd.f32 %v4021, %v4350
    %v4352 = vpop.f32.mrb[0].mxu0
    %v4353 = vadd.f32 %v4023, %v4352
    %4354 = vdwg.mxu0
    %4355 = vmatprep.subr.mxu0 %v751
    %4356 = vmatpush1.msra.mxu0 %v750
    %4357 = vmatprep.subr.mxu0 %v755
    %4358 = vmatpush1.msra.mxu0 %v754
    %4359 = vmatprep.subr.mxu0 %v759
    %4360 = vmatpush1.msra.mxu0 %v758
    %4361 = vmatprep.subr.mxu0 %v763
    %4362 = vmatpush1.msra.mxu0 %v762
    %4363 = vmatprep.subr.mxu0 %v767
    %4364 = vmatpush1.msra.mxu0 %v766
    %4365 = vmatprep.subr.mxu0 %v771
    %4366 = vmatpush1.msra.mxu0 %v770
    %4367 = vmatprep.subr.mxu0 %v775
    %4368 = vmatpush1.msra.mxu0 %v774
    %4369 = vmatprep.subr.mxu0 %v779
    %4370 = vmatpush1.msra.mxu0 %v778
    %4371 = vmatprep.subr.mxu0 %v783
    %4372 = vmatpush1.msra.mxu0 %v782
    %4373 = vmatprep.subr.mxu0 %v787
    %4374 = vmatpush1.msra.mxu0 %v786
    %4375 = vmatprep.subr.mxu0 %v791
    %4376 = vmatpush1.msra.mxu0 %v790
    %4377 = vmatprep.subr.mxu0 %v795
    %4378 = vmatpush1.msra.mxu0 %v794
    %4379 = vmatprep.subr.mxu0 %v799
    %4380 = vmatpush1.msra.mxu0 %v798
    %4381 = vmatprep.subr.mxu0 %v803
    %4382 = vmatpush1.msra.mxu0 %v802
    %4383 = vmatprep.subr.mxu0 %v807
    %4384 = vmatpush1.msra.mxu0 %v806
    %4385 = vmatprep.subr.mxu0 %v811
    %4386 = vmatpush1.msra.mxu0 %v810
    %4387 = vmatprep.subr.mxu0 0.0
    %4388 = vmatpush1.msra.mxu0 0.0
    %4389 = vmatprep.subr.mxu0 0.0
    %4390 = vmatpush1.msra.mxu0 0.0
    %4391 = vmatprep.subr.mxu0 0.0
    %4392 = vmatpush1.msra.mxu0 0.0
    %4393 = vmatprep.subr.mxu0 0.0
    %4394 = vmatpush1.msra.mxu0 0.0
    %4395 = vmatprep.subr.mxu0 0.0
    %4396 = vmatpush1.msra.mxu0 0.0
    %4397 = vmatprep.subr.mxu0 0.0
    %4398 = vmatpush1.msra.mxu0 0.0
    %4399 = vmatprep.subr.mxu0 0.0
    %4400 = vmatpush1.msra.mxu0 0.0
    %4401 = vmatprep.subr.mxu0 0.0
    %4402 = vmatpush1.msra.mxu0 0.0
    %4403 = vmatprep.subr.mxu0 0.0
    %4404 = vmatpush1.msra.mxu0 0.0
    %4405 = vmatprep.subr.mxu0 0.0
    %4406 = vmatpush1.msra.mxu0 0.0
    %4407 = vmatprep.subr.mxu0 0.0
    %4408 = vmatpush1.msra.mxu0 0.0
    %4409 = vmatprep.subr.mxu0 0.0
    %4410 = vmatpush1.msra.mxu0 0.0
    %4411 = vmatprep.subr.mxu0 0.0
    %4412 = vmatpush1.msra.mxu0 0.0
    %4413 = vmatprep.subr.mxu0 0.0
    %4414 = vmatpush1.msra.mxu0 0.0
    %4415 = vmatprep.subr.mxu0 0.0
    %4416 = vmatpush1.msra.mxu0 0.0
    %4417 = vmatprep.subr.mxu0 0.0
    %4418 = vmatpush1.msra.mxu0 0.0
    %4419 = vmatprep.mubr.f32.mxu0 0.0
    %4420 = vmatmul.mubr.f32.gmra.mrb[0].mxu0 %v4282
    %v4421 = vpop.f32.mrb[0].mxu0
    %v4422 = vadd.f32 %v4092, %v4421
    %v4423 = vpop.f32.mrb[0].mxu0
    %v4424 = vadd.f32 %v4094, %v4423
    %4425 = vdwg.mxu0
    %v4426 = vxor.u32 %v4351, 2147483648
    %v4427 = vxor.u32 %v4353, 2147483648
    %v4428 = vxor.u32 %v4424, 2147483648
    %v4429 = vmul.f32 %v4426, 1.442695
    %v4430 = vpow.pop %v4429
    %v4431 = vmul.f32 %v4427, 1.442695
    %v4432 = vpow.pop %v4431
    %v4433 = vmul.f32 %v4428, 1.442695
    %v4434 = vpow.pop %v4433
    %v4435 = vadd.f32 %v4430, 1.0
    %v4436 = vadd.f32 %v4432, 1.0
    %v4437 = vadd.f32 %v4434, 1.0
    %v4438 = vrcp.pop %v4435
    %v4439 = vmul.f32 1.0, %v4438
    %v4440 = vrcp.pop %v4436
    %v4441 = vmul.f32 1.0, %v4440
    %v4442 = vrcp.pop %v4437
    %v4443 = vmul.f32 1.0, %v4442
    %v4444 = vtanh.pop %v4422
    %v4445 = vmul.f32 %v4441, %v3951
    %v4446 = vmul.f32 %v4439, %v4444
    %v4447 = vadd.f32 %v4445, %v4446
    %v4448 = vtanh.pop %v4447
    %v4449 = vmul.f32 %v4443, %v4448
    %v4451 = vrot.slane %v1473, 7
    %v4454 = vrot.slane %v1969, 6
    %v4457 = vrot.slane %v2465, 5
    %v4460 = vrot.slane %v2961, 4
    %v4463 = vrot.slane %v3457, 3
    %v4466 = vrot.slane %v3953, 2
    %v4469 = vrot.slane %v4449, 1
    %v4471 = vsel %vm127, %v977, %v4451
    %vm4472 = vcmask 1041408
    %v4473 = vsel %vm4472, %v4471, %v4454
    %vm4474 = vcmask 1042432
    %v4475 = vsel %vm4474, %v4473, %v4457
    %vm4476 = vcmask 1043456
    %v4477 = vsel %vm4476, %v4475, %v4460
    %vm4478 = vcmask 1044480
    %v4479 = vsel %vm4478, %v4477, %v4463
    %vm4480 = vcmask 1045504
    %v4481 = vsel %vm4480, %v4479, %v4466
    %vm4482 = vcmask 1046528
    %v4483 = vsel %vm4482, %v4481, %v4469
    %v4484 = vld [vmem:[%s8] sm:$0xff]
    %v4485 = vld [vmem:[%s8 + $0x8] sm:$0xff]
    %v4486 = vld [vmem:[%s8 + $0x10] sm:$0xff]
    %v4487 = vld [vmem:[%s8 + $0x18] sm:$0xff]
    %v4488 = vld [vmem:[%s8 + $0x20] sm:$0xff]
    %v4489 = vld [vmem:[%s8 + $0x28] sm:$0xff]
    %v4490 = vld [vmem:[%s8 + $0x30] sm:$0xff]
    %v4491 = vld [vmem:[%s8 + $0x38] sm:$0xff]
    %v4492 = vld [vmem:[%s8 + $0x40] sm:$0xff]
    %v4493 = vld [vmem:[%s8 + $0x48] sm:$0xff]
    %v4494 = vld [vmem:[%s8 + $0x50] sm:$0xff]
    %v4495 = vld [vmem:[%s8 + $0x58] sm:$0xff]
    %v4496 = vld [vmem:[%s8 + $0x60] sm:$0xff]
    %v4497 = vld [vmem:[%s8 + $0x68] sm:$0xff]
    %v4498 = vld [vmem:[%s8 + $0x70] sm:$0xff]
    %v4499 = vld [vmem:[%s8 + $0x78] sm:$0xff]
    %v4500 = vld [vmem:[%s9] sm:$0x1]
    %v4502 = vlaneseq
    %v4503 = vshrl.u32 %v4502, 7
    %v4504 = vsub.s32 0, %v4503
    %v4505 = vrot.slane %v4500, %v4504
    %4507 = vmatprep.subr.mxu0 0.0
    %4508 = vmatpush1.msra.mxu0 %v4484
    %4509 = vmatprep.subr.mxu0 0.0
    %4510 = vmatpush1.msra.mxu0 %v4485
    %4511 = vmatprep.subr.mxu0 0.0
    %4512 = vmatpush1.msra.mxu0 %v4486
    %4513 = vmatprep.subr.mxu0 0.0
    %4514 = vmatpush1.msra.mxu0 %v4487
    %4515 = vmatprep.subr.mxu0 0.0
    %4516 = vmatpush1.msra.mxu0 %v4488
    %4517 = vmatprep.subr.mxu0 0.0
    %4518 = vmatpush1.msra.mxu0 %v4489
    %4519 = vmatprep.subr.mxu0 0.0
    %4520 = vmatpush1.msra.mxu0 %v4490
    %4521 = vmatprep.subr.mxu0 0.0
    %4522 = vmatpush1.msra.mxu0 %v4491
    %4523 = vmatprep.subr.mxu0 0.0
    %4524 = vmatpush1.msra.mxu0 %v4492
    %4525 = vmatprep.subr.mxu0 0.0
    %4526 = vmatpush1.msra.mxu0 %v4493
    %4527 = vmatprep.subr.mxu0 0.0
    %4528 = vmatpush1.msra.mxu0 %v4494
    %4529 = vmatprep.subr.mxu0 0.0
    %4530 = vmatpush1.msra.mxu0 %v4495
    %4531 = vmatprep.subr.mxu0 0.0
    %4532 = vmatpush1.msra.mxu0 %v4496
    %4533 = vmatprep.subr.mxu0 0.0
    %4534 = vmatpush1.msra.mxu0 %v4497
    %4535 = vmatprep.subr.mxu0 0.0
    %4536 = vmatpush1.msra.mxu0 %v4498
    %4537 = vmatprep.subr.mxu0 0.0
    %4538 = vmatpush1.msra.mxu0 %v4499
    %4539 = vmatprep.subr.mxu0 0.0
    %4540 = vmatpush1.msra.mxu0 0.0
    %4541 = vmatprep.subr.mxu0 0.0
    %4542 = vmatpush1.msra.mxu0 0.0
    %4543 = vmatprep.subr.mxu0 0.0
    %4544 = vmatpush1.msra.mxu0 0.0
    %4545 = vmatprep.subr.mxu0 0.0
    %4546 = vmatpush1.msra.mxu0 0.0
    %4547 = vmatprep.subr.mxu0 0.0
    %4548 = vmatpush1.msra.mxu0 0.0
    %4549 = vmatprep.subr.mxu0 0.0
    %4550 = vmatpush1.msra.mxu0 0.0
    %4551 = vmatprep.subr.mxu0 0.0
    %4552 = vmatpush1.msra.mxu0 0.0
    %4553 = vmatprep.subr.mxu0 0.0
    %4554 = vmatpush1.msra.mxu0 0.0
    %4555 = vmatprep.subr.mxu0 0.0
    %4556 = vmatpush1.msra.mxu0 0.0
    %4557 = vmatprep.subr.mxu0 0.0
    %4558 = vmatpush1.msra.mxu0 0.0
    %4559 = vmatprep.subr.mxu0 0.0
    %4560 = vmatpush1.msra.mxu0 0.0
    %4561 = vmatprep.subr.mxu0 0.0
    %4562 = vmatpush1.msra.mxu0 0.0
    %4563 = vmatprep.subr.mxu0 0.0
    %4564 = vmatpush1.msra.mxu0 0.0
    %4565 = vmatprep.subr.mxu0 0.0
    %4566 = vmatpush1.msra.mxu0 0.0
    %4567 = vmatprep.subr.mxu0 0.0
    %4568 = vmatpush1.msra.mxu0 0.0
    %4569 = vmatprep.subr.mxu0 0.0
    %4570 = vmatpush1.msra.mxu0 0.0
    %4571 = vmatprep.mubr.f32.mxu0 0.0
    %4572 = vmatmul.mubr.f32.gmra.mrb[0].mxu0 %v4483
    %v4573 = vpop.f32.mrb[0].mxu0
    %v4574 = vadd.f32 %v4505, %v4573
    %v4575 = vpop.f32.mrb[0].mxu0
    %4576 = vdwg.mxu0
    %v4577 = vxor.u32 %v4574, 2147483648
    %v4578 = vmul.f32 %v4577, 1.442695
    %v4579 = vpow.pop %v4578
    %v4580 = vadd.f32 %v4579, 1.0
    %v4581 = vrcp.pop %v4580
    %v4582 = vmul.f32 1.0, %v4581
    %v4583 = vmul.f32 %v4582, %v80
    %4584 = vst.msk [vmem:[#allocation8] sm:$0xff] %vm123, %v4583
    %v4586 = vrot.slane %v4278, 6
    %v4588 = vrot.slane %v4449, 6
    %v4591 = vrot.slane %v4447, 5
    %v4593 = vsel %vm127, %v4282, %v4586
    %v4594 = vsel %vm4472, %v4593, %v4588
    %v4595 = vsel %vm4474, %v4594, %v4591
    %4596 = vst [vmem:[#allocation9] sm:$0xf] %v4595
    // Predicated region
    $region54: #{tpu_custom_call.1} parent=1 // pred_check
      _
    $region55: #{tpu_custom_call.1} parent=1 // pred_check_branch
      %4598 = sbr.rel (0) target = $region57
    $region56: #{tpu_custom_call.1} parent=1 // pred_region
      %s4600 = ssub.s32 128, 128
      %4601 = vsyncadd [#allocation4], %s4600
      %s4603 = sshll.u32 [#allocation8], 4
      %s4604 = int_to_ptr.vmem [resolvable:$true] %s4603
      %4606 = dma.vmem_to_hbm [thread:$0]  %s4604, 128, %s10, [#allocation4]
    $region57: #{tpu_custom_call.1} parent=1 // pred_fallthru
      _
    // Predicated region
    $region58: #{tpu_custom_call.1} parent=1 // pred_check
      _
    $region59: #{tpu_custom_call.1} parent=1 // pred_check_branch
      %4608 = sbr.rel (0) target = $region61
    $region60: #{tpu_custom_call.1} parent=1 // pred_region
      %s4610 = ssub.s32 64, 64
      %4611 = vsyncadd [#allocation10], %s4610
      %s4613 = sshll.u32 [#allocation9], 4
      %s4614 = int_to_ptr.vmem [resolvable:$true] %s4613
      %4616 = dma.vmem_to_hbm [thread:$0]  %s4614, 64, %s11, [#allocation10]
    $region61: #{tpu_custom_call.1} parent=1 // pred_fallthru
      _
    // Predicated region
    $region62: #{tpu_custom_call.1} parent=1 // pred_check
      _
    $region63: #{tpu_custom_call.1} parent=1 // pred_check_branch
      %4618 = sbr.rel (0) target = $region65
    $region64: #{tpu_custom_call.1} parent=1 // pred_region
      %4619 = dma.done [#allocation4], 128
    $region65: #{tpu_custom_call.1} parent=1 // pred_fallthru
      _
    // Predicated region
    $region66: #{tpu_custom_call.1} parent=1 // pred_check
      _
    $region67: #{tpu_custom_call.1} parent=1 // pred_check_branch
      %4621 = sbr.rel (0) target = $region69
    $region68: #{tpu_custom_call.1} parent=1 // pred_region
      %4622 = dma.done [#allocation10], 64
    $region69: #{tpu_custom_call.1} parent=1 // pred_fallthru
      _
    %4623 = vsyncpa [#allocation3], 1
    %4624 = vsyncpa [#allocation6], 1
    %4625 = vsyncpa [#allocation4], 1
    %4626 = vsyncpa [#allocation10], 1

</llo_original>
